<compile_context>
chip_gen: v7x
topology: tpu7x:2x2x1
jax: 0.10.0
libtpu: 0.0.40
codegen_flags: <defaults>
</compile_context>

<pallas_src>
import math
from functools import partial

import jax
import jax.numpy as jnp
from jax.experimental import pallas as pl
from jax.experimental.pallas import tpu as pltpu


def _tpu_generation():
    """Best-effort TPU generation detection: 'v5e' | 'v6e' | 'v7x' | 'other'."""
    try:
        kind = jax.devices()[0].device_kind.lower()
    except Exception:
        return "other"
    if "v7" in kind:
        return "v7x"
    if "v6" in kind:
        return "v6e"
    if "v5" in kind and ("lite" in kind or "v5e" in kind):
        return "v5e"
    return "other"


def kpconv_kernel(kp_ref, w_ref, xyz_ref, feat_ref, out_ref, a_ref, *,
                  kp_extent, K, P, M, din_p, compute_dtype):
    """One grid step = (one batch element, one Np tile).

    kp_ref   : SMEM (K*P,)            kernel point coordinates (flat, f32)
    w_ref    : VMEM (Dout, K*Din_p)   fused weight matrix (matmul dtype)
    xyz_ref  : VMEM (P, M, Tn)        relative neighbor coordinates, channel-first, f32
    feat_ref : VMEM (M, Din_p, Tn)    neighbor features, points in lanes (compute dtype)
    out_ref  : VMEM (Dout, Tn)        f32 output tile
    a_ref    : VMEM (K*Din_p, Tn)     scratch accumulator feeding the single MXU matmul
    """
    inv_ext = 1.0 / kp_extent

    for k in range(K):                                    # K is small (e.g. 15); unrolled
        # Squared distance to kernel point k: re-reads xyz_ref per k (VMEM loads have
        # slack; no long-lived hoisted planes -> bounded vreg pressure, no spills).
        d2 = None
        for c in range(P):
            d = xyz_ref[c] - kp_ref[P * k + c]            # scalar splat from SMEM
            d2 = d * d if d2 is None else d2 + d * d
        influ = jnp.maximum(1.0 - jnp.sqrt(d2) * inv_ext, 0.0)   # (M, Tn) f32
        influ = influ.astype(compute_dtype)               # bf16 VPU path on v6e/v7x

        # Neighbor aggregation as an explicit running sum over m: only one (Din_p, Tn)
        # accumulator is live; the (M, Din_p, Tn) product is never materialized.
        acc = influ[0:1, :] * feat_ref[0]
        for m in range(1, M):
            acc = acc + influ[m:m + 1, :] * feat_ref[m]

        # Per-k column written straight to the VMEM scratch (no concatenate).
        a_ref[pl.ds(k * din_p, din_p), :] = acc.astype(a_ref.dtype)

    # One MXU matmul with contraction depth K*Din_p; f32 accumulation.
    out_ref[...] = jnp.dot(w_ref[...], a_ref[...],
                           preferred_element_type=jnp.float32).astype(out_ref.dtype)


def _tile_footprint_bytes(t, M, Din_p, Dout, K, P, feat_bytes, a_bytes, w_bytes):
    per_point = (2 * M * Din_p * feat_bytes      # double-buffered feature tile
                 + 2 * P * M * 4                 # double-buffered xyz tile (f32)
                 + 2 * Dout * 4                  # double-buffered output tile (f32)
                 + K * Din_p * a_bytes           # A scratch accumulator
                 + (Din_p + 2 * M) * 4)          # live acc / influ / dist temporaries
    fixed = 2 * Dout * K * Din_p * w_bytes       # resident (double-buffered) weights
    return fixed + per_point * t


def _choose_tile_np(Np, B, M, Din_p, Dout, K, P, feat_bytes, a_bytes, w_bytes,
                    budget_bytes, min_grid_points):
    """Largest Np tile whose working set fits the budget while keeping at least
    `min_grid_points` grid steps (TensorCore occupancy on multi-TC chips)."""
    viable = [t for t in (2048, 1024, 512, 256, 128)
              if t <= Np and Np % t == 0
              and _tile_footprint_bytes(t, M, Din_p, Dout, K, P,
                                        feat_bytes, a_bytes, w_bytes) <= budget_bytes]
    if not viable:
        return 128 if Np % 128 == 0 else Np
    for t in viable:                              # biggest tile that keeps cores busy
        if B * (Np // t) >= min_grid_points:
            return t
    return viable[-1]                             # occupancy unattainable; take smallest


_GEN_CONFIG = {
    #         (tile budget,          vmem_limit cap,      min grid points)
    "v5e":   (80 * 1024 * 1024, 100 * 1024 * 1024, 2),   # 128 MiB VMEM, slow HBM
    "v6e":   (80 * 1024 * 1024, 100 * 1024 * 1024, 2),   # 128 MiB VMEM
    "v7x":   (36 * 1024 * 1024,  44 * 1024 * 1024, 4),   # 64 MiB VMEM, 2 TCs/chip
    "other": (20 * 1024 * 1024,  48 * 1024 * 1024, 2),
}


def kpconv_pallas(kernel_points, weights, grouped_features, grouped_xyz, kp_extent,
                  tile_np=None, compute_dtype=None, matmul_dtype=None):
    """grouped_features: (B, D_in, Np, M), grouped_xyz: (B, p_dim, Np, M)
    returns (B, D_out, Np) float32, matching the PyTorch module."""
    B, Din, Np, M = grouped_features.shape
    K, _, Dout = weights.shape
    P = grouped_xyz.shape[1]
    assert kernel_points.shape == (K, P)

    gen = _tpu_generation()
    if compute_dtype is None:      # bf16 on the dominant VPU loop only where supported
        compute_dtype = jnp.bfloat16 if gen in ("v6e", "v7x") else jnp.float32
    if matmul_dtype is None:       # bf16 MXU operands on every recent generation
        matmul_dtype = jnp.bfloat16 if gen in ("v5e", "v6e", "v7x") else jnp.float32
    budget_bytes, vmem_cap, min_grid = _GEN_CONFIG.get(gen, _GEN_CONFIG["other"])

    # Pad the feature-channel axis to a sublane multiple so all slabs are aligned.
    Din_p = ((Din + 7) // 8) * 8

    # Layout plumbing (done once in HBM by XLA):
    #   xyz  (B, P, Np, M)   -> (B, P, M, Np)
    #   feat (B, Din, Np, M) -> (B, M, Din, Np)   points into lanes, neighbors leading
    # The output needs NO transpose (kernel writes (B, Dout, Np) directly).
    # TODO(synk): emit grouped tensors in (B, M, Din, Np) layout upstream (or gather
    # per-m rows with manual strided DMAs from pl.ANY) to delete this HBM round-trip
    # of the feature tensor entirely.
    xyz_t = jnp.transpose(grouped_xyz, (0, 1, 3, 2)).astype(jnp.float32)
    feat_t = jnp.transpose(grouped_features, (0, 3, 1, 2))
    if Din_p != Din:
        feat_t = jnp.pad(feat_t, ((0, 0), (0, 0), (0, Din_p - Din), (0, 0)))
        w_pad = jnp.pad(weights, ((0, 0), (0, Din_p - Din), (0, 0)))
    else:
        w_pad = weights
    feat_t = feat_t.astype(compute_dtype)       # halves HBM DMA + VMEM when bf16

    # Fused weight matrix: w2d[f, k*Din_p + d] = W[k, d, f]
    w2d = jnp.transpose(w_pad, (2, 0, 1)).reshape(Dout, K * Din_p).astype(matmul_dtype)
    kp_flat = kernel_points.reshape(K * P).astype(jnp.float32)

    feat_bytes = jnp.dtype(compute_dtype).itemsize
    mm_bytes = jnp.dtype(matmul_dtype).itemsize
    if tile_np is None:
        tile_np = _choose_tile_np(Np, B, M, Din_p, Dout, K, P,
                                  feat_bytes, mm_bytes, mm_bytes,
                                  budget_bytes, min_grid)
    if Np % tile_np != 0:
        raise ValueError(f"Np={Np} must be divisible by tile_np={tile_np}")
    if tile_np != Np and tile_np % 128 != 0:
        raise ValueError(f"tile_np={tile_np} must be a multiple of 128 (or equal Np)")

    footprint = _tile_footprint_bytes(tile_np, M, Din_p, Dout, K, P,
                                      feat_bytes, mm_bytes, mm_bytes)
    vmem_limit = int(min(vmem_cap, max(footprint + 16 * 1024 * 1024, 32 * 1024 * 1024)))

    grid = (B, Np // tile_np)
    kdin = K * Din_p

    # Advisory cost model for XLA's scheduler around the custom call.
    flops = B * Np * (K * M * (3 * P + 4) + 2 * K * M * Din_p + 2 * kdin * Dout)
    transcendentals = B * Np * K * M            # one sqrt per (kernel point, neighbor, point)
    bytes_accessed = (feat_t.size * feat_bytes + xyz_t.size * 4
                      + w2d.size * mm_bytes + B * Dout * Np * 4)

    out = pl.pallas_call(
        partial(kpconv_kernel, kp_extent=float(kp_extent), K=K, P=P, M=M,
                din_p=Din_p, compute_dtype=compute_dtype),
        out_shape=jax.ShapeDtypeStruct((B, Dout, Np), jnp.float32),
        grid=grid,
        in_specs=[
            # Kernel points: small constant table in scalar memory (free splats per k).
            pl.BlockSpec(memory_space=pltpu.MemorySpace.SMEM),
            # Fused weights: resident in VMEM, fetched once (constant index map).
            pl.BlockSpec((Dout, kdin), lambda b, p: (0, 0)),
            pl.BlockSpec((pl.Squeezed(), P, M, tile_np), lambda b, p: (b, 0, 0, p)),
            pl.BlockSpec((pl.Squeezed(), M, Din_p, tile_np), lambda b, p: (b, 0, 0, p)),
        ],
        out_specs=pl.BlockSpec((pl.Squeezed(), Dout, tile_np), lambda b, p: (b, 0, p)),
        scratch_shapes=[pltpu.VMEM((kdin, tile_np), matmul_dtype)],
        compiler_params=pltpu.CompilerParams(
            dimension_semantics=("parallel", "parallel"),
            vmem_limit_bytes=vmem_limit,
        ),
        cost_estimate=pl.CostEstimate(flops=int(flops),
                                      transcendentals=int(transcendentals),
                                      bytes_accessed=int(bytes_accessed)),
    )(kp_flat, w2d, xyz_t, feat_t)

    return out                                             # (B, Dout, Np)


def kpconv_ref(kernel_points, weights, grouped_features, grouped_xyz, kp_extent):
    """Pure-JAX transcription of the PyTorch forward (for verification)."""
    gx = jnp.transpose(grouped_xyz, (0, 2, 3, 1))[None]    # (1, B, Np, M, P)
    kp = kernel_points[:, None, None, None, :]             # (K, 1, 1, 1, P)
    dists = jnp.sqrt(jnp.sum((kp - gx) ** 2, axis=-1))     # (K, B, Np, M)
    w = jnp.clip(1.0 - dists / kp_extent, 0.0, None)
    return jnp.einsum('kbnm,bdnm,kdf->bfn', w, grouped_features, weights)


def init_kernel_points(key, K, p_dim, radius):
    # TODO(synk): original load_kernels runs a repulsion/dispersion optimization;
    # here we use deterministic random points inside the sphere (first point at center).
    kdir, krad = jax.random.split(key)
    pts = jax.random.normal(kdir, (K, p_dim), dtype=jnp.float32)
    pts = pts / (jnp.linalg.norm(pts, axis=1, keepdims=True) + 1e-6)
    r = jax.random.uniform(krad, (K, 1), dtype=jnp.float32) ** (1.0 / p_dim)
    pts = pts * r * radius
    pts = pts.at[0].set(0.0)  # fixed_kernel_points='center'
    return pts


def init_weights(key, K, in_channels, out_channels):
    # kaiming_uniform_(a=sqrt(5)) on shape (K, Cin, Cout):
    # fan_in = Cin * Cout, bound = 1/sqrt(fan_in)
    fan_in = in_channels * out_channels
    bound = 1.0 / math.sqrt(fan_in)
    return jax.random.uniform(key, (K, in_channels, out_channels),
                              minval=-bound, maxval=bound, dtype=jnp.float32)


if __name__ == "__main__":
    key = jax.random.PRNGKey(0)
    B, Din, Dout = 2, 4, 8
    Np, M = 256, 8           # points, neighbors (Np tiled in lane-dense chunks)
    K, p_dim = 15, 3         # kernel points, spatial dim
    radius, KP_extent = 1.0, 0.6

    k1, k2, k3, k4 = jax.random.split(key, 4)
    kernel_points = init_kernel_points(k1, K, p_dim, radius)            # (K, 3)
    weights = init_weights(k2, K, Din, Dout)                            # (K, Din, Dout)
    grouped_features = jax.random.normal(k3, (B, Din, Np, M), dtype=jnp.float32)
    grouped_xyz = jax.random.uniform(k4, (B, 3, Np, M),
                                     minval=-radius, maxval=radius, dtype=jnp.float32)

    gen = _tpu_generation()
    compute_dtype = jnp.bfloat16 if gen in ("v6e", "v7x") else jnp.float32
    matmul_dtype = jnp.bfloat16 if gen in ("v5e", "v6e", "v7x") else jnp.float32

    out = kpconv_pallas(kernel_points, weights, grouped_features, grouped_xyz,
                        KP_extent, compute_dtype=compute_dtype, matmul_dtype=matmul_dtype)
    out = jax.block_until_ready(out)

    ref = kpconv_ref(kernel_points, weights, grouped_features, grouped_xyz, KP_extent)
    assert out.shape == (B, Dout, Np), out.shape

    use_bf16 = (jnp.dtype(compute_dtype) == jnp.dtype(jnp.bfloat16) or
                jnp.dtype(matmul_dtype) == jnp.dtype(jnp.bfloat16))
    if use_bf16:
        max_err = float(jnp.max(jnp.abs(out.astype(jnp.float32) - ref)))
        scale = float(jnp.max(jnp.abs(ref))) + 1e-6
        assert max_err <= 5e-2 * scale, ("bf16 mismatch vs reference", max_err, scale)
    else:
        assert jnp.allclose(out, ref, rtol=1e-4, atol=1e-4), "mismatch vs reference"

    print("KERNEL_OK")
</pallas_src>

<mosaic_0001>
module attributes {stable_mosaic.version = 11 : i64} {
  func.func @kpconv_kernel(%arg0: i32, %arg1: i32, %arg2: memref<45xf32, #tpu.memory_space<smem>>, %arg3: memref<8x120xf32, #tpu.memory_space<vmem>>, %arg4: memref<1x3x8x256xf32, #tpu.memory_space<vmem>>, %arg5: memref<1x8x8x256xf32, #tpu.memory_space<vmem>>, %arg6: memref<1x8x256xf32, #tpu.memory_space<vmem>>, %arg7: memref<120x256xf32, #tpu.memory_space<vmem>>) attributes {dimension_semantics = [#tpu.dimension_semantics<parallel>, #tpu.dimension_semantics<parallel>], iteration_bounds = array<i64: 2, 1>, scalar_prefetch = 0 : i64, scratch_operands = 1 : i64, tpu.core_type = #tpu.core_type<tc>, window_params = [{transform_indices = @transform_0, window_bounds = array<i64: 45>}, {pipeline_mode = #tpu.pipeline_mode<synchronous>, transform_indices = @transform_1, window_bounds = array<i64: 8, 120>}, {transform_indices = @transform_2, window_bounds = array<i64: 1, 3, 8, 256>}, {transform_indices = @transform_3, window_bounds = array<i64: 1, 8, 8, 256>}, {transform_indices = @transform_4, window_bounds = array<i64: 1, 8, 256>}]} {
    %c0 = arith.constant 0 : index
    %c0_0 = arith.constant 0 : index
    %c0_1 = arith.constant 0 : index
    %c0_2 = arith.constant 0 : index
    %0 = vector.load %arg4[%c0, %c0_0, %c0_1, %c0_2] : memref<1x3x8x256xf32, #tpu.memory_space<vmem>>, vector<1x1x8x256xf32>
    %1 = vector.shape_cast %0 : vector<1x1x8x256xf32> to vector<8x256xf32>
    %c0_3 = arith.constant 0 : index
    %2 = memref.load %arg2[%c0_3] : memref<45xf32, #tpu.memory_space<smem>>
    %3 = vector.broadcast %2 : f32 to vector<8x256xf32>
    %4 = arith.subf %1, %3 : vector<8x256xf32>
    %5 = arith.mulf %4, %4 : vector<8x256xf32>
    %c0_4 = arith.constant 0 : index
    %c1 = arith.constant 1 : index
    %c0_5 = arith.constant 0 : index
    %c0_6 = arith.constant 0 : index
    %6 = vector.load %arg4[%c0_4, %c1, %c0_5, %c0_6] : memref<1x3x8x256xf32, #tpu.memory_space<vmem>>, vector<1x1x8x256xf32>
    %7 = vector.shape_cast %6 : vector<1x1x8x256xf32> to vector<8x256xf32>
    %c1_7 = arith.constant 1 : index
    %8 = memref.load %arg2[%c1_7] : memref<45xf32, #tpu.memory_space<smem>>
    %9 = vector.broadcast %8 : f32 to vector<8x256xf32>
    %10 = arith.subf %7, %9 : vector<8x256xf32>
    %11 = arith.mulf %10, %10 : vector<8x256xf32>
    %12 = arith.addf %5, %11 : vector<8x256xf32>
    %c0_8 = arith.constant 0 : index
    %c2 = arith.constant 2 : index
    %c0_9 = arith.constant 0 : index
    %c0_10 = arith.constant 0 : index
    %13 = vector.load %arg4[%c0_8, %c2, %c0_9, %c0_10] : memref<1x3x8x256xf32, #tpu.memory_space<vmem>>, vector<1x1x8x256xf32>
    %14 = vector.shape_cast %13 : vector<1x1x8x256xf32> to vector<8x256xf32>
    %c2_11 = arith.constant 2 : index
    %15 = memref.load %arg2[%c2_11] : memref<45xf32, #tpu.memory_space<smem>>
    %16 = vector.broadcast %15 : f32 to vector<8x256xf32>
    %17 = arith.subf %14, %16 : vector<8x256xf32>
    %18 = arith.mulf %17, %17 : vector<8x256xf32>
    %19 = arith.addf %12, %18 : vector<8x256xf32>
    %20 = math.sqrt %19 : vector<8x256xf32>
    %cst = arith.constant 1.66666663 : f32
    %21 = vector.broadcast %cst : f32 to vector<8x256xf32>
    %22 = arith.mulf %20, %21 : vector<8x256xf32>
    %cst_12 = arith.constant 1.000000e+00 : f32
    %23 = vector.broadcast %cst_12 : f32 to vector<8x256xf32>
    %24 = arith.subf %23, %22 : vector<8x256xf32>
    %cst_13 = arith.constant 0.000000e+00 : f32
    %25 = vector.broadcast %cst_13 : f32 to vector<8x256xf32>
    %26 = arith.maximumf %24, %25 : vector<8x256xf32>
    %27 = vector.extract_strided_slice %26 {offsets = [0, 0], sizes = [1, 256], strides = [1, 1]} : vector<8x256xf32> to vector<1x256xf32>
    %c0_14 = arith.constant 0 : index
    %c0_15 = arith.constant 0 : index
    %c0_16 = arith.constant 0 : index
    %c0_17 = arith.constant 0 : index
    %28 = vector.load %arg5[%c0_14, %c0_15, %c0_16, %c0_17] : memref<1x8x8x256xf32, #tpu.memory_space<vmem>>, vector<1x1x8x256xf32>
    %29 = vector.shape_cast %28 : vector<1x1x8x256xf32> to vector<8x256xf32>
    %30 = vector.broadcast %27 : vector<1x256xf32> to vector<8x256xf32>
    %31 = arith.mulf %30, %29 : vector<8x256xf32>
    %32 = vector.extract_strided_slice %26 {offsets = [1, 0], sizes = [1, 256], strides = [1, 1]} : vector<8x256xf32> to vector<1x256xf32>
    %c0_18 = arith.constant 0 : index
    %c1_19 = arith.constant 1 : index
    %c0_20 = arith.constant 0 : index
    %c0_21 = arith.constant 0 : index
    %33 = vector.load %arg5[%c0_18, %c1_19, %c0_20, %c0_21] : memref<1x8x8x256xf32, #tpu.memory_space<vmem>>, vector<1x1x8x256xf32>
    %34 = vector.shape_cast %33 : vector<1x1x8x256xf32> to vector<8x256xf32>
    %35 = vector.broadcast %32 : vector<1x256xf32> to vector<8x256xf32>
    %36 = arith.mulf %35, %34 : vector<8x256xf32>
    %37 = arith.addf %31, %36 : vector<8x256xf32>
    %38 = vector.extract_strided_slice %26 {offsets = [2, 0], sizes = [1, 256], strides = [1, 1]} : vector<8x256xf32> to vector<1x256xf32>
    %c0_22 = arith.constant 0 : index
    %c2_23 = arith.constant 2 : index
    %c0_24 = arith.constant 0 : index
    %c0_25 = arith.constant 0 : index
    %39 = vector.load %arg5[%c0_22, %c2_23, %c0_24, %c0_25] : memref<1x8x8x256xf32, #tpu.memory_space<vmem>>, vector<1x1x8x256xf32>
    %40 = vector.shape_cast %39 : vector<1x1x8x256xf32> to vector<8x256xf32>
    %41 = vector.broadcast %38 : vector<1x256xf32> to vector<8x256xf32>
    %42 = arith.mulf %41, %40 : vector<8x256xf32>
    %43 = arith.addf %37, %42 : vector<8x256xf32>
    %44 = vector.extract_strided_slice %26 {offsets = [3, 0], sizes = [1, 256], strides = [1, 1]} : vector<8x256xf32> to vector<1x256xf32>
    %c0_26 = arith.constant 0 : index
    %c3 = arith.constant 3 : index
    %c0_27 = arith.constant 0 : index
    %c0_28 = arith.constant 0 : index
    %45 = vector.load %arg5[%c0_26, %c3, %c0_27, %c0_28] : memref<1x8x8x256xf32, #tpu.memory_space<vmem>>, vector<1x1x8x256xf32>
    %46 = vector.shape_cast %45 : vector<1x1x8x256xf32> to vector<8x256xf32>
    %47 = vector.broadcast %44 : vector<1x256xf32> to vector<8x256xf32>
    %48 = arith.mulf %47, %46 : vector<8x256xf32>
    %49 = arith.addf %43, %48 : vector<8x256xf32>
    %50 = vector.extract_strided_slice %26 {offsets = [4, 0], sizes = [1, 256], strides = [1, 1]} : vector<8x256xf32> to vector<1x256xf32>
    %c0_29 = arith.constant 0 : index
    %c4 = arith.constant 4 : index
    %c0_30 = arith.constant 0 : index
    %c0_31 = arith.constant 0 : index
    %51 = vector.load %arg5[%c0_29, %c4, %c0_30, %c0_31] : memref<1x8x8x256xf32, #tpu.memory_space<vmem>>, vector<1x1x8x256xf32>
    %52 = vector.shape_cast %51 : vector<1x1x8x256xf32> to vector<8x256xf32>
    %53 = vector.broadcast %50 : vector<1x256xf32> to vector<8x256xf32>
    %54 = arith.mulf %53, %52 : vector<8x256xf32>
    %55 = arith.addf %49, %54 : vector<8x256xf32>
    %56 = vector.extract_strided_slice %26 {offsets = [5, 0], sizes = [1, 256], strides = [1, 1]} : vector<8x256xf32> to vector<1x256xf32>
    %c0_32 = arith.constant 0 : index
    %c5 = arith.constant 5 : index
    %c0_33 = arith.constant 0 : index
    %c0_34 = arith.constant 0 : index
    %57 = vector.load %arg5[%c0_32, %c5, %c0_33, %c0_34] : memref<1x8x8x256xf32, #tpu.memory_space<vmem>>, vector<1x1x8x256xf32>
    %58 = vector.shape_cast %57 : vector<1x1x8x256xf32> to vector<8x256xf32>
    %59 = vector.broadcast %56 : vector<1x256xf32> to vector<8x256xf32>
    %60 = arith.mulf %59, %58 : vector<8x256xf32>
    %61 = arith.addf %55, %60 : vector<8x256xf32>
    %62 = vector.extract_strided_slice %26 {offsets = [6, 0], sizes = [1, 256], strides = [1, 1]} : vector<8x256xf32> to vector<1x256xf32>
    %c0_35 = arith.constant 0 : index
    %c6 = arith.constant 6 : index
    %c0_36 = arith.constant 0 : index
    %c0_37 = arith.constant 0 : index
    %63 = vector.load %arg5[%c0_35, %c6, %c0_36, %c0_37] : memref<1x8x8x256xf32, #tpu.memory_space<vmem>>, vector<1x1x8x256xf32>
    %64 = vector.shape_cast %63 : vector<1x1x8x256xf32> to vector<8x256xf32>
    %65 = vector.broadcast %62 : vector<1x256xf32> to vector<8x256xf32>
    %66 = arith.mulf %65, %64 : vector<8x256xf32>
    %67 = arith.addf %61, %66 : vector<8x256xf32>
    %68 = vector.extract_strided_slice %26 {offsets = [7, 0], sizes = [1, 256], strides = [1, 1]} : vector<8x256xf32> to vector<1x256xf32>
    %c0_38 = arith.constant 0 : index
    %c7 = arith.constant 7 : index
    %c0_39 = arith.constant 0 : index
    %c0_40 = arith.constant 0 : index
    %69 = vector.load %arg5[%c0_38, %c7, %c0_39, %c0_40] : memref<1x8x8x256xf32, #tpu.memory_space<vmem>>, vector<1x1x8x256xf32>
    %70 = vector.shape_cast %69 : vector<1x1x8x256xf32> to vector<8x256xf32>
    %71 = vector.broadcast %68 : vector<1x256xf32> to vector<8x256xf32>
    %72 = arith.mulf %71, %70 : vector<8x256xf32>
    %73 = arith.addf %67, %72 : vector<8x256xf32>
    %c0_41 = arith.constant 0 : index
    %c0_42 = arith.constant 0 : index
    %74 = vector.load %arg7[%c0_41, %c0_42] : memref<120x256xf32, #tpu.memory_space<vmem>>, vector<8x256xf32>
    tpu.vector_store %arg7[%c0_41, %c0_42], %73 {strides = array<i32>} : memref<120x256xf32, #tpu.memory_space<vmem>>, vector<8x256xf32>,
    %c0_43 = arith.constant 0 : index
    %c0_44 = arith.constant 0 : index
    %c0_45 = arith.constant 0 : index
    %c0_46 = arith.constant 0 : index
    %75 = vector.load %arg4[%c0_43, %c0_44, %c0_45, %c0_46] : memref<1x3x8x256xf32, #tpu.memory_space<vmem>>, vector<1x1x8x256xf32>
    %76 = vector.shape_cast %75 : vector<1x1x8x256xf32> to vector<8x256xf32>
    %c3_47 = arith.constant 3 : index
    %77 = memref.load %arg2[%c3_47] : memref<45xf32, #tpu.memory_space<smem>>
    %78 = vector.broadcast %77 : f32 to vector<8x256xf32>
    %79 = arith.subf %76, %78 : vector<8x256xf32>
    %80 = arith.mulf %79, %79 : vector<8x256xf32>
    %c0_48 = arith.constant 0 : index
    %c1_49 = arith.constant 1 : index
    %c0_50 = arith.constant 0 : index
    %c0_51 = arith.constant 0 : index
    %81 = vector.load %arg4[%c0_48, %c1_49, %c0_50, %c0_51] : memref<1x3x8x256xf32, #tpu.memory_space<vmem>>, vector<1x1x8x256xf32>
    %82 = vector.shape_cast %81 : vector<1x1x8x256xf32> to vector<8x256xf32>
    %c4_52 = arith.constant 4 : index
    %83 = memref.load %arg2[%c4_52] : memref<45xf32, #tpu.memory_space<smem>>
    %84 = vector.broadcast %83 : f32 to vector<8x256xf32>
    %85 = arith.subf %82, %84 : vector<8x256xf32>
    %86 = arith.mulf %85, %85 : vector<8x256xf32>
    %87 = arith.addf %80, %86 : vector<8x256xf32>
    %c0_53 = arith.constant 0 : index
    %c2_54 = arith.constant 2 : index
    %c0_55 = arith.constant 0 : index
    %c0_56 = arith.constant 0 : index
    %88 = vector.load %arg4[%c0_53, %c2_54, %c0_55, %c0_56] : memref<1x3x8x256xf32, #tpu.memory_space<vmem>>, vector<1x1x8x256xf32>
    %89 = vector.shape_cast %88 : vector<1x1x8x256xf32> to vector<8x256xf32>
    %c5_57 = arith.constant 5 : index
    %90 = memref.load %arg2[%c5_57] : memref<45xf32, #tpu.memory_space<smem>>
    %91 = vector.broadcast %90 : f32 to vector<8x256xf32>
    %92 = arith.subf %89, %91 : vector<8x256xf32>
    %93 = arith.mulf %92, %92 : vector<8x256xf32>
    %94 = arith.addf %87, %93 : vector<8x256xf32>
    %95 = math.sqrt %94 : vector<8x256xf32>
    %cst_58 = arith.constant 1.66666663 : f32
    %96 = vector.broadcast %cst_58 : f32 to vector<8x256xf32>
    %97 = arith.mulf %95, %96 : vector<8x256xf32>
    %cst_59 = arith.constant 1.000000e+00 : f32
    %98 = vector.broadcast %cst_59 : f32 to vector<8x256xf32>
    %99 = arith.subf %98, %97 : vector<8x256xf32>
    %cst_60 = arith.constant 0.000000e+00 : f32
    %100 = vector.broadcast %cst_60 : f32 to vector<8x256xf32>
    %101 = arith.maximumf %99, %100 : vector<8x256xf32>
    %102 = vector.extract_strided_slice %101 {offsets = [0, 0], sizes = [1, 256], strides = [1, 1]} : vector<8x256xf32> to vector<1x256xf32>
    %c0_61 = arith.constant 0 : index
    %c0_62 = arith.constant 0 : index
    %c0_63 = arith.constant 0 : index
    %c0_64 = arith.constant 0 : index
    %103 = vector.load %arg5[%c0_61, %c0_62, %c0_63, %c0_64] : memref<1x8x8x256xf32, #tpu.memory_space<vmem>>, vector<1x1x8x256xf32>
    %104 = vector.shape_cast %103 : vector<1x1x8x256xf32> to vector<8x256xf32>
    %105 = vector.broadcast %102 : vector<1x256xf32> to vector<8x256xf32>
    %106 = arith.mulf %105, %104 : vector<8x256xf32>
    %107 = vector.extract_strided_slice %101 {offsets = [1, 0], sizes = [1, 256], strides = [1, 1]} : vector<8x256xf32> to vector<1x256xf32>
    %c0_65 = arith.constant 0 : index
    %c1_66 = arith.constant 1 : index
    %c0_67 = arith.constant 0 : index
    %c0_68 = arith.constant 0 : index
    %108 = vector.load %arg5[%c0_65, %c1_66, %c0_67, %c0_68] : memref<1x8x8x256xf32, #tpu.memory_space<vmem>>, vector<1x1x8x256xf32>
    %109 = vector.shape_cast %108 : vector<1x1x8x256xf32> to vector<8x256xf32>
    %110 = vector.broadcast %107 : vector<1x256xf32> to vector<8x256xf32>
    %111 = arith.mulf %110, %109 : vector<8x256xf32>
    %112 = arith.addf %106, %111 : vector<8x256xf32>
    %113 = vector.extract_strided_slice %101 {offsets = [2, 0], sizes = [1, 256], strides = [1, 1]} : vector<8x256xf32> to vector<1x256xf32>
    %c0_69 = arith.constant 0 : index
    %c2_70 = arith.constant 2 : index
    %c0_71 = arith.constant 0 : index
    %c0_72 = arith.constant 0 : index
    %114 = vector.load %arg5[%c0_69, %c2_70, %c0_71, %c0_72] : memref<1x8x8x256xf32, #tpu.memory_space<vmem>>, vector<1x1x8x256xf32>
    %115 = vector.shape_cast %114 : vector<1x1x8x256xf32> to vector<8x256xf32>
    %116 = vector.broadcast %113 : vector<1x256xf32> to vector<8x256xf32>
    %117 = arith.mulf %116, %115 : vector<8x256xf32>
    %118 = arith.addf %112, %117 : vector<8x256xf32>
    %119 = vector.extract_strided_slice %101 {offsets = [3, 0], sizes = [1, 256], strides = [1, 1]} : vector<8x256xf32> to vector<1x256xf32>
    %c0_73 = arith.constant 0 : index
    %c3_74 = arith.constant 3 : index
    %c0_75 = arith.constant 0 : index
    %c0_76 = arith.constant 0 : index
    %120 = vector.load %arg5[%c0_73, %c3_74, %c0_75, %c0_76] : memref<1x8x8x256xf32, #tpu.memory_space<vmem>>, vector<1x1x8x256xf32>
    %121 = vector.shape_cast %120 : vector<1x1x8x256xf32> to vector<8x256xf32>
    %122 = vector.broadcast %119 : vector<1x256xf32> to vector<8x256xf32>
    %123 = arith.mulf %122, %121 : vector<8x256xf32>
    %124 = arith.addf %118, %123 : vector<8x256xf32>
    %125 = vector.extract_strided_slice %101 {offsets = [4, 0], sizes = [1, 256], strides = [1, 1]} : vector<8x256xf32> to vector<1x256xf32>
    %c0_77 = arith.constant 0 : index
    %c4_78 = arith.constant 4 : index
    %c0_79 = arith.constant 0 : index
    %c0_80 = arith.constant 0 : index
    %126 = vector.load %arg5[%c0_77, %c4_78, %c0_79, %c0_80] : memref<1x8x8x256xf32, #tpu.memory_space<vmem>>, vector<1x1x8x256xf32>
    %127 = vector.shape_cast %126 : vector<1x1x8x256xf32> to vector<8x256xf32>
    %128 = vector.broadcast %125 : vector<1x256xf32> to vector<8x256xf32>
    %129 = arith.mulf %128, %127 : vector<8x256xf32>
    %130 = arith.addf %124, %129 : vector<8x256xf32>
    %131 = vector.extract_strided_slice %101 {offsets = [5, 0], sizes = [1, 256], strides = [1, 1]} : vector<8x256xf32> to vector<1x256xf32>
    %c0_81 = arith.constant 0 : index
    %c5_82 = arith.constant 5 : index
    %c0_83 = arith.constant 0 : index
    %c0_84 = arith.constant 0 : index
    %132 = vector.load %arg5[%c0_81, %c5_82, %c0_83, %c0_84] : memref<1x8x8x256xf32, #tpu.memory_space<vmem>>, vector<1x1x8x256xf32>
    %133 = vector.shape_cast %132 : vector<1x1x8x256xf32> to vector<8x256xf32>
    %134 = vector.broadcast %131 : vector<1x256xf32> to vector<8x256xf32>
    %135 = arith.mulf %134, %133 : vector<8x256xf32>
    %136 = arith.addf %130, %135 : vector<8x256xf32>
    %137 = vector.extract_strided_slice %101 {offsets = [6, 0], sizes = [1, 256], strides = [1, 1]} : vector<8x256xf32> to vector<1x256xf32>
    %c0_85 = arith.constant 0 : index
    %c6_86 = arith.constant 6 : index
    %c0_87 = arith.constant 0 : index
    %c0_88 = arith.constant 0 : index
    %138 = vector.load %arg5[%c0_85, %c6_86, %c0_87, %c0_88] : memref<1x8x8x256xf32, #tpu.memory_space<vmem>>, vector<1x1x8x256xf32>
    %139 = vector.shape_cast %138 : vector<1x1x8x256xf32> to vector<8x256xf32>
    %140 = vector.broadcast %137 : vector<1x256xf32> to vector<8x256xf32>
    %141 = arith.mulf %140, %139 : vector<8x256xf32>
    %142 = arith.addf %136, %141 : vector<8x256xf32>
    %143 = vector.extract_strided_slice %101 {offsets = [7, 0], sizes = [1, 256], strides = [1, 1]} : vector<8x256xf32> to vector<1x256xf32>
    %c0_89 = arith.constant 0 : index
    %c7_90 = arith.constant 7 : index
    %c0_91 = arith.constant 0 : index
    %c0_92 = arith.constant 0 : index
    %144 = vector.load %arg5[%c0_89, %c7_90, %c0_91, %c0_92] : memref<1x8x8x256xf32, #tpu.memory_space<vmem>>, vector<1x1x8x256xf32>
    %145 = vector.shape_cast %144 : vector<1x1x8x256xf32> to vector<8x256xf32>
    %146 = vector.broadcast %143 : vector<1x256xf32> to vector<8x256xf32>
    %147 = arith.mulf %146, %145 : vector<8x256xf32>
    %148 = arith.addf %142, %147 : vector<8x256xf32>
    %c8 = arith.constant 8 : index
    %c0_93 = arith.constant 0 : index
    %149 = vector.load %arg7[%c8, %c0_93] : memref<120x256xf32, #tpu.memory_space<vmem>>, vector<8x256xf32>
    tpu.vector_store %arg7[%c8, %c0_93], %148 {strides = array<i32>} : memref<120x256xf32, #tpu.memory_space<vmem>>, vector<8x256xf32>,
    %c0_94 = arith.constant 0 : index
    %c0_95 = arith.constant 0 : index
    %c0_96 = arith.constant 0 : index
    %c0_97 = arith.constant 0 : index
    %150 = vector.load %arg4[%c0_94, %c0_95, %c0_96, %c0_97] : memref<1x3x8x256xf32, #tpu.memory_space<vmem>>, vector<1x1x8x256xf32>
    %151 = vector.shape_cast %150 : vector<1x1x8x256xf32> to vector<8x256xf32>
    %c6_98 = arith.constant 6 : index
    %152 = memref.load %arg2[%c6_98] : memref<45xf32, #tpu.memory_space<smem>>
    %153 = vector.broadcast %152 : f32 to vector<8x256xf32>
    %154 = arith.subf %151, %153 : vector<8x256xf32>
    %155 = arith.mulf %154, %154 : vector<8x256xf32>
    %c0_99 = arith.constant 0 : index
    %c1_100 = arith.constant 1 : index
    %c0_101 = arith.constant 0 : index
    %c0_102 = arith.constant 0 : index
    %156 = vector.load %arg4[%c0_99, %c1_100, %c0_101, %c0_102] : memref<1x3x8x256xf32, #tpu.memory_space<vmem>>, vector<1x1x8x256xf32>
    %157 = vector.shape_cast %156 : vector<1x1x8x256xf32> to vector<8x256xf32>
    %c7_103 = arith.constant 7 : index
    %158 = memref.load %arg2[%c7_103] : memref<45xf32, #tpu.memory_space<smem>>
    %159 = vector.broadcast %158 : f32 to vector<8x256xf32>
    %160 = arith.subf %157, %159 : vector<8x256xf32>
    %161 = arith.mulf %160, %160 : vector<8x256xf32>
    %162 = arith.addf %155, %161 : vector<8x256xf32>
    %c0_104 = arith.constant 0 : index
    %c2_105 = arith.constant 2 : index
    %c0_106 = arith.constant 0 : index
    %c0_107 = arith.constant 0 : index
    %163 = vector.load %arg4[%c0_104, %c2_105, %c0_106, %c0_107] : memref<1x3x8x256xf32, #tpu.memory_space<vmem>>, vector<1x1x8x256xf32>
    %164 = vector.shape_cast %163 : vector<1x1x8x256xf32> to vector<8x256xf32>
    %c8_108 = arith.constant 8 : index
    %165 = memref.load %arg2[%c8_108] : memref<45xf32, #tpu.memory_space<smem>>
    %166 = vector.broadcast %165 : f32 to vector<8x256xf32>
    %167 = arith.subf %164, %166 : vector<8x256xf32>
    %168 = arith.mulf %167, %167 : vector<8x256xf32>
    %169 = arith.addf %162, %168 : vector<8x256xf32>
    %170 = math.sqrt %169 : vector<8x256xf32>
    %cst_109 = arith.constant 1.66666663 : f32
    %171 = vector.broadcast %cst_109 : f32 to vector<8x256xf32>
    %172 = arith.mulf %170, %171 : vector<8x256xf32>
    %cst_110 = arith.constant 1.000000e+00 : f32
    %173 = vector.broadcast %cst_110 : f32 to vector<8x256xf32>
    %174 = arith.subf %173, %172 : vector<8x256xf32>
    %cst_111 = arith.constant 0.000000e+00 : f32
    %175 = vector.broadcast %cst_111 : f32 to vector<8x256xf32>
    %176 = arith.maximumf %174, %175 : vector<8x256xf32>
    %177 = vector.extract_strided_slice %176 {offsets = [0, 0], sizes = [1, 256], strides = [1, 1]} : vector<8x256xf32> to vector<1x256xf32>
    %c0_112 = arith.constant 0 : index
    %c0_113 = arith.constant 0 : index
    %c0_114 = arith.constant 0 : index
    %c0_115 = arith.constant 0 : index
    %178 = vector.load %arg5[%c0_112, %c0_113, %c0_114, %c0_115] : memref<1x8x8x256xf32, #tpu.memory_space<vmem>>, vector<1x1x8x256xf32>
    %179 = vector.shape_cast %178 : vector<1x1x8x256xf32> to vector<8x256xf32>
    %180 = vector.broadcast %177 : vector<1x256xf32> to vector<8x256xf32>
    %181 = arith.mulf %180, %179 : vector<8x256xf32>
    %182 = vector.extract_strided_slice %176 {offsets = [1, 0], sizes = [1, 256], strides = [1, 1]} : vector<8x256xf32> to vector<1x256xf32>
    %c0_116 = arith.constant 0 : index
    %c1_117 = arith.constant 1 : index
    %c0_118 = arith.constant 0 : index
    %c0_119 = arith.constant 0 : index
    %183 = vector.load %arg5[%c0_116, %c1_117, %c0_118, %c0_119] : memref<1x8x8x256xf32, #tpu.memory_space<vmem>>, vector<1x1x8x256xf32>
    %184 = vector.shape_cast %183 : vector<1x1x8x256xf32> to vector<8x256xf32>
    %185 = vector.broadcast %182 : vector<1x256xf32> to vector<8x256xf32>
    %186 = arith.mulf %185, %184 : vector<8x256xf32>
    %187 = arith.addf %181, %186 : vector<8x256xf32>
    %188 = vector.extract_strided_slice %176 {offsets = [2, 0], sizes = [1, 256], strides = [1, 1]} : vector<8x256xf32> to vector<1x256xf32>
    %c0_120 = arith.constant 0 : index
    %c2_121 = arith.constant 2 : index
    %c0_122 = arith.constant 0 : index
    %c0_123 = arith.constant 0 : index
    %189 = vector.load %arg5[%c0_120, %c2_121, %c0_122, %c0_123] : memref<1x8x8x256xf32, #tpu.memory_space<vmem>>, vector<1x1x8x256xf32>
    %190 = vector.shape_cast %189 : vector<1x1x8x256xf32> to vector<8x256xf32>
    %191 = vector.broadcast %188 : vector<1x256xf32> to vector<8x256xf32>
    %192 = arith.mulf %191, %190 : vector<8x256xf32>
    %193 = arith.addf %187, %192 : vector<8x256xf32>
    %194 = vector.extract_strided_slice %176 {offsets = [3, 0], sizes = [1, 256], strides = [1, 1]} : vector<8x256xf32> to vector<1x256xf32>
    %c0_124 = arith.constant 0 : index
    %c3_125 = arith.constant 3 : index
    %c0_126 = arith.constant 0 : index
    %c0_127 = arith.constant 0 : index
    %195 = vector.load %arg5[%c0_124, %c3_125, %c0_126, %c0_127] : memref<1x8x8x256xf32, #tpu.memory_space<vmem>>, vector<1x1x8x256xf32>
    %196 = vector.shape_cast %195 : vector<1x1x8x256xf32> to vector<8x256xf32>
    %197 = vector.broadcast %194 : vector<1x256xf32> to vector<8x256xf32>
    %198 = arith.mulf %197, %196 : vector<8x256xf32>
    %199 = arith.addf %193, %198 : vector<8x256xf32>
    %200 = vector.extract_strided_slice %176 {offsets = [4, 0], sizes = [1, 256], strides = [1, 1]} : vector<8x256xf32> to vector<1x256xf32>
    %c0_128 = arith.constant 0 : index
    %c4_129 = arith.constant 4 : index
    %c0_130 = arith.constant 0 : index
    %c0_131 = arith.constant 0 : index
    %201 = vector.load %arg5[%c0_128, %c4_129, %c0_130, %c0_131] : memref<1x8x8x256xf32, #tpu.memory_space<vmem>>, vector<1x1x8x256xf32>
    %202 = vector.shape_cast %201 : vector<1x1x8x256xf32> to vector<8x256xf32>
    %203 = vector.broadcast %200 : vector<1x256xf32> to vector<8x256xf32>
    %204 = arith.mulf %203, %202 : vector<8x256xf32>
    %205 = arith.addf %199, %204 : vector<8x256xf32>
    %206 = vector.extract_strided_slice %176 {offsets = [5, 0], sizes = [1, 256], strides = [1, 1]} : vector<8x256xf32> to vector<1x256xf32>
    %c0_132 = arith.constant 0 : index
    %c5_133 = arith.constant 5 : index
    %c0_134 = arith.constant 0 : index
    %c0_135 = arith.constant 0 : index
    %207 = vector.load %arg5[%c0_132, %c5_133, %c0_134, %c0_135] : memref<1x8x8x256xf32, #tpu.memory_space<vmem>>, vector<1x1x8x256xf32>
    %208 = vector.shape_cast %207 : vector<1x1x8x256xf32> to vector<8x256xf32>
    %209 = vector.broadcast %206 : vector<1x256xf32> to vector<8x256xf32>
    %210 = arith.mulf %209, %208 : vector<8x256xf32>
    %211 = arith.addf %205, %210 : vector<8x256xf32>
    %212 = vector.extract_strided_slice %176 {offsets = [6, 0], sizes = [1, 256], strides = [1, 1]} : vector<8x256xf32> to vector<1x256xf32>
    %c0_136 = arith.constant 0 : index
    %c6_137 = arith.constant 6 : index
    %c0_138 = arith.constant 0 : index
    %c0_139 = arith.constant 0 : index
    %213 = vector.load %arg5[%c0_136, %c6_137, %c0_138, %c0_139] : memref<1x8x8x256xf32, #tpu.memory_space<vmem>>, vector<1x1x8x256xf32>
    %214 = vector.shape_cast %213 : vector<1x1x8x256xf32> to vector<8x256xf32>
    %215 = vector.broadcast %212 : vector<1x256xf32> to vector<8x256xf32>
    %216 = arith.mulf %215, %214 : vector<8x256xf32>
    %217 = arith.addf %211, %216 : vector<8x256xf32>
    %218 = vector.extract_strided_slice %176 {offsets = [7, 0], sizes = [1, 256], strides = [1, 1]} : vector<8x256xf32> to vector<1x256xf32>
    %c0_140 = arith.constant 0 : index
    %c7_141 = arith.constant 7 : index
    %c0_142 = arith.constant 0 : index
    %c0_143 = arith.constant 0 : index
    %219 = vector.load %arg5[%c0_140, %c7_141, %c0_142, %c0_143] : memref<1x8x8x256xf32, #tpu.memory_space<vmem>>, vector<1x1x8x256xf32>
    %220 = vector.shape_cast %219 : vector<1x1x8x256xf32> to vector<8x256xf32>
    %221 = vector.broadcast %218 : vector<1x256xf32> to vector<8x256xf32>
    %222 = arith.mulf %221, %220 : vector<8x256xf32>
    %223 = arith.addf %217, %222 : vector<8x256xf32>
    %c16 = arith.constant 16 : index
    %c0_144 = arith.constant 0 : index
    %224 = vector.load %arg7[%c16, %c0_144] : memref<120x256xf32, #tpu.memory_space<vmem>>, vector<8x256xf32>
    tpu.vector_store %arg7[%c16, %c0_144], %223 {strides = array<i32>} : memref<120x256xf32, #tpu.memory_space<vmem>>, vector<8x256xf32>,
    %c0_145 = arith.constant 0 : index
    %c0_146 = arith.constant 0 : index
    %c0_147 = arith.constant 0 : index
    %c0_148 = arith.constant 0 : index
    %225 = vector.load %arg4[%c0_145, %c0_146, %c0_147, %c0_148] : memref<1x3x8x256xf32, #tpu.memory_space<vmem>>, vector<1x1x8x256xf32>
    %226 = vector.shape_cast %225 : vector<1x1x8x256xf32> to vector<8x256xf32>
    %c9 = arith.constant 9 : index
    %227 = memref.load %arg2[%c9] : memref<45xf32, #tpu.memory_space<smem>>
    %228 = vector.broadcast %227 : f32 to vector<8x256xf32>
    %229 = arith.subf %226, %228 : vector<8x256xf32>
    %230 = arith.mulf %229, %229 : vector<8x256xf32>
    %c0_149 = arith.constant 0 : index
    %c1_150 = arith.constant 1 : index
    %c0_151 = arith.constant 0 : index
    %c0_152 = arith.constant 0 : index
    %231 = vector.load %arg4[%c0_149, %c1_150, %c0_151, %c0_152] : memref<1x3x8x256xf32, #tpu.memory_space<vmem>>, vector<1x1x8x256xf32>
    %232 = vector.shape_cast %231 : vector<1x1x8x256xf32> to vector<8x256xf32>
    %c10 = arith.constant 10 : index
    %233 = memref.load %arg2[%c10] : memref<45xf32, #tpu.memory_space<smem>>
    %234 = vector.broadcast %233 : f32 to vector<8x256xf32>
    %235 = arith.subf %232, %234 : vector<8x256xf32>
    %236 = arith.mulf %235, %235 : vector<8x256xf32>
    %237 = arith.addf %230, %236 : vector<8x256xf32>
    %c0_153 = arith.constant 0 : index
    %c2_154 = arith.constant 2 : index
    %c0_155 = arith.constant 0 : index
    %c0_156 = arith.constant 0 : index
    %238 = vector.load %arg4[%c0_153, %c2_154, %c0_155, %c0_156] : memref<1x3x8x256xf32, #tpu.memory_space<vmem>>, vector<1x1x8x256xf32>
    %239 = vector.shape_cast %238 : vector<1x1x8x256xf32> to vector<8x256xf32>
    %c11 = arith.constant 11 : index
    %240 = memref.load %arg2[%c11] : memref<45xf32, #tpu.memory_space<smem>>
    %241 = vector.broadcast %240 : f32 to vector<8x256xf32>
    %242 = arith.subf %239, %241 : vector<8x256xf32>
    %243 = arith.mulf %242, %242 : vector<8x256xf32>
    %244 = arith.addf %237, %243 : vector<8x256xf32>
    %245 = math.sqrt %244 : vector<8x256xf32>
    %cst_157 = arith.constant 1.66666663 : f32
    %246 = vector.broadcast %cst_157 : f32 to vector<8x256xf32>
    %247 = arith.mulf %245, %246 : vector<8x256xf32>
    %cst_158 = arith.constant 1.000000e+00 : f32
    %248 = vector.broadcast %cst_158 : f32 to vector<8x256xf32>
    %249 = arith.subf %248, %247 : vector<8x256xf32>
    %cst_159 = arith.constant 0.000000e+00 : f32
    %250 = vector.broadcast %cst_159 : f32 to vector<8x256xf32>
    %251 = arith.maximumf %249, %250 : vector<8x256xf32>
    %252 = vector.extract_strided_slice %251 {offsets = [0, 0], sizes = [1, 256], strides = [1, 1]} : vector<8x256xf32> to vector<1x256xf32>
    %c0_160 = arith.constant 0 : index
    %c0_161 = arith.constant 0 : index
    %c0_162 = arith.constant 0 : index
    %c0_163 = arith.constant 0 : index
    %253 = vector.load %arg5[%c0_160, %c0_161, %c0_162, %c0_163] : memref<1x8x8x256xf32, #tpu.memory_space<vmem>>, vector<1x1x8x256xf32>
    %254 = vector.shape_cast %253 : vector<1x1x8x256xf32> to vector<8x256xf32>
    %255 = vector.broadcast %252 : vector<1x256xf32> to vector<8x256xf32>
    %256 = arith.mulf %255, %254 : vector<8x256xf32>
    %257 = vector.extract_strided_slice %251 {offsets = [1, 0], sizes = [1, 256], strides = [1, 1]} : vector<8x256xf32> to vector<1x256xf32>
    %c0_164 = arith.constant 0 : index
    %c1_165 = arith.constant 1 : index
    %c0_166 = arith.constant 0 : index
    %c0_167 = arith.constant 0 : index
    %258 = vector.load %arg5[%c0_164, %c1_165, %c0_166, %c0_167] : memref<1x8x8x256xf32, #tpu.memory_space<vmem>>, vector<1x1x8x256xf32>
    %259 = vector.shape_cast %258 : vector<1x1x8x256xf32> to vector<8x256xf32>
    %260 = vector.broadcast %257 : vector<1x256xf32> to vector<8x256xf32>
    %261 = arith.mulf %260, %259 : vector<8x256xf32>
    %262 = arith.addf %256, %261 : vector<8x256xf32>
    %263 = vector.extract_strided_slice %251 {offsets = [2, 0], sizes = [1, 256], strides = [1, 1]} : vector<8x256xf32> to vector<1x256xf32>
    %c0_168 = arith.constant 0 : index
    %c2_169 = arith.constant 2 : index
    %c0_170 = arith.constant 0 : index
    %c0_171 = arith.constant 0 : index
    %264 = vector.load %arg5[%c0_168, %c2_169, %c0_170, %c0_171] : memref<1x8x8x256xf32, #tpu.memory_space<vmem>>, vector<1x1x8x256xf32>
    %265 = vector.shape_cast %264 : vector<1x1x8x256xf32> to vector<8x256xf32>
    %266 = vector.broadcast %263 : vector<1x256xf32> to vector<8x256xf32>
    %267 = arith.mulf %266, %265 : vector<8x256xf32>
    %268 = arith.addf %262, %267 : vector<8x256xf32>
    %269 = vector.extract_strided_slice %251 {offsets = [3, 0], sizes = [1, 256], strides = [1, 1]} : vector<8x256xf32> to vector<1x256xf32>
    %c0_172 = arith.constant 0 : index
    %c3_173 = arith.constant 3 : index
    %c0_174 = arith.constant 0 : index
    %c0_175 = arith.constant 0 : index
    %270 = vector.load %arg5[%c0_172, %c3_173, %c0_174, %c0_175] : memref<1x8x8x256xf32, #tpu.memory_space<vmem>>, vector<1x1x8x256xf32>
    %271 = vector.shape_cast %270 : vector<1x1x8x256xf32> to vector<8x256xf32>
    %272 = vector.broadcast %269 : vector<1x256xf32> to vector<8x256xf32>
    %273 = arith.mulf %272, %271 : vector<8x256xf32>
    %274 = arith.addf %268, %273 : vector<8x256xf32>
    %275 = vector.extract_strided_slice %251 {offsets = [4, 0], sizes = [1, 256], strides = [1, 1]} : vector<8x256xf32> to vector<1x256xf32>
    %c0_176 = arith.constant 0 : index
    %c4_177 = arith.constant 4 : index
    %c0_178 = arith.constant 0 : index
    %c0_179 = arith.constant 0 : index
    %276 = vector.load %arg5[%c0_176, %c4_177, %c0_178, %c0_179] : memref<1x8x8x256xf32, #tpu.memory_space<vmem>>, vector<1x1x8x256xf32>
    %277 = vector.shape_cast %276 : vector<1x1x8x256xf32> to vector<8x256xf32>
    %278 = vector.broadcast %275 : vector<1x256xf32> to vector<8x256xf32>
    %279 = arith.mulf %278, %277 : vector<8x256xf32>
    %280 = arith.addf %274, %279 : vector<8x256xf32>
    %281 = vector.extract_strided_slice %251 {offsets = [5, 0], sizes = [1, 256], strides = [1, 1]} : vector<8x256xf32> to vector<1x256xf32>
    %c0_180 = arith.constant 0 : index
    %c5_181 = arith.constant 5 : index
    %c0_182 = arith.constant 0 : index
    %c0_183 = arith.constant 0 : index
    %282 = vector.load %arg5[%c0_180, %c5_181, %c0_182, %c0_183] : memref<1x8x8x256xf32, #tpu.memory_space<vmem>>, vector<1x1x8x256xf32>
    %283 = vector.shape_cast %282 : vector<1x1x8x256xf32> to vector<8x256xf32>
    %284 = vector.broadcast %281 : vector<1x256xf32> to vector<8x256xf32>
    %285 = arith.mulf %284, %283 : vector<8x256xf32>
    %286 = arith.addf %280, %285 : vector<8x256xf32>
    %287 = vector.extract_strided_slice %251 {offsets = [6, 0], sizes = [1, 256], strides = [1, 1]} : vector<8x256xf32> to vector<1x256xf32>
    %c0_184 = arith.constant 0 : index
    %c6_185 = arith.constant 6 : index
    %c0_186 = arith.constant 0 : index
    %c0_187 = arith.constant 0 : index
    %288 = vector.load %arg5[%c0_184, %c6_185, %c0_186, %c0_187] : memref<1x8x8x256xf32, #tpu.memory_space<vmem>>, vector<1x1x8x256xf32>
    %289 = vector.shape_cast %288 : vector<1x1x8x256xf32> to vector<8x256xf32>
    %290 = vector.broadcast %287 : vector<1x256xf32> to vector<8x256xf32>
    %291 = arith.mulf %290, %289 : vector<8x256xf32>
    %292 = arith.addf %286, %291 : vector<8x256xf32>
    %293 = vector.extract_strided_slice %251 {offsets = [7, 0], sizes = [1, 256], strides = [1, 1]} : vector<8x256xf32> to vector<1x256xf32>
    %c0_188 = arith.constant 0 : index
    %c7_189 = arith.constant 7 : index
    %c0_190 = arith.constant 0 : index
    %c0_191 = arith.constant 0 : index
    %294 = vector.load %arg5[%c0_188, %c7_189, %c0_190, %c0_191] : memref<1x8x8x256xf32, #tpu.memory_space<vmem>>, vector<1x1x8x256xf32>
    %295 = vector.shape_cast %294 : vector<1x1x8x256xf32> to vector<8x256xf32>
    %296 = vector.broadcast %293 : vector<1x256xf32> to vector<8x256xf32>
    %297 = arith.mulf %296, %295 : vector<8x256xf32>
    %298 = arith.addf %292, %297 : vector<8x256xf32>
    %c24 = arith.constant 24 : index
    %c0_192 = arith.constant 0 : index
    %299 = vector.load %arg7[%c24, %c0_192] : memref<120x256xf32, #tpu.memory_space<vmem>>, vector<8x256xf32>
    tpu.vector_store %arg7[%c24, %c0_192], %298 {strides = array<i32>} : memref<120x256xf32, #tpu.memory_space<vmem>>, vector<8x256xf32>,
    %c0_193 = arith.constant 0 : index
    %c0_194 = arith.constant 0 : index
    %c0_195 = arith.constant 0 : index
    %c0_196 = arith.constant 0 : index
    %300 = vector.load %arg4[%c0_193, %c0_194, %c0_195, %c0_196] : memref<1x3x8x256xf32, #tpu.memory_space<vmem>>, vector<1x1x8x256xf32>
    %301 = vector.shape_cast %300 : vector<1x1x8x256xf32> to vector<8x256xf32>
    %c12 = arith.constant 12 : index
    %302 = memref.load %arg2[%c12] : memref<45xf32, #tpu.memory_space<smem>>
    %303 = vector.broadcast %302 : f32 to vector<8x256xf32>
    %304 = arith.subf %301, %303 : vector<8x256xf32>
    %305 = arith.mulf %304, %304 : vector<8x256xf32>
    %c0_197 = arith.constant 0 : index
    %c1_198 = arith.constant 1 : index
    %c0_199 = arith.constant 0 : index
    %c0_200 = arith.constant 0 : index
    %306 = vector.load %arg4[%c0_197, %c1_198, %c0_199, %c0_200] : memref<1x3x8x256xf32, #tpu.memory_space<vmem>>, vector<1x1x8x256xf32>
    %307 = vector.shape_cast %306 : vector<1x1x8x256xf32> to vector<8x256xf32>
    %c13 = arith.constant 13 : index
    %308 = memref.load %arg2[%c13] : memref<45xf32, #tpu.memory_space<smem>>
    %309 = vector.broadcast %308 : f32 to vector<8x256xf32>
    %310 = arith.subf %307, %309 : vector<8x256xf32>
    %311 = arith.mulf %310, %310 : vector<8x256xf32>
    %312 = arith.addf %305, %311 : vector<8x256xf32>
    %c0_201 = arith.constant 0 : index
    %c2_202 = arith.constant 2 : index
    %c0_203 = arith.constant 0 : index
    %c0_204 = arith.constant 0 : index
    %313 = vector.load %arg4[%c0_201, %c2_202, %c0_203, %c0_204] : memref<1x3x8x256xf32, #tpu.memory_space<vmem>>, vector<1x1x8x256xf32>
    %314 = vector.shape_cast %313 : vector<1x1x8x256xf32> to vector<8x256xf32>
    %c14 = arith.constant 14 : index
    %315 = memref.load %arg2[%c14] : memref<45xf32, #tpu.memory_space<smem>>
    %316 = vector.broadcast %315 : f32 to vector<8x256xf32>
    %317 = arith.subf %314, %316 : vector<8x256xf32>
    %318 = arith.mulf %317, %317 : vector<8x256xf32>
    %319 = arith.addf %312, %318 : vector<8x256xf32>
    %320 = math.sqrt %319 : vector<8x256xf32>
    %cst_205 = arith.constant 1.66666663 : f32
    %321 = vector.broadcast %cst_205 : f32 to vector<8x256xf32>
    %322 = arith.mulf %320, %321 : vector<8x256xf32>
    %cst_206 = arith.constant 1.000000e+00 : f32
    %323 = vector.broadcast %cst_206 : f32 to vector<8x256xf32>
    %324 = arith.subf %323, %322 : vector<8x256xf32>
    %cst_207 = arith.constant 0.000000e+00 : f32
    %325 = vector.broadcast %cst_207 : f32 to vector<8x256xf32>
    %326 = arith.maximumf %324, %325 : vector<8x256xf32>
    %327 = vector.extract_strided_slice %326 {offsets = [0, 0], sizes = [1, 256], strides = [1, 1]} : vector<8x256xf32> to vector<1x256xf32>
    %c0_208 = arith.constant 0 : index
    %c0_209 = arith.constant 0 : index
    %c0_210 = arith.constant 0 : index
    %c0_211 = arith.constant 0 : index
    %328 = vector.load %arg5[%c0_208, %c0_209, %c0_210, %c0_211] : memref<1x8x8x256xf32, #tpu.memory_space<vmem>>, vector<1x1x8x256xf32>
    %329 = vector.shape_cast %328 : vector<1x1x8x256xf32> to vector<8x256xf32>
    %330 = vector.broadcast %327 : vector<1x256xf32> to vector<8x256xf32>
    %331 = arith.mulf %330, %329 : vector<8x256xf32>
    %332 = vector.extract_strided_slice %326 {offsets = [1, 0], sizes = [1, 256], strides = [1, 1]} : vector<8x256xf32> to vector<1x256xf32>
    %c0_212 = arith.constant 0 : index
    %c1_213 = arith.constant 1 : index
    %c0_214 = arith.constant 0 : index
    %c0_215 = arith.constant 0 : index
    %333 = vector.load %arg5[%c0_212, %c1_213, %c0_214, %c0_215] : memref<1x8x8x256xf32, #tpu.memory_space<vmem>>, vector<1x1x8x256xf32>
    %334 = vector.shape_cast %333 : vector<1x1x8x256xf32> to vector<8x256xf32>
    %335 = vector.broadcast %332 : vector<1x256xf32> to vector<8x256xf32>
    %336 = arith.mulf %335, %334 : vector<8x256xf32>
    %337 = arith.addf %331, %336 : vector<8x256xf32>
    %338 = vector.extract_strided_slice %326 {offsets = [2, 0], sizes = [1, 256], strides = [1, 1]} : vector<8x256xf32> to vector<1x256xf32>
    %c0_216 = arith.constant 0 : index
    %c2_217 = arith.constant 2 : index
    %c0_218 = arith.constant 0 : index
    %c0_219 = arith.constant 0 : index
    %339 = vector.load %arg5[%c0_216, %c2_217, %c0_218, %c0_219] : memref<1x8x8x256xf32, #tpu.memory_space<vmem>>, vector<1x1x8x256xf32>
    %340 = vector.shape_cast %339 : vector<1x1x8x256xf32> to vector<8x256xf32>
    %341 = vector.broadcast %338 : vector<1x256xf32> to vector<8x256xf32>
    %342 = arith.mulf %341, %340 : vector<8x256xf32>
    %343 = arith.addf %337, %342 : vector<8x256xf32>
    %344 = vector.extract_strided_slice %326 {offsets = [3, 0], sizes = [1, 256], strides = [1, 1]} : vector<8x256xf32> to vector<1x256xf32>
    %c0_220 = arith.constant 0 : index
    %c3_221 = arith.constant 3 : index
    %c0_222 = arith.constant 0 : index
    %c0_223 = arith.constant 0 : index
    %345 = vector.load %arg5[%c0_220, %c3_221, %c0_222, %c0_223] : memref<1x8x8x256xf32, #tpu.memory_space<vmem>>, vector<1x1x8x256xf32>
    %346 = vector.shape_cast %345 : vector<1x1x8x256xf32> to vector<8x256xf32>
    %347 = vector.broadcast %344 : vector<1x256xf32> to vector<8x256xf32>
    %348 = arith.mulf %347, %346 : vector<8x256xf32>
    %349 = arith.addf %343, %348 : vector<8x256xf32>
    %350 = vector.extract_strided_slice %326 {offsets = [4, 0], sizes = [1, 256], strides = [1, 1]} : vector<8x256xf32> to vector<1x256xf32>
    %c0_224 = arith.constant 0 : index
    %c4_225 = arith.constant 4 : index
    %c0_226 = arith.constant 0 : index
    %c0_227 = arith.constant 0 : index
    %351 = vector.load %arg5[%c0_224, %c4_225, %c0_226, %c0_227] : memref<1x8x8x256xf32, #tpu.memory_space<vmem>>, vector<1x1x8x256xf32>
    %352 = vector.shape_cast %351 : vector<1x1x8x256xf32> to vector<8x256xf32>
    %353 = vector.broadcast %350 : vector<1x256xf32> to vector<8x256xf32>
    %354 = arith.mulf %353, %352 : vector<8x256xf32>
    %355 = arith.addf %349, %354 : vector<8x256xf32>
    %356 = vector.extract_strided_slice %326 {offsets = [5, 0], sizes = [1, 256], strides = [1, 1]} : vector<8x256xf32> to vector<1x256xf32>
    %c0_228 = arith.constant 0 : index
    %c5_229 = arith.constant 5 : index
    %c0_230 = arith.constant 0 : index
    %c0_231 = arith.constant 0 : index
    %357 = vector.load %arg5[%c0_228, %c5_229, %c0_230, %c0_231] : memref<1x8x8x256xf32, #tpu.memory_space<vmem>>, vector<1x1x8x256xf32>
    %358 = vector.shape_cast %357 : vector<1x1x8x256xf32> to vector<8x256xf32>
    %359 = vector.broadcast %356 : vector<1x256xf32> to vector<8x256xf32>
    %360 = arith.mulf %359, %358 : vector<8x256xf32>
    %361 = arith.addf %355, %360 : vector<8x256xf32>
    %362 = vector.extract_strided_slice %326 {offsets = [6, 0], sizes = [1, 256], strides = [1, 1]} : vector<8x256xf32> to vector<1x256xf32>
    %c0_232 = arith.constant 0 : index
    %c6_233 = arith.constant 6 : index
    %c0_234 = arith.constant 0 : index
    %c0_235 = arith.constant 0 : index
    %363 = vector.load %arg5[%c0_232, %c6_233, %c0_234, %c0_235] : memref<1x8x8x256xf32, #tpu.memory_space<vmem>>, vector<1x1x8x256xf32>
    %364 = vector.shape_cast %363 : vector<1x1x8x256xf32> to vector<8x256xf32>
    %365 = vector.broadcast %362 : vector<1x256xf32> to vector<8x256xf32>
    %366 = arith.mulf %365, %364 : vector<8x256xf32>
    %367 = arith.addf %361, %366 : vector<8x256xf32>
    %368 = vector.extract_strided_slice %326 {offsets = [7, 0], sizes = [1, 256], strides = [1, 1]} : vector<8x256xf32> to vector<1x256xf32>
    %c0_236 = arith.constant 0 : index
    %c7_237 = arith.constant 7 : index
    %c0_238 = arith.constant 0 : index
    %c0_239 = arith.constant 0 : index
    %369 = vector.load %arg5[%c0_236, %c7_237, %c0_238, %c0_239] : memref<1x8x8x256xf32, #tpu.memory_space<vmem>>, vector<1x1x8x256xf32>
    %370 = vector.shape_cast %369 : vector<1x1x8x256xf32> to vector<8x256xf32>
    %371 = vector.broadcast %368 : vector<1x256xf32> to vector<8x256xf32>
    %372 = arith.mulf %371, %370 : vector<8x256xf32>
    %373 = arith.addf %367, %372 : vector<8x256xf32>
    %c32 = arith.constant 32 : index
    %c0_240 = arith.constant 0 : index
    %374 = vector.load %arg7[%c32, %c0_240] : memref<120x256xf32, #tpu.memory_space<vmem>>, vector<8x256xf32>
    tpu.vector_store %arg7[%c32, %c0_240], %373 {strides = array<i32>} : memref<120x256xf32, #tpu.memory_space<vmem>>, vector<8x256xf32>,
    %c0_241 = arith.constant 0 : index
    %c0_242 = arith.constant 0 : index
    %c0_243 = arith.constant 0 : index
    %c0_244 = arith.constant 0 : index
    %375 = vector.load %arg4[%c0_241, %c0_242, %c0_243, %c0_244] : memref<1x3x8x256xf32, #tpu.memory_space<vmem>>, vector<1x1x8x256xf32>
    %376 = vector.shape_cast %375 : vector<1x1x8x256xf32> to vector<8x256xf32>
    %c15 = arith.constant 15 : index
    %377 = memref.load %arg2[%c15] : memref<45xf32, #tpu.memory_space<smem>>
    %378 = vector.broadcast %377 : f32 to vector<8x256xf32>
    %379 = arith.subf %376, %378 : vector<8x256xf32>
    %380 = arith.mulf %379, %379 : vector<8x256xf32>
    %c0_245 = arith.constant 0 : index
    %c1_246 = arith.constant 1 : index
    %c0_247 = arith.constant 0 : index
    %c0_248 = arith.constant 0 : index
    %381 = vector.load %arg4[%c0_245, %c1_246, %c0_247, %c0_248] : memref<1x3x8x256xf32, #tpu.memory_space<vmem>>, vector<1x1x8x256xf32>
    %382 = vector.shape_cast %381 : vector<1x1x8x256xf32> to vector<8x256xf32>
    %c16_249 = arith.constant 16 : index
    %383 = memref.load %arg2[%c16_249] : memref<45xf32, #tpu.memory_space<smem>>
    %384 = vector.broadcast %383 : f32 to vector<8x256xf32>
    %385 = arith.subf %382, %384 : vector<8x256xf32>
    %386 = arith.mulf %385, %385 : vector<8x256xf32>
    %387 = arith.addf %380, %386 : vector<8x256xf32>
    %c0_250 = arith.constant 0 : index
    %c2_251 = arith.constant 2 : index
    %c0_252 = arith.constant 0 : index
    %c0_253 = arith.constant 0 : index
    %388 = vector.load %arg4[%c0_250, %c2_251, %c0_252, %c0_253] : memref<1x3x8x256xf32, #tpu.memory_space<vmem>>, vector<1x1x8x256xf32>
    %389 = vector.shape_cast %388 : vector<1x1x8x256xf32> to vector<8x256xf32>
    %c17 = arith.constant 17 : index
    %390 = memref.load %arg2[%c17] : memref<45xf32, #tpu.memory_space<smem>>
    %391 = vector.broadcast %390 : f32 to vector<8x256xf32>
    %392 = arith.subf %389, %391 : vector<8x256xf32>
    %393 = arith.mulf %392, %392 : vector<8x256xf32>
    %394 = arith.addf %387, %393 : vector<8x256xf32>
    %395 = math.sqrt %394 : vector<8x256xf32>
    %cst_254 = arith.constant 1.66666663 : f32
    %396 = vector.broadcast %cst_254 : f32 to vector<8x256xf32>
    %397 = arith.mulf %395, %396 : vector<8x256xf32>
    %cst_255 = arith.constant 1.000000e+00 : f32
    %398 = vector.broadcast %cst_255 : f32 to vector<8x256xf32>
    %399 = arith.subf %398, %397 : vector<8x256xf32>
    %cst_256 = arith.constant 0.000000e+00 : f32
    %400 = vector.broadcast %cst_256 : f32 to vector<8x256xf32>
    %401 = arith.maximumf %399, %400 : vector<8x256xf32>
    %402 = vector.extract_strided_slice %401 {offsets = [0, 0], sizes = [1, 256], strides = [1, 1]} : vector<8x256xf32> to vector<1x256xf32>
    %c0_257 = arith.constant 0 : index
    %c0_258 = arith.constant 0 : index
    %c0_259 = arith.constant 0 : index
    %c0_260 = arith.constant 0 : index
    %403 = vector.load %arg5[%c0_257, %c0_258, %c0_259, %c0_260] : memref<1x8x8x256xf32, #tpu.memory_space<vmem>>, vector<1x1x8x256xf32>
    %404 = vector.shape_cast %403 : vector<1x1x8x256xf32> to vector<8x256xf32>
    %405 = vector.broadcast %402 : vector<1x256xf32> to vector<8x256xf32>
    %406 = arith.mulf %405, %404 : vector<8x256xf32>
    %407 = vector.extract_strided_slice %401 {offsets = [1, 0], sizes = [1, 256], strides = [1, 1]} : vector<8x256xf32> to vector<1x256xf32>
    %c0_261 = arith.constant 0 : index
    %c1_262 = arith.constant 1 : index
    %c0_263 = arith.constant 0 : index
    %c0_264 = arith.constant 0 : index
    %408 = vector.load %arg5[%c0_261, %c1_262, %c0_263, %c0_264] : memref<1x8x8x256xf32, #tpu.memory_space<vmem>>, vector<1x1x8x256xf32>
    %409 = vector.shape_cast %408 : vector<1x1x8x256xf32> to vector<8x256xf32>
    %410 = vector.broadcast %407 : vector<1x256xf32> to vector<8x256xf32>
    %411 = arith.mulf %410, %409 : vector<8x256xf32>
    %412 = arith.addf %406, %411 : vector<8x256xf32>
    %413 = vector.extract_strided_slice %401 {offsets = [2, 0], sizes = [1, 256], strides = [1, 1]} : vector<8x256xf32> to vector<1x256xf32>
    %c0_265 = arith.constant 0 : index
    %c2_266 = arith.constant 2 : index
    %c0_267 = arith.constant 0 : index
    %c0_268 = arith.constant 0 : index
    %414 = vector.load %arg5[%c0_265, %c2_266, %c0_267, %c0_268] : memref<1x8x8x256xf32, #tpu.memory_space<vmem>>, vector<1x1x8x256xf32>
    %415 = vector.shape_cast %414 : vector<1x1x8x256xf32> to vector<8x256xf32>
    %416 = vector.broadcast %413 : vector<1x256xf32> to vector<8x256xf32>
    %417 = arith.mulf %416, %415 : vector<8x256xf32>
    %418 = arith.addf %412, %417 : vector<8x256xf32>
    %419 = vector.extract_strided_slice %401 {offsets = [3, 0], sizes = [1, 256], strides = [1, 1]} : vector<8x256xf32> to vector<1x256xf32>
    %c0_269 = arith.constant 0 : index
    %c3_270 = arith.constant 3 : index
    %c0_271 = arith.constant 0 : index
    %c0_272 = arith.constant 0 : index
    %420 = vector.load %arg5[%c0_269, %c3_270, %c0_271, %c0_272] : memref<1x8x8x256xf32, #tpu.memory_space<vmem>>, vector<1x1x8x256xf32>
    %421 = vector.shape_cast %420 : vector<1x1x8x256xf32> to vector<8x256xf32>
    %422 = vector.broadcast %419 : vector<1x256xf32> to vector<8x256xf32>
    %423 = arith.mulf %422, %421 : vector<8x256xf32>
    %424 = arith.addf %418, %423 : vector<8x256xf32>
    %425 = vector.extract_strided_slice %401 {offsets = [4, 0], sizes = [1, 256], strides = [1, 1]} : vector<8x256xf32> to vector<1x256xf32>
    %c0_273 = arith.constant 0 : index
    %c4_274 = arith.constant 4 : index
    %c0_275 = arith.constant 0 : index
    %c0_276 = arith.constant 0 : index
    %426 = vector.load %arg5[%c0_273, %c4_274, %c0_275, %c0_276] : memref<1x8x8x256xf32, #tpu.memory_space<vmem>>, vector<1x1x8x256xf32>
    %427 = vector.shape_cast %426 : vector<1x1x8x256xf32> to vector<8x256xf32>
    %428 = vector.broadcast %425 : vector<1x256xf32> to vector<8x256xf32>
    %429 = arith.mulf %428, %427 : vector<8x256xf32>
    %430 = arith.addf %424, %429 : vector<8x256xf32>
    %431 = vector.extract_strided_slice %401 {offsets = [5, 0], sizes = [1, 256], strides = [1, 1]} : vector<8x256xf32> to vector<1x256xf32>
    %c0_277 = arith.constant 0 : index
    %c5_278 = arith.constant 5 : index
    %c0_279 = arith.constant 0 : index
    %c0_280 = arith.constant 0 : index
    %432 = vector.load %arg5[%c0_277, %c5_278, %c0_279, %c0_280] : memref<1x8x8x256xf32, #tpu.memory_space<vmem>>, vector<1x1x8x256xf32>
    %433 = vector.shape_cast %432 : vector<1x1x8x256xf32> to vector<8x256xf32>
    %434 = vector.broadcast %431 : vector<1x256xf32> to vector<8x256xf32>
    %435 = arith.mulf %434, %433 : vector<8x256xf32>
    %436 = arith.addf %430, %435 : vector<8x256xf32>
    %437 = vector.extract_strided_slice %401 {offsets = [6, 0], sizes = [1, 256], strides = [1, 1]} : vector<8x256xf32> to vector<1x256xf32>
    %c0_281 = arith.constant 0 : index
    %c6_282 = arith.constant 6 : index
    %c0_283 = arith.constant 0 : index
    %c0_284 = arith.constant 0 : index
    %438 = vector.load %arg5[%c0_281, %c6_282, %c0_283, %c0_284] : memref<1x8x8x256xf32, #tpu.memory_space<vmem>>, vector<1x1x8x256xf32>
    %439 = vector.shape_cast %438 : vector<1x1x8x256xf32> to vector<8x256xf32>
    %440 = vector.broadcast %437 : vector<1x256xf32> to vector<8x256xf32>
    %441 = arith.mulf %440, %439 : vector<8x256xf32>
    %442 = arith.addf %436, %441 : vector<8x256xf32>
    %443 = vector.extract_strided_slice %401 {offsets = [7, 0], sizes = [1, 256], strides = [1, 1]} : vector<8x256xf32> to vector<1x256xf32>
    %c0_285 = arith.constant 0 : index
    %c7_286 = arith.constant 7 : index
    %c0_287 = arith.constant 0 : index
    %c0_288 = arith.constant 0 : index
    %444 = vector.load %arg5[%c0_285, %c7_286, %c0_287, %c0_288] : memref<1x8x8x256xf32, #tpu.memory_space<vmem>>, vector<1x1x8x256xf32>
    %445 = vector.shape_cast %444 : vector<1x1x8x256xf32> to vector<8x256xf32>
    %446 = vector.broadcast %443 : vector<1x256xf32> to vector<8x256xf32>
    %447 = arith.mulf %446, %445 : vector<8x256xf32>
    %448 = arith.addf %442, %447 : vector<8x256xf32>
    %c40 = arith.constant 40 : index
    %c0_289 = arith.constant 0 : index
    %449 = vector.load %arg7[%c40, %c0_289] : memref<120x256xf32, #tpu.memory_space<vmem>>, vector<8x256xf32>
    tpu.vector_store %arg7[%c40, %c0_289], %448 {strides = array<i32>} : memref<120x256xf32, #tpu.memory_space<vmem>>, vector<8x256xf32>,
    %c0_290 = arith.constant 0 : index
    %c0_291 = arith.constant 0 : index
    %c0_292 = arith.constant 0 : index
    %c0_293 = arith.constant 0 : index
    %450 = vector.load %arg4[%c0_290, %c0_291, %c0_292, %c0_293] : memref<1x3x8x256xf32, #tpu.memory_space<vmem>>, vector<1x1x8x256xf32>
    %451 = vector.shape_cast %450 : vector<1x1x8x256xf32> to vector<8x256xf32>
    %c18 = arith.constant 18 : index
    %452 = memref.load %arg2[%c18] : memref<45xf32, #tpu.memory_space<smem>>
    %453 = vector.broadcast %452 : f32 to vector<8x256xf32>
    %454 = arith.subf %451, %453 : vector<8x256xf32>
    %455 = arith.mulf %454, %454 : vector<8x256xf32>
    %c0_294 = arith.constant 0 : index
    %c1_295 = arith.constant 1 : index
    %c0_296 = arith.constant 0 : index
    %c0_297 = arith.constant 0 : index
    %456 = vector.load %arg4[%c0_294, %c1_295, %c0_296, %c0_297] : memref<1x3x8x256xf32, #tpu.memory_space<vmem>>, vector<1x1x8x256xf32>
    %457 = vector.shape_cast %456 : vector<1x1x8x256xf32> to vector<8x256xf32>
    %c19 = arith.constant 19 : index
    %458 = memref.load %arg2[%c19] : memref<45xf32, #tpu.memory_space<smem>>
    %459 = vector.broadcast %458 : f32 to vector<8x256xf32>
    %460 = arith.subf %457, %459 : vector<8x256xf32>
    %461 = arith.mulf %460, %460 : vector<8x256xf32>
    %462 = arith.addf %455, %461 : vector<8x256xf32>
    %c0_298 = arith.constant 0 : index
    %c2_299 = arith.constant 2 : index
    %c0_300 = arith.constant 0 : index
    %c0_301 = arith.constant 0 : index
    %463 = vector.load %arg4[%c0_298, %c2_299, %c0_300, %c0_301] : memref<1x3x8x256xf32, #tpu.memory_space<vmem>>, vector<1x1x8x256xf32>
    %464 = vector.shape_cast %463 : vector<1x1x8x256xf32> to vector<8x256xf32>
    %c20 = arith.constant 20 : index
    %465 = memref.load %arg2[%c20] : memref<45xf32, #tpu.memory_space<smem>>
    %466 = vector.broadcast %465 : f32 to vector<8x256xf32>
    %467 = arith.subf %464, %466 : vector<8x256xf32>
    %468 = arith.mulf %467, %467 : vector<8x256xf32>
    %469 = arith.addf %462, %468 : vector<8x256xf32>
    %470 = math.sqrt %469 : vector<8x256xf32>
    %cst_302 = arith.constant 1.66666663 : f32
    %471 = vector.broadcast %cst_302 : f32 to vector<8x256xf32>
    %472 = arith.mulf %470, %471 : vector<8x256xf32>
    %cst_303 = arith.constant 1.000000e+00 : f32
    %473 = vector.broadcast %cst_303 : f32 to vector<8x256xf32>
    %474 = arith.subf %473, %472 : vector<8x256xf32>
    %cst_304 = arith.constant 0.000000e+00 : f32
    %475 = vector.broadcast %cst_304 : f32 to vector<8x256xf32>
    %476 = arith.maximumf %474, %475 : vector<8x256xf32>
    %477 = vector.extract_strided_slice %476 {offsets = [0, 0], sizes = [1, 256], strides = [1, 1]} : vector<8x256xf32> to vector<1x256xf32>
    %c0_305 = arith.constant 0 : index
    %c0_306 = arith.constant 0 : index
    %c0_307 = arith.constant 0 : index
    %c0_308 = arith.constant 0 : index
    %478 = vector.load %arg5[%c0_305, %c0_306, %c0_307, %c0_308] : memref<1x8x8x256xf32, #tpu.memory_space<vmem>>, vector<1x1x8x256xf32>
    %479 = vector.shape_cast %478 : vector<1x1x8x256xf32> to vector<8x256xf32>
    %480 = vector.broadcast %477 : vector<1x256xf32> to vector<8x256xf32>
    %481 = arith.mulf %480, %479 : vector<8x256xf32>
    %482 = vector.extract_strided_slice %476 {offsets = [1, 0], sizes = [1, 256], strides = [1, 1]} : vector<8x256xf32> to vector<1x256xf32>
    %c0_309 = arith.constant 0 : index
    %c1_310 = arith.constant 1 : index
    %c0_311 = arith.constant 0 : index
    %c0_312 = arith.constant 0 : index
    %483 = vector.load %arg5[%c0_309, %c1_310, %c0_311, %c0_312] : memref<1x8x8x256xf32, #tpu.memory_space<vmem>>, vector<1x1x8x256xf32>
    %484 = vector.shape_cast %483 : vector<1x1x8x256xf32> to vector<8x256xf32>
    %485 = vector.broadcast %482 : vector<1x256xf32> to vector<8x256xf32>
    %486 = arith.mulf %485, %484 : vector<8x256xf32>
    %487 = arith.addf %481, %486 : vector<8x256xf32>
    %488 = vector.extract_strided_slice %476 {offsets = [2, 0], sizes = [1, 256], strides = [1, 1]} : vector<8x256xf32> to vector<1x256xf32>
    %c0_313 = arith.constant 0 : index
    %c2_314 = arith.constant 2 : index
    %c0_315 = arith.constant 0 : index
    %c0_316 = arith.constant 0 : index
    %489 = vector.load %arg5[%c0_313, %c2_314, %c0_315, %c0_316] : memref<1x8x8x256xf32, #tpu.memory_space<vmem>>, vector<1x1x8x256xf32>
    %490 = vector.shape_cast %489 : vector<1x1x8x256xf32> to vector<8x256xf32>
    %491 = vector.broadcast %488 : vector<1x256xf32> to vector<8x256xf32>
    %492 = arith.mulf %491, %490 : vector<8x256xf32>
    %493 = arith.addf %487, %492 : vector<8x256xf32>
    %494 = vector.extract_strided_slice %476 {offsets = [3, 0], sizes = [1, 256], strides = [1, 1]} : vector<8x256xf32> to vector<1x256xf32>
    %c0_317 = arith.constant 0 : index
    %c3_318 = arith.constant 3 : index
    %c0_319 = arith.constant 0 : index
    %c0_320 = arith.constant 0 : index
    %495 = vector.load %arg5[%c0_317, %c3_318, %c0_319, %c0_320] : memref<1x8x8x256xf32, #tpu.memory_space<vmem>>, vector<1x1x8x256xf32>
    %496 = vector.shape_cast %495 : vector<1x1x8x256xf32> to vector<8x256xf32>
    %497 = vector.broadcast %494 : vector<1x256xf32> to vector<8x256xf32>
    %498 = arith.mulf %497, %496 : vector<8x256xf32>
    %499 = arith.addf %493, %498 : vector<8x256xf32>
    %500 = vector.extract_strided_slice %476 {offsets = [4, 0], sizes = [1, 256], strides = [1, 1]} : vector<8x256xf32> to vector<1x256xf32>
    %c0_321 = arith.constant 0 : index
    %c4_322 = arith.constant 4 : index
    %c0_323 = arith.constant 0 : index
    %c0_324 = arith.constant 0 : index
    %501 = vector.load %arg5[%c0_321, %c4_322, %c0_323, %c0_324] : memref<1x8x8x256xf32, #tpu.memory_space<vmem>>, vector<1x1x8x256xf32>
    %502 = vector.shape_cast %501 : vector<1x1x8x256xf32> to vector<8x256xf32>
    %503 = vector.broadcast %500 : vector<1x256xf32> to vector<8x256xf32>
    %504 = arith.mulf %503, %502 : vector<8x256xf32>
    %505 = arith.addf %499, %504 : vector<8x256xf32>
    %506 = vector.extract_strided_slice %476 {offsets = [5, 0], sizes = [1, 256], strides = [1, 1]} : vector<8x256xf32> to vector<1x256xf32>
    %c0_325 = arith.constant 0 : index
    %c5_326 = arith.constant 5 : index
    %c0_327 = arith.constant 0 : index
    %c0_328 = arith.constant 0 : index
    %507 = vector.load %arg5[%c0_325, %c5_326, %c0_327, %c0_328] : memref<1x8x8x256xf32, #tpu.memory_space<vmem>>, vector<1x1x8x256xf32>
    %508 = vector.shape_cast %507 : vector<1x1x8x256xf32> to vector<8x256xf32>
    %509 = vector.broadcast %506 : vector<1x256xf32> to vector<8x256xf32>
    %510 = arith.mulf %509, %508 : vector<8x256xf32>
    %511 = arith.addf %505, %510 : vector<8x256xf32>
    %512 = vector.extract_strided_slice %476 {offsets = [6, 0], sizes = [1, 256], strides = [1, 1]} : vector<8x256xf32> to vector<1x256xf32>
    %c0_329 = arith.constant 0 : index
    %c6_330 = arith.constant 6 : index
    %c0_331 = arith.constant 0 : index
    %c0_332 = arith.constant 0 : index
    %513 = vector.load %arg5[%c0_329, %c6_330, %c0_331, %c0_332] : memref<1x8x8x256xf32, #tpu.memory_space<vmem>>, vector<1x1x8x256xf32>
    %514 = vector.shape_cast %513 : vector<1x1x8x256xf32> to vector<8x256xf32>
    %515 = vector.broadcast %512 : vector<1x256xf32> to vector<8x256xf32>
    %516 = arith.mulf %515, %514 : vector<8x256xf32>
    %517 = arith.addf %511, %516 : vector<8x256xf32>
    %518 = vector.extract_strided_slice %476 {offsets = [7, 0], sizes = [1, 256], strides = [1, 1]} : vector<8x256xf32> to vector<1x256xf32>
    %c0_333 = arith.constant 0 : index
    %c7_334 = arith.constant 7 : index
    %c0_335 = arith.constant 0 : index
    %c0_336 = arith.constant 0 : index
    %519 = vector.load %arg5[%c0_333, %c7_334, %c0_335, %c0_336] : memref<1x8x8x256xf32, #tpu.memory_space<vmem>>, vector<1x1x8x256xf32>
    %520 = vector.shape_cast %519 : vector<1x1x8x256xf32> to vector<8x256xf32>
    %521 = vector.broadcast %518 : vector<1x256xf32> to vector<8x256xf32>
    %522 = arith.mulf %521, %520 : vector<8x256xf32>
    %523 = arith.addf %517, %522 : vector<8x256xf32>
    %c48 = arith.constant 48 : index
    %c0_337 = arith.constant 0 : index
    %524 = vector.load %arg7[%c48, %c0_337] : memref<120x256xf32, #tpu.memory_space<vmem>>, vector<8x256xf32>
    tpu.vector_store %arg7[%c48, %c0_337], %523 {strides = array<i32>} : memref<120x256xf32, #tpu.memory_space<vmem>>, vector<8x256xf32>,
    %c0_338 = arith.constant 0 : index
    %c0_339 = arith.constant 0 : index
    %c0_340 = arith.constant 0 : index
    %c0_341 = arith.constant 0 : index
    %525 = vector.load %arg4[%c0_338, %c0_339, %c0_340, %c0_341] : memref<1x3x8x256xf32, #tpu.memory_space<vmem>>, vector<1x1x8x256xf32>
    %526 = vector.shape_cast %525 : vector<1x1x8x256xf32> to vector<8x256xf32>
    %c21 = arith.constant 21 : index
    %527 = memref.load %arg2[%c21] : memref<45xf32, #tpu.memory_space<smem>>
    %528 = vector.broadcast %527 : f32 to vector<8x256xf32>
    %529 = arith.subf %526, %528 : vector<8x256xf32>
    %530 = arith.mulf %529, %529 : vector<8x256xf32>
    %c0_342 = arith.constant 0 : index
    %c1_343 = arith.constant 1 : index
    %c0_344 = arith.constant 0 : index
    %c0_345 = arith.constant 0 : index
    %531 = vector.load %arg4[%c0_342, %c1_343, %c0_344, %c0_345] : memref<1x3x8x256xf32, #tpu.memory_space<vmem>>, vector<1x1x8x256xf32>
    %532 = vector.shape_cast %531 : vector<1x1x8x256xf32> to vector<8x256xf32>
    %c22 = arith.constant 22 : index
    %533 = memref.load %arg2[%c22] : memref<45xf32, #tpu.memory_space<smem>>
    %534 = vector.broadcast %533 : f32 to vector<8x256xf32>
    %535 = arith.subf %532, %534 : vector<8x256xf32>
    %536 = arith.mulf %535, %535 : vector<8x256xf32>
    %537 = arith.addf %530, %536 : vector<8x256xf32>
    %c0_346 = arith.constant 0 : index
    %c2_347 = arith.constant 2 : index
    %c0_348 = arith.constant 0 : index
    %c0_349 = arith.constant 0 : index
    %538 = vector.load %arg4[%c0_346, %c2_347, %c0_348, %c0_349] : memref<1x3x8x256xf32, #tpu.memory_space<vmem>>, vector<1x1x8x256xf32>
    %539 = vector.shape_cast %538 : vector<1x1x8x256xf32> to vector<8x256xf32>
    %c23 = arith.constant 23 : index
    %540 = memref.load %arg2[%c23] : memref<45xf32, #tpu.memory_space<smem>>
    %541 = vector.broadcast %540 : f32 to vector<8x256xf32>
    %542 = arith.subf %539, %541 : vector<8x256xf32>
    %543 = arith.mulf %542, %542 : vector<8x256xf32>
    %544 = arith.addf %537, %543 : vector<8x256xf32>
    %545 = math.sqrt %544 : vector<8x256xf32>
    %cst_350 = arith.constant 1.66666663 : f32
    %546 = vector.broadcast %cst_350 : f32 to vector<8x256xf32>
    %547 = arith.mulf %545, %546 : vector<8x256xf32>
    %cst_351 = arith.constant 1.000000e+00 : f32
    %548 = vector.broadcast %cst_351 : f32 to vector<8x256xf32>
    %549 = arith.subf %548, %547 : vector<8x256xf32>
    %cst_352 = arith.constant 0.000000e+00 : f32
    %550 = vector.broadcast %cst_352 : f32 to vector<8x256xf32>
    %551 = arith.maximumf %549, %550 : vector<8x256xf32>
    %552 = vector.extract_strided_slice %551 {offsets = [0, 0], sizes = [1, 256], strides = [1, 1]} : vector<8x256xf32> to vector<1x256xf32>
    %c0_353 = arith.constant 0 : index
    %c0_354 = arith.constant 0 : index
    %c0_355 = arith.constant 0 : index
    %c0_356 = arith.constant 0 : index
    %553 = vector.load %arg5[%c0_353, %c0_354, %c0_355, %c0_356] : memref<1x8x8x256xf32, #tpu.memory_space<vmem>>, vector<1x1x8x256xf32>
    %554 = vector.shape_cast %553 : vector<1x1x8x256xf32> to vector<8x256xf32>
    %555 = vector.broadcast %552 : vector<1x256xf32> to vector<8x256xf32>
    %556 = arith.mulf %555, %554 : vector<8x256xf32>
    %557 = vector.extract_strided_slice %551 {offsets = [1, 0], sizes = [1, 256], strides = [1, 1]} : vector<8x256xf32> to vector<1x256xf32>
    %c0_357 = arith.constant 0 : index
    %c1_358 = arith.constant 1 : index
    %c0_359 = arith.constant 0 : index
    %c0_360 = arith.constant 0 : index
    %558 = vector.load %arg5[%c0_357, %c1_358, %c0_359, %c0_360] : memref<1x8x8x256xf32, #tpu.memory_space<vmem>>, vector<1x1x8x256xf32>
    %559 = vector.shape_cast %558 : vector<1x1x8x256xf32> to vector<8x256xf32>
    %560 = vector.broadcast %557 : vector<1x256xf32> to vector<8x256xf32>
    %561 = arith.mulf %560, %559 : vector<8x256xf32>
    %562 = arith.addf %556, %561 : vector<8x256xf32>
    %563 = vector.extract_strided_slice %551 {offsets = [2, 0], sizes = [1, 256], strides = [1, 1]} : vector<8x256xf32> to vector<1x256xf32>
    %c0_361 = arith.constant 0 : index
    %c2_362 = arith.constant 2 : index
    %c0_363 = arith.constant 0 : index
    %c0_364 = arith.constant 0 : index
    %564 = vector.load %arg5[%c0_361, %c2_362, %c0_363, %c0_364] : memref<1x8x8x256xf32, #tpu.memory_space<vmem>>, vector<1x1x8x256xf32>
    %565 = vector.shape_cast %564 : vector<1x1x8x256xf32> to vector<8x256xf32>
    %566 = vector.broadcast %563 : vector<1x256xf32> to vector<8x256xf32>
    %567 = arith.mulf %566, %565 : vector<8x256xf32>
    %568 = arith.addf %562, %567 : vector<8x256xf32>
    %569 = vector.extract_strided_slice %551 {offsets = [3, 0], sizes = [1, 256], strides = [1, 1]} : vector<8x256xf32> to vector<1x256xf32>
    %c0_365 = arith.constant 0 : index
    %c3_366 = arith.constant 3 : index
    %c0_367 = arith.constant 0 : index
    %c0_368 = arith.constant 0 : index
    %570 = vector.load %arg5[%c0_365, %c3_366, %c0_367, %c0_368] : memref<1x8x8x256xf32, #tpu.memory_space<vmem>>, vector<1x1x8x256xf32>
    %571 = vector.shape_cast %570 : vector<1x1x8x256xf32> to vector<8x256xf32>
    %572 = vector.broadcast %569 : vector<1x256xf32> to vector<8x256xf32>
    %573 = arith.mulf %572, %571 : vector<8x256xf32>
    %574 = arith.addf %568, %573 : vector<8x256xf32>
    %575 = vector.extract_strided_slice %551 {offsets = [4, 0], sizes = [1, 256], strides = [1, 1]} : vector<8x256xf32> to vector<1x256xf32>
    %c0_369 = arith.constant 0 : index
    %c4_370 = arith.constant 4 : index
    %c0_371 = arith.constant 0 : index
    %c0_372 = arith.constant 0 : index
    %576 = vector.load %arg5[%c0_369, %c4_370, %c0_371, %c0_372] : memref<1x8x8x256xf32, #tpu.memory_space<vmem>>, vector<1x1x8x256xf32>
    %577 = vector.shape_cast %576 : vector<1x1x8x256xf32> to vector<8x256xf32>
    %578 = vector.broadcast %575 : vector<1x256xf32> to vector<8x256xf32>
    %579 = arith.mulf %578, %577 : vector<8x256xf32>
    %580 = arith.addf %574, %579 : vector<8x256xf32>
    %581 = vector.extract_strided_slice %551 {offsets = [5, 0], sizes = [1, 256], strides = [1, 1]} : vector<8x256xf32> to vector<1x256xf32>
    %c0_373 = arith.constant 0 : index
    %c5_374 = arith.constant 5 : index
    %c0_375 = arith.constant 0 : index
    %c0_376 = arith.constant 0 : index
    %582 = vector.load %arg5[%c0_373, %c5_374, %c0_375, %c0_376] : memref<1x8x8x256xf32, #tpu.memory_space<vmem>>, vector<1x1x8x256xf32>
    %583 = vector.shape_cast %582 : vector<1x1x8x256xf32> to vector<8x256xf32>
    %584 = vector.broadcast %581 : vector<1x256xf32> to vector<8x256xf32>
    %585 = arith.mulf %584, %583 : vector<8x256xf32>
    %586 = arith.addf %580, %585 : vector<8x256xf32>
    %587 = vector.extract_strided_slice %551 {offsets = [6, 0], sizes = [1, 256], strides = [1, 1]} : vector<8x256xf32> to vector<1x256xf32>
    %c0_377 = arith.constant 0 : index
    %c6_378 = arith.constant 6 : index
    %c0_379 = arith.constant 0 : index
    %c0_380 = arith.constant 0 : index
    %588 = vector.load %arg5[%c0_377, %c6_378, %c0_379, %c0_380] : memref<1x8x8x256xf32, #tpu.memory_space<vmem>>, vector<1x1x8x256xf32>
    %589 = vector.shape_cast %588 : vector<1x1x8x256xf32> to vector<8x256xf32>
    %590 = vector.broadcast %587 : vector<1x256xf32> to vector<8x256xf32>
    %591 = arith.mulf %590, %589 : vector<8x256xf32>
    %592 = arith.addf %586, %591 : vector<8x256xf32>
    %593 = vector.extract_strided_slice %551 {offsets = [7, 0], sizes = [1, 256], strides = [1, 1]} : vector<8x256xf32> to vector<1x256xf32>
    %c0_381 = arith.constant 0 : index
    %c7_382 = arith.constant 7 : index
    %c0_383 = arith.constant 0 : index
    %c0_384 = arith.constant 0 : index
    %594 = vector.load %arg5[%c0_381, %c7_382, %c0_383, %c0_384] : memref<1x8x8x256xf32, #tpu.memory_space<vmem>>, vector<1x1x8x256xf32>
    %595 = vector.shape_cast %594 : vector<1x1x8x256xf32> to vector<8x256xf32>
    %596 = vector.broadcast %593 : vector<1x256xf32> to vector<8x256xf32>
    %597 = arith.mulf %596, %595 : vector<8x256xf32>
    %598 = arith.addf %592, %597 : vector<8x256xf32>
    %c56 = arith.constant 56 : index
    %c0_385 = arith.constant 0 : index
    %599 = vector.load %arg7[%c56, %c0_385] : memref<120x256xf32, #tpu.memory_space<vmem>>, vector<8x256xf32>
    tpu.vector_store %arg7[%c56, %c0_385], %598 {strides = array<i32>} : memref<120x256xf32, #tpu.memory_space<vmem>>, vector<8x256xf32>,
    %c0_386 = arith.constant 0 : index
    %c0_387 = arith.constant 0 : index
    %c0_388 = arith.constant 0 : index
    %c0_389 = arith.constant 0 : index
    %600 = vector.load %arg4[%c0_386, %c0_387, %c0_388, %c0_389] : memref<1x3x8x256xf32, #tpu.memory_space<vmem>>, vector<1x1x8x256xf32>
    %601 = vector.shape_cast %600 : vector<1x1x8x256xf32> to vector<8x256xf32>
    %c24_390 = arith.constant 24 : index
    %602 = memref.load %arg2[%c24_390] : memref<45xf32, #tpu.memory_space<smem>>
    %603 = vector.broadcast %602 : f32 to vector<8x256xf32>
    %604 = arith.subf %601, %603 : vector<8x256xf32>
    %605 = arith.mulf %604, %604 : vector<8x256xf32>
    %c0_391 = arith.constant 0 : index
    %c1_392 = arith.constant 1 : index
    %c0_393 = arith.constant 0 : index
    %c0_394 = arith.constant 0 : index
    %606 = vector.load %arg4[%c0_391, %c1_392, %c0_393, %c0_394] : memref<1x3x8x256xf32, #tpu.memory_space<vmem>>, vector<1x1x8x256xf32>
    %607 = vector.shape_cast %606 : vector<1x1x8x256xf32> to vector<8x256xf32>
    %c25 = arith.constant 25 : index
    %608 = memref.load %arg2[%c25] : memref<45xf32, #tpu.memory_space<smem>>
    %609 = vector.broadcast %608 : f32 to vector<8x256xf32>
    %610 = arith.subf %607, %609 : vector<8x256xf32>
    %611 = arith.mulf %610, %610 : vector<8x256xf32>
    %612 = arith.addf %605, %611 : vector<8x256xf32>
    %c0_395 = arith.constant 0 : index
    %c2_396 = arith.constant 2 : index
    %c0_397 = arith.constant 0 : index
    %c0_398 = arith.constant 0 : index
    %613 = vector.load %arg4[%c0_395, %c2_396, %c0_397, %c0_398] : memref<1x3x8x256xf32, #tpu.memory_space<vmem>>, vector<1x1x8x256xf32>
    %614 = vector.shape_cast %613 : vector<1x1x8x256xf32> to vector<8x256xf32>
    %c26 = arith.constant 26 : index
    %615 = memref.load %arg2[%c26] : memref<45xf32, #tpu.memory_space<smem>>
    %616 = vector.broadcast %615 : f32 to vector<8x256xf32>
    %617 = arith.subf %614, %616 : vector<8x256xf32>
    %618 = arith.mulf %617, %617 : vector<8x256xf32>
    %619 = arith.addf %612, %618 : vector<8x256xf32>
    %620 = math.sqrt %619 : vector<8x256xf32>
    %cst_399 = arith.constant 1.66666663 : f32
    %621 = vector.broadcast %cst_399 : f32 to vector<8x256xf32>
    %622 = arith.mulf %620, %621 : vector<8x256xf32>
    %cst_400 = arith.constant 1.000000e+00 : f32
    %623 = vector.broadcast %cst_400 : f32 to vector<8x256xf32>
    %624 = arith.subf %623, %622 : vector<8x256xf32>
    %cst_401 = arith.constant 0.000000e+00 : f32
    %625 = vector.broadcast %cst_401 : f32 to vector<8x256xf32>
    %626 = arith.maximumf %624, %625 : vector<8x256xf32>
    %627 = vector.extract_strided_slice %626 {offsets = [0, 0], sizes = [1, 256], strides = [1, 1]} : vector<8x256xf32> to vector<1x256xf32>
    %c0_402 = arith.constant 0 : index
    %c0_403 = arith.constant 0 : index
    %c0_404 = arith.constant 0 : index
    %c0_405 = arith.constant 0 : index
    %628 = vector.load %arg5[%c0_402, %c0_403, %c0_404, %c0_405] : memref<1x8x8x256xf32, #tpu.memory_space<vmem>>, vector<1x1x8x256xf32>
    %629 = vector.shape_cast %628 : vector<1x1x8x256xf32> to vector<8x256xf32>
    %630 = vector.broadcast %627 : vector<1x256xf32> to vector<8x256xf32>
    %631 = arith.mulf %630, %629 : vector<8x256xf32>
    %632 = vector.extract_strided_slice %626 {offsets = [1, 0], sizes = [1, 256], strides = [1, 1]} : vector<8x256xf32> to vector<1x256xf32>
    %c0_406 = arith.constant 0 : index
    %c1_407 = arith.constant 1 : index
    %c0_408 = arith.constant 0 : index
    %c0_409 = arith.constant 0 : index
    %633 = vector.load %arg5[%c0_406, %c1_407, %c0_408, %c0_409] : memref<1x8x8x256xf32, #tpu.memory_space<vmem>>, vector<1x1x8x256xf32>
    %634 = vector.shape_cast %633 : vector<1x1x8x256xf32> to vector<8x256xf32>
    %635 = vector.broadcast %632 : vector<1x256xf32> to vector<8x256xf32>
    %636 = arith.mulf %635, %634 : vector<8x256xf32>
    %637 = arith.addf %631, %636 : vector<8x256xf32>
    %638 = vector.extract_strided_slice %626 {offsets = [2, 0], sizes = [1, 256], strides = [1, 1]} : vector<8x256xf32> to vector<1x256xf32>
    %c0_410 = arith.constant 0 : index
    %c2_411 = arith.constant 2 : index
    %c0_412 = arith.constant 0 : index
    %c0_413 = arith.constant 0 : index
    %639 = vector.load %arg5[%c0_410, %c2_411, %c0_412, %c0_413] : memref<1x8x8x256xf32, #tpu.memory_space<vmem>>, vector<1x1x8x256xf32>
    %640 = vector.shape_cast %639 : vector<1x1x8x256xf32> to vector<8x256xf32>
    %641 = vector.broadcast %638 : vector<1x256xf32> to vector<8x256xf32>
    %642 = arith.mulf %641, %640 : vector<8x256xf32>
    %643 = arith.addf %637, %642 : vector<8x256xf32>
    %644 = vector.extract_strided_slice %626 {offsets = [3, 0], sizes = [1, 256], strides = [1, 1]} : vector<8x256xf32> to vector<1x256xf32>
    %c0_414 = arith.constant 0 : index
    %c3_415 = arith.constant 3 : index
    %c0_416 = arith.constant 0 : index
    %c0_417 = arith.constant 0 : index
    %645 = vector.load %arg5[%c0_414, %c3_415, %c0_416, %c0_417] : memref<1x8x8x256xf32, #tpu.memory_space<vmem>>, vector<1x1x8x256xf32>
    %646 = vector.shape_cast %645 : vector<1x1x8x256xf32> to vector<8x256xf32>
    %647 = vector.broadcast %644 : vector<1x256xf32> to vector<8x256xf32>
    %648 = arith.mulf %647, %646 : vector<8x256xf32>
    %649 = arith.addf %643, %648 : vector<8x256xf32>
    %650 = vector.extract_strided_slice %626 {offsets = [4, 0], sizes = [1, 256], strides = [1, 1]} : vector<8x256xf32> to vector<1x256xf32>
    %c0_418 = arith.constant 0 : index
    %c4_419 = arith.constant 4 : index
    %c0_420 = arith.constant 0 : index
    %c0_421 = arith.constant 0 : index
    %651 = vector.load %arg5[%c0_418, %c4_419, %c0_420, %c0_421] : memref<1x8x8x256xf32, #tpu.memory_space<vmem>>, vector<1x1x8x256xf32>
    %652 = vector.shape_cast %651 : vector<1x1x8x256xf32> to vector<8x256xf32>
    %653 = vector.broadcast %650 : vector<1x256xf32> to vector<8x256xf32>
    %654 = arith.mulf %653, %652 : vector<8x256xf32>
    %655 = arith.addf %649, %654 : vector<8x256xf32>
    %656 = vector.extract_strided_slice %626 {offsets = [5, 0], sizes = [1, 256], strides = [1, 1]} : vector<8x256xf32> to vector<1x256xf32>
    %c0_422 = arith.constant 0 : index
    %c5_423 = arith.constant 5 : index
    %c0_424 = arith.constant 0 : index
    %c0_425 = arith.constant 0 : index
    %657 = vector.load %arg5[%c0_422, %c5_423, %c0_424, %c0_425] : memref<1x8x8x256xf32, #tpu.memory_space<vmem>>, vector<1x1x8x256xf32>
    %658 = vector.shape_cast %657 : vector<1x1x8x256xf32> to vector<8x256xf32>
    %659 = vector.broadcast %656 : vector<1x256xf32> to vector<8x256xf32>
    %660 = arith.mulf %659, %658 : vector<8x256xf32>
    %661 = arith.addf %655, %660 : vector<8x256xf32>
    %662 = vector.extract_strided_slice %626 {offsets = [6, 0], sizes = [1, 256], strides = [1, 1]} : vector<8x256xf32> to vector<1x256xf32>
    %c0_426 = arith.constant 0 : index
    %c6_427 = arith.constant 6 : index
    %c0_428 = arith.constant 0 : index
    %c0_429 = arith.constant 0 : index
    %663 = vector.load %arg5[%c0_426, %c6_427, %c0_428, %c0_429] : memref<1x8x8x256xf32, #tpu.memory_space<vmem>>, vector<1x1x8x256xf32>
    %664 = vector.shape_cast %663 : vector<1x1x8x256xf32> to vector<8x256xf32>
    %665 = vector.broadcast %662 : vector<1x256xf32> to vector<8x256xf32>
    %666 = arith.mulf %665, %664 : vector<8x256xf32>
    %667 = arith.addf %661, %666 : vector<8x256xf32>
    %668 = vector.extract_strided_slice %626 {offsets = [7, 0], sizes = [1, 256], strides = [1, 1]} : vector<8x256xf32> to vector<1x256xf32>
    %c0_430 = arith.constant 0 : index
    %c7_431 = arith.constant 7 : index
    %c0_432 = arith.constant 0 : index
    %c0_433 = arith.constant 0 : index
    %669 = vector.load %arg5[%c0_430, %c7_431, %c0_432, %c0_433] : memref<1x8x8x256xf32, #tpu.memory_space<vmem>>, vector<1x1x8x256xf32>
    %670 = vector.shape_cast %669 : vector<1x1x8x256xf32> to vector<8x256xf32>
    %671 = vector.broadcast %668 : vector<1x256xf32> to vector<8x256xf32>
    %672 = arith.mulf %671, %670 : vector<8x256xf32>
    %673 = arith.addf %667, %672 : vector<8x256xf32>
    %c64 = arith.constant 64 : index
    %c0_434 = arith.constant 0 : index
    %674 = vector.load %arg7[%c64, %c0_434] : memref<120x256xf32, #tpu.memory_space<vmem>>, vector<8x256xf32>
    tpu.vector_store %arg7[%c64, %c0_434], %673 {strides = array<i32>} : memref<120x256xf32, #tpu.memory_space<vmem>>, vector<8x256xf32>,
    %c0_435 = arith.constant 0 : index
    %c0_436 = arith.constant 0 : index
    %c0_437 = arith.constant 0 : index
    %c0_438 = arith.constant 0 : index
    %675 = vector.load %arg4[%c0_435, %c0_436, %c0_437, %c0_438] : memref<1x3x8x256xf32, #tpu.memory_space<vmem>>, vector<1x1x8x256xf32>
    %676 = vector.shape_cast %675 : vector<1x1x8x256xf32> to vector<8x256xf32>
    %c27 = arith.constant 27 : index
    %677 = memref.load %arg2[%c27] : memref<45xf32, #tpu.memory_space<smem>>
    %678 = vector.broadcast %677 : f32 to vector<8x256xf32>
    %679 = arith.subf %676, %678 : vector<8x256xf32>
    %680 = arith.mulf %679, %679 : vector<8x256xf32>
    %c0_439 = arith.constant 0 : index
    %c1_440 = arith.constant 1 : index
    %c0_441 = arith.constant 0 : index
    %c0_442 = arith.constant 0 : index
    %681 = vector.load %arg4[%c0_439, %c1_440, %c0_441, %c0_442] : memref<1x3x8x256xf32, #tpu.memory_space<vmem>>, vector<1x1x8x256xf32>
    %682 = vector.shape_cast %681 : vector<1x1x8x256xf32> to vector<8x256xf32>
    %c28 = arith.constant 28 : index
    %683 = memref.load %arg2[%c28] : memref<45xf32, #tpu.memory_space<smem>>
    %684 = vector.broadcast %683 : f32 to vector<8x256xf32>
    %685 = arith.subf %682, %684 : vector<8x256xf32>
    %686 = arith.mulf %685, %685 : vector<8x256xf32>
    %687 = arith.addf %680, %686 : vector<8x256xf32>
    %c0_443 = arith.constant 0 : index
    %c2_444 = arith.constant 2 : index
    %c0_445 = arith.constant 0 : index
    %c0_446 = arith.constant 0 : index
    %688 = vector.load %arg4[%c0_443, %c2_444, %c0_445, %c0_446] : memref<1x3x8x256xf32, #tpu.memory_space<vmem>>, vector<1x1x8x256xf32>
    %689 = vector.shape_cast %688 : vector<1x1x8x256xf32> to vector<8x256xf32>
    %c29 = arith.constant 29 : index
    %690 = memref.load %arg2[%c29] : memref<45xf32, #tpu.memory_space<smem>>
    %691 = vector.broadcast %690 : f32 to vector<8x256xf32>
    %692 = arith.subf %689, %691 : vector<8x256xf32>
    %693 = arith.mulf %692, %692 : vector<8x256xf32>
    %694 = arith.addf %687, %693 : vector<8x256xf32>
    %695 = math.sqrt %694 : vector<8x256xf32>
    %cst_447 = arith.constant 1.66666663 : f32
    %696 = vector.broadcast %cst_447 : f32 to vector<8x256xf32>
    %697 = arith.mulf %695, %696 : vector<8x256xf32>
    %cst_448 = arith.constant 1.000000e+00 : f32
    %698 = vector.broadcast %cst_448 : f32 to vector<8x256xf32>
    %699 = arith.subf %698, %697 : vector<8x256xf32>
    %cst_449 = arith.constant 0.000000e+00 : f32
    %700 = vector.broadcast %cst_449 : f32 to vector<8x256xf32>
    %701 = arith.maximumf %699, %700 : vector<8x256xf32>
    %702 = vector.extract_strided_slice %701 {offsets = [0, 0], sizes = [1, 256], strides = [1, 1]} : vector<8x256xf32> to vector<1x256xf32>
    %c0_450 = arith.constant 0 : index
    %c0_451 = arith.constant 0 : index
    %c0_452 = arith.constant 0 : index
    %c0_453 = arith.constant 0 : index
    %703 = vector.load %arg5[%c0_450, %c0_451, %c0_452, %c0_453] : memref<1x8x8x256xf32, #tpu.memory_space<vmem>>, vector<1x1x8x256xf32>
    %704 = vector.shape_cast %703 : vector<1x1x8x256xf32> to vector<8x256xf32>
    %705 = vector.broadcast %702 : vector<1x256xf32> to vector<8x256xf32>
    %706 = arith.mulf %705, %704 : vector<8x256xf32>
    %707 = vector.extract_strided_slice %701 {offsets = [1, 0], sizes = [1, 256], strides = [1, 1]} : vector<8x256xf32> to vector<1x256xf32>
    %c0_454 = arith.constant 0 : index
    %c1_455 = arith.constant 1 : index
    %c0_456 = arith.constant 0 : index
    %c0_457 = arith.constant 0 : index
    %708 = vector.load %arg5[%c0_454, %c1_455, %c0_456, %c0_457] : memref<1x8x8x256xf32, #tpu.memory_space<vmem>>, vector<1x1x8x256xf32>
    %709 = vector.shape_cast %708 : vector<1x1x8x256xf32> to vector<8x256xf32>
    %710 = vector.broadcast %707 : vector<1x256xf32> to vector<8x256xf32>
    %711 = arith.mulf %710, %709 : vector<8x256xf32>
    %712 = arith.addf %706, %711 : vector<8x256xf32>
    %713 = vector.extract_strided_slice %701 {offsets = [2, 0], sizes = [1, 256], strides = [1, 1]} : vector<8x256xf32> to vector<1x256xf32>
    %c0_458 = arith.constant 0 : index
    %c2_459 = arith.constant 2 : index
    %c0_460 = arith.constant 0 : index
    %c0_461 = arith.constant 0 : index
    %714 = vector.load %arg5[%c0_458, %c2_459, %c0_460, %c0_461] : memref<1x8x8x256xf32, #tpu.memory_space<vmem>>, vector<1x1x8x256xf32>
    %715 = vector.shape_cast %714 : vector<1x1x8x256xf32> to vector<8x256xf32>
    %716 = vector.broadcast %713 : vector<1x256xf32> to vector<8x256xf32>
    %717 = arith.mulf %716, %715 : vector<8x256xf32>
    %718 = arith.addf %712, %717 : vector<8x256xf32>
    %719 = vector.extract_strided_slice %701 {offsets = [3, 0], sizes = [1, 256], strides = [1, 1]} : vector<8x256xf32> to vector<1x256xf32>
    %c0_462 = arith.constant 0 : index
    %c3_463 = arith.constant 3 : index
    %c0_464 = arith.constant 0 : index
    %c0_465 = arith.constant 0 : index
    %720 = vector.load %arg5[%c0_462, %c3_463, %c0_464, %c0_465] : memref<1x8x8x256xf32, #tpu.memory_space<vmem>>, vector<1x1x8x256xf32>
    %721 = vector.shape_cast %720 : vector<1x1x8x256xf32> to vector<8x256xf32>
    %722 = vector.broadcast %719 : vector<1x256xf32> to vector<8x256xf32>
    %723 = arith.mulf %722, %721 : vector<8x256xf32>
    %724 = arith.addf %718, %723 : vector<8x256xf32>
    %725 = vector.extract_strided_slice %701 {offsets = [4, 0], sizes = [1, 256], strides = [1, 1]} : vector<8x256xf32> to vector<1x256xf32>
    %c0_466 = arith.constant 0 : index
    %c4_467 = arith.constant 4 : index
    %c0_468 = arith.constant 0 : index
    %c0_469 = arith.constant 0 : index
    %726 = vector.load %arg5[%c0_466, %c4_467, %c0_468, %c0_469] : memref<1x8x8x256xf32, #tpu.memory_space<vmem>>, vector<1x1x8x256xf32>
    %727 = vector.shape_cast %726 : vector<1x1x8x256xf32> to vector<8x256xf32>
    %728 = vector.broadcast %725 : vector<1x256xf32> to vector<8x256xf32>
    %729 = arith.mulf %728, %727 : vector<8x256xf32>
    %730 = arith.addf %724, %729 : vector<8x256xf32>
    %731 = vector.extract_strided_slice %701 {offsets = [5, 0], sizes = [1, 256], strides = [1, 1]} : vector<8x256xf32> to vector<1x256xf32>
    %c0_470 = arith.constant 0 : index
    %c5_471 = arith.constant 5 : index
    %c0_472 = arith.constant 0 : index
    %c0_473 = arith.constant 0 : index
    %732 = vector.load %arg5[%c0_470, %c5_471, %c0_472, %c0_473] : memref<1x8x8x256xf32, #tpu.memory_space<vmem>>, vector<1x1x8x256xf32>
    %733 = vector.shape_cast %732 : vector<1x1x8x256xf32> to vector<8x256xf32>
    %734 = vector.broadcast %731 : vector<1x256xf32> to vector<8x256xf32>
    %735 = arith.mulf %734, %733 : vector<8x256xf32>
    %736 = arith.addf %730, %735 : vector<8x256xf32>
    %737 = vector.extract_strided_slice %701 {offsets = [6, 0], sizes = [1, 256], strides = [1, 1]} : vector<8x256xf32> to vector<1x256xf32>
    %c0_474 = arith.constant 0 : index
    %c6_475 = arith.constant 6 : index
    %c0_476 = arith.constant 0 : index
    %c0_477 = arith.constant 0 : index
    %738 = vector.load %arg5[%c0_474, %c6_475, %c0_476, %c0_477] : memref<1x8x8x256xf32, #tpu.memory_space<vmem>>, vector<1x1x8x256xf32>
    %739 = vector.shape_cast %738 : vector<1x1x8x256xf32> to vector<8x256xf32>
    %740 = vector.broadcast %737 : vector<1x256xf32> to vector<8x256xf32>
    %741 = arith.mulf %740, %739 : vector<8x256xf32>
    %742 = arith.addf %736, %741 : vector<8x256xf32>
    %743 = vector.extract_strided_slice %701 {offsets = [7, 0], sizes = [1, 256], strides = [1, 1]} : vector<8x256xf32> to vector<1x256xf32>
    %c0_478 = arith.constant 0 : index
    %c7_479 = arith.constant 7 : index
    %c0_480 = arith.constant 0 : index
    %c0_481 = arith.constant 0 : index
    %744 = vector.load %arg5[%c0_478, %c7_479, %c0_480, %c0_481] : memref<1x8x8x256xf32, #tpu.memory_space<vmem>>, vector<1x1x8x256xf32>
    %745 = vector.shape_cast %744 : vector<1x1x8x256xf32> to vector<8x256xf32>
    %746 = vector.broadcast %743 : vector<1x256xf32> to vector<8x256xf32>
    %747 = arith.mulf %746, %745 : vector<8x256xf32>
    %748 = arith.addf %742, %747 : vector<8x256xf32>
    %c72 = arith.constant 72 : index
    %c0_482 = arith.constant 0 : index
    %749 = vector.load %arg7[%c72, %c0_482] : memref<120x256xf32, #tpu.memory_space<vmem>>, vector<8x256xf32>
    tpu.vector_store %arg7[%c72, %c0_482], %748 {strides = array<i32>} : memref<120x256xf32, #tpu.memory_space<vmem>>, vector<8x256xf32>,
    %c0_483 = arith.constant 0 : index
    %c0_484 = arith.constant 0 : index
    %c0_485 = arith.constant 0 : index
    %c0_486 = arith.constant 0 : index
    %750 = vector.load %arg4[%c0_483, %c0_484, %c0_485, %c0_486] : memref<1x3x8x256xf32, #tpu.memory_space<vmem>>, vector<1x1x8x256xf32>
    %751 = vector.shape_cast %750 : vector<1x1x8x256xf32> to vector<8x256xf32>
    %c30 = arith.constant 30 : index
    %752 = memref.load %arg2[%c30] : memref<45xf32, #tpu.memory_space<smem>>
    %753 = vector.broadcast %752 : f32 to vector<8x256xf32>
    %754 = arith.subf %751, %753 : vector<8x256xf32>
    %755 = arith.mulf %754, %754 : vector<8x256xf32>
    %c0_487 = arith.constant 0 : index
    %c1_488 = arith.constant 1 : index
    %c0_489 = arith.constant 0 : index
    %c0_490 = arith.constant 0 : index
    %756 = vector.load %arg4[%c0_487, %c1_488, %c0_489, %c0_490] : memref<1x3x8x256xf32, #tpu.memory_space<vmem>>, vector<1x1x8x256xf32>
    %757 = vector.shape_cast %756 : vector<1x1x8x256xf32> to vector<8x256xf32>
    %c31 = arith.constant 31 : index
    %758 = memref.load %arg2[%c31] : memref<45xf32, #tpu.memory_space<smem>>
    %759 = vector.broadcast %758 : f32 to vector<8x256xf32>
    %760 = arith.subf %757, %759 : vector<8x256xf32>
    %761 = arith.mulf %760, %760 : vector<8x256xf32>
    %762 = arith.addf %755, %761 : vector<8x256xf32>
    %c0_491 = arith.constant 0 : index
    %c2_492 = arith.constant 2 : index
    %c0_493 = arith.constant 0 : index
    %c0_494 = arith.constant 0 : index
    %763 = vector.load %arg4[%c0_491, %c2_492, %c0_493, %c0_494] : memref<1x3x8x256xf32, #tpu.memory_space<vmem>>, vector<1x1x8x256xf32>
    %764 = vector.shape_cast %763 : vector<1x1x8x256xf32> to vector<8x256xf32>
    %c32_495 = arith.constant 32 : index
    %765 = memref.load %arg2[%c32_495] : memref<45xf32, #tpu.memory_space<smem>>
    %766 = vector.broadcast %765 : f32 to vector<8x256xf32>
    %767 = arith.subf %764, %766 : vector<8x256xf32>
    %768 = arith.mulf %767, %767 : vector<8x256xf32>
    %769 = arith.addf %762, %768 : vector<8x256xf32>
    %770 = math.sqrt %769 : vector<8x256xf32>
    %cst_496 = arith.constant 1.66666663 : f32
    %771 = vector.broadcast %cst_496 : f32 to vector<8x256xf32>
    %772 = arith.mulf %770, %771 : vector<8x256xf32>
    %cst_497 = arith.constant 1.000000e+00 : f32
    %773 = vector.broadcast %cst_497 : f32 to vector<8x256xf32>
    %774 = arith.subf %773, %772 : vector<8x256xf32>
    %cst_498 = arith.constant 0.000000e+00 : f32
    %775 = vector.broadcast %cst_498 : f32 to vector<8x256xf32>
    %776 = arith.maximumf %774, %775 : vector<8x256xf32>
    %777 = vector.extract_strided_slice %776 {offsets = [0, 0], sizes = [1, 256], strides = [1, 1]} : vector<8x256xf32> to vector<1x256xf32>
    %c0_499 = arith.constant 0 : index
    %c0_500 = arith.constant 0 : index
    %c0_501 = arith.constant 0 : index
    %c0_502 = arith.constant 0 : index
    %778 = vector.load %arg5[%c0_499, %c0_500, %c0_501, %c0_502] : memref<1x8x8x256xf32, #tpu.memory_space<vmem>>, vector<1x1x8x256xf32>
    %779 = vector.shape_cast %778 : vector<1x1x8x256xf32> to vector<8x256xf32>
    %780 = vector.broadcast %777 : vector<1x256xf32> to vector<8x256xf32>
    %781 = arith.mulf %780, %779 : vector<8x256xf32>
    %782 = vector.extract_strided_slice %776 {offsets = [1, 0], sizes = [1, 256], strides = [1, 1]} : vector<8x256xf32> to vector<1x256xf32>
    %c0_503 = arith.constant 0 : index
    %c1_504 = arith.constant 1 : index
    %c0_505 = arith.constant 0 : index
    %c0_506 = arith.constant 0 : index
    %783 = vector.load %arg5[%c0_503, %c1_504, %c0_505, %c0_506] : memref<1x8x8x256xf32, #tpu.memory_space<vmem>>, vector<1x1x8x256xf32>
    %784 = vector.shape_cast %783 : vector<1x1x8x256xf32> to vector<8x256xf32>
    %785 = vector.broadcast %782 : vector<1x256xf32> to vector<8x256xf32>
    %786 = arith.mulf %785, %784 : vector<8x256xf32>
    %787 = arith.addf %781, %786 : vector<8x256xf32>
    %788 = vector.extract_strided_slice %776 {offsets = [2, 0], sizes = [1, 256], strides = [1, 1]} : vector<8x256xf32> to vector<1x256xf32>
    %c0_507 = arith.constant 0 : index
    %c2_508 = arith.constant 2 : index
    %c0_509 = arith.constant 0 : index
    %c0_510 = arith.constant 0 : index
    %789 = vector.load %arg5[%c0_507, %c2_508, %c0_509, %c0_510] : memref<1x8x8x256xf32, #tpu.memory_space<vmem>>, vector<1x1x8x256xf32>
    %790 = vector.shape_cast %789 : vector<1x1x8x256xf32> to vector<8x256xf32>
    %791 = vector.broadcast %788 : vector<1x256xf32> to vector<8x256xf32>
    %792 = arith.mulf %791, %790 : vector<8x256xf32>
    %793 = arith.addf %787, %792 : vector<8x256xf32>
    %794 = vector.extract_strided_slice %776 {offsets = [3, 0], sizes = [1, 256], strides = [1, 1]} : vector<8x256xf32> to vector<1x256xf32>
    %c0_511 = arith.constant 0 : index
    %c3_512 = arith.constant 3 : index
    %c0_513 = arith.constant 0 : index
    %c0_514 = arith.constant 0 : index
    %795 = vector.load %arg5[%c0_511, %c3_512, %c0_513, %c0_514] : memref<1x8x8x256xf32, #tpu.memory_space<vmem>>, vector<1x1x8x256xf32>
    %796 = vector.shape_cast %795 : vector<1x1x8x256xf32> to vector<8x256xf32>
    %797 = vector.broadcast %794 : vector<1x256xf32> to vector<8x256xf32>
    %798 = arith.mulf %797, %796 : vector<8x256xf32>
    %799 = arith.addf %793, %798 : vector<8x256xf32>
    %800 = vector.extract_strided_slice %776 {offsets = [4, 0], sizes = [1, 256], strides = [1, 1]} : vector<8x256xf32> to vector<1x256xf32>
    %c0_515 = arith.constant 0 : index
    %c4_516 = arith.constant 4 : index
    %c0_517 = arith.constant 0 : index
    %c0_518 = arith.constant 0 : index
    %801 = vector.load %arg5[%c0_515, %c4_516, %c0_517, %c0_518] : memref<1x8x8x256xf32, #tpu.memory_space<vmem>>, vector<1x1x8x256xf32>
    %802 = vector.shape_cast %801 : vector<1x1x8x256xf32> to vector<8x256xf32>
    %803 = vector.broadcast %800 : vector<1x256xf32> to vector<8x256xf32>
    %804 = arith.mulf %803, %802 : vector<8x256xf32>
    %805 = arith.addf %799, %804 : vector<8x256xf32>
    %806 = vector.extract_strided_slice %776 {offsets = [5, 0], sizes = [1, 256], strides = [1, 1]} : vector<8x256xf32> to vector<1x256xf32>
    %c0_519 = arith.constant 0 : index
    %c5_520 = arith.constant 5 : index
    %c0_521 = arith.constant 0 : index
    %c0_522 = arith.constant 0 : index
    %807 = vector.load %arg5[%c0_519, %c5_520, %c0_521, %c0_522] : memref<1x8x8x256xf32, #tpu.memory_space<vmem>>, vector<1x1x8x256xf32>
    %808 = vector.shape_cast %807 : vector<1x1x8x256xf32> to vector<8x256xf32>
    %809 = vector.broadcast %806 : vector<1x256xf32> to vector<8x256xf32>
    %810 = arith.mulf %809, %808 : vector<8x256xf32>
    %811 = arith.addf %805, %810 : vector<8x256xf32>
    %812 = vector.extract_strided_slice %776 {offsets = [6, 0], sizes = [1, 256], strides = [1, 1]} : vector<8x256xf32> to vector<1x256xf32>
    %c0_523 = arith.constant 0 : index
    %c6_524 = arith.constant 6 : index
    %c0_525 = arith.constant 0 : index
    %c0_526 = arith.constant 0 : index
    %813 = vector.load %arg5[%c0_523, %c6_524, %c0_525, %c0_526] : memref<1x8x8x256xf32, #tpu.memory_space<vmem>>, vector<1x1x8x256xf32>
    %814 = vector.shape_cast %813 : vector<1x1x8x256xf32> to vector<8x256xf32>
    %815 = vector.broadcast %812 : vector<1x256xf32> to vector<8x256xf32>
    %816 = arith.mulf %815, %814 : vector<8x256xf32>
    %817 = arith.addf %811, %816 : vector<8x256xf32>
    %818 = vector.extract_strided_slice %776 {offsets = [7, 0], sizes = [1, 256], strides = [1, 1]} : vector<8x256xf32> to vector<1x256xf32>
    %c0_527 = arith.constant 0 : index
    %c7_528 = arith.constant 7 : index
    %c0_529 = arith.constant 0 : index
    %c0_530 = arith.constant 0 : index
    %819 = vector.load %arg5[%c0_527, %c7_528, %c0_529, %c0_530] : memref<1x8x8x256xf32, #tpu.memory_space<vmem>>, vector<1x1x8x256xf32>
    %820 = vector.shape_cast %819 : vector<1x1x8x256xf32> to vector<8x256xf32>
    %821 = vector.broadcast %818 : vector<1x256xf32> to vector<8x256xf32>
    %822 = arith.mulf %821, %820 : vector<8x256xf32>
    %823 = arith.addf %817, %822 : vector<8x256xf32>
    %c80 = arith.constant 80 : index
    %c0_531 = arith.constant 0 : index
    %824 = vector.load %arg7[%c80, %c0_531] : memref<120x256xf32, #tpu.memory_space<vmem>>, vector<8x256xf32>
    tpu.vector_store %arg7[%c80, %c0_531], %823 {strides = array<i32>} : memref<120x256xf32, #tpu.memory_space<vmem>>, vector<8x256xf32>,
    %c0_532 = arith.constant 0 : index
    %c0_533 = arith.constant 0 : index
    %c0_534 = arith.constant 0 : index
    %c0_535 = arith.constant 0 : index
    %825 = vector.load %arg4[%c0_532, %c0_533, %c0_534, %c0_535] : memref<1x3x8x256xf32, #tpu.memory_space<vmem>>, vector<1x1x8x256xf32>
    %826 = vector.shape_cast %825 : vector<1x1x8x256xf32> to vector<8x256xf32>
    %c33 = arith.constant 33 : index
    %827 = memref.load %arg2[%c33] : memref<45xf32, #tpu.memory_space<smem>>
    %828 = vector.broadcast %827 : f32 to vector<8x256xf32>
    %829 = arith.subf %826, %828 : vector<8x256xf32>
    %830 = arith.mulf %829, %829 : vector<8x256xf32>
    %c0_536 = arith.constant 0 : index
    %c1_537 = arith.constant 1 : index
    %c0_538 = arith.constant 0 : index
    %c0_539 = arith.constant 0 : index
    %831 = vector.load %arg4[%c0_536, %c1_537, %c0_538, %c0_539] : memref<1x3x8x256xf32, #tpu.memory_space<vmem>>, vector<1x1x8x256xf32>
    %832 = vector.shape_cast %831 : vector<1x1x8x256xf32> to vector<8x256xf32>
    %c34 = arith.constant 34 : index
    %833 = memref.load %arg2[%c34] : memref<45xf32, #tpu.memory_space<smem>>
    %834 = vector.broadcast %833 : f32 to vector<8x256xf32>
    %835 = arith.subf %832, %834 : vector<8x256xf32>
    %836 = arith.mulf %835, %835 : vector<8x256xf32>
    %837 = arith.addf %830, %836 : vector<8x256xf32>
    %c0_540 = arith.constant 0 : index
    %c2_541 = arith.constant 2 : index
    %c0_542 = arith.constant 0 : index
    %c0_543 = arith.constant 0 : index
    %838 = vector.load %arg4[%c0_540, %c2_541, %c0_542, %c0_543] : memref<1x3x8x256xf32, #tpu.memory_space<vmem>>, vector<1x1x8x256xf32>
    %839 = vector.shape_cast %838 : vector<1x1x8x256xf32> to vector<8x256xf32>
    %c35 = arith.constant 35 : index
    %840 = memref.load %arg2[%c35] : memref<45xf32, #tpu.memory_space<smem>>
    %841 = vector.broadcast %840 : f32 to vector<8x256xf32>
    %842 = arith.subf %839, %841 : vector<8x256xf32>
    %843 = arith.mulf %842, %842 : vector<8x256xf32>
    %844 = arith.addf %837, %843 : vector<8x256xf32>
    %845 = math.sqrt %844 : vector<8x256xf32>
    %cst_544 = arith.constant 1.66666663 : f32
    %846 = vector.broadcast %cst_544 : f32 to vector<8x256xf32>
    %847 = arith.mulf %845, %846 : vector<8x256xf32>
    %cst_545 = arith.constant 1.000000e+00 : f32
    %848 = vector.broadcast %cst_545 : f32 to vector<8x256xf32>
    %849 = arith.subf %848, %847 : vector<8x256xf32>
    %cst_546 = arith.constant 0.000000e+00 : f32
    %850 = vector.broadcast %cst_546 : f32 to vector<8x256xf32>
    %851 = arith.maximumf %849, %850 : vector<8x256xf32>
    %852 = vector.extract_strided_slice %851 {offsets = [0, 0], sizes = [1, 256], strides = [1, 1]} : vector<8x256xf32> to vector<1x256xf32>
    %c0_547 = arith.constant 0 : index
    %c0_548 = arith.constant 0 : index
    %c0_549 = arith.constant 0 : index
    %c0_550 = arith.constant 0 : index
    %853 = vector.load %arg5[%c0_547, %c0_548, %c0_549, %c0_550] : memref<1x8x8x256xf32, #tpu.memory_space<vmem>>, vector<1x1x8x256xf32>
    %854 = vector.shape_cast %853 : vector<1x1x8x256xf32> to vector<8x256xf32>
    %855 = vector.broadcast %852 : vector<1x256xf32> to vector<8x256xf32>
    %856 = arith.mulf %855, %854 : vector<8x256xf32>
    %857 = vector.extract_strided_slice %851 {offsets = [1, 0], sizes = [1, 256], strides = [1, 1]} : vector<8x256xf32> to vector<1x256xf32>
    %c0_551 = arith.constant 0 : index
    %c1_552 = arith.constant 1 : index
    %c0_553 = arith.constant 0 : index
    %c0_554 = arith.constant 0 : index
    %858 = vector.load %arg5[%c0_551, %c1_552, %c0_553, %c0_554] : memref<1x8x8x256xf32, #tpu.memory_space<vmem>>, vector<1x1x8x256xf32>
    %859 = vector.shape_cast %858 : vector<1x1x8x256xf32> to vector<8x256xf32>
    %860 = vector.broadcast %857 : vector<1x256xf32> to vector<8x256xf32>
    %861 = arith.mulf %860, %859 : vector<8x256xf32>
    %862 = arith.addf %856, %861 : vector<8x256xf32>
    %863 = vector.extract_strided_slice %851 {offsets = [2, 0], sizes = [1, 256], strides = [1, 1]} : vector<8x256xf32> to vector<1x256xf32>
    %c0_555 = arith.constant 0 : index
    %c2_556 = arith.constant 2 : index
    %c0_557 = arith.constant 0 : index
    %c0_558 = arith.constant 0 : index
    %864 = vector.load %arg5[%c0_555, %c2_556, %c0_557, %c0_558] : memref<1x8x8x256xf32, #tpu.memory_space<vmem>>, vector<1x1x8x256xf32>
    %865 = vector.shape_cast %864 : vector<1x1x8x256xf32> to vector<8x256xf32>
    %866 = vector.broadcast %863 : vector<1x256xf32> to vector<8x256xf32>
    %867 = arith.mulf %866, %865 : vector<8x256xf32>
    %868 = arith.addf %862, %867 : vector<8x256xf32>
    %869 = vector.extract_strided_slice %851 {offsets = [3, 0], sizes = [1, 256], strides = [1, 1]} : vector<8x256xf32> to vector<1x256xf32>
    %c0_559 = arith.constant 0 : index
    %c3_560 = arith.constant 3 : index
    %c0_561 = arith.constant 0 : index
    %c0_562 = arith.constant 0 : index
    %870 = vector.load %arg5[%c0_559, %c3_560, %c0_561, %c0_562] : memref<1x8x8x256xf32, #tpu.memory_space<vmem>>, vector<1x1x8x256xf32>
    %871 = vector.shape_cast %870 : vector<1x1x8x256xf32> to vector<8x256xf32>
    %872 = vector.broadcast %869 : vector<1x256xf32> to vector<8x256xf32>
    %873 = arith.mulf %872, %871 : vector<8x256xf32>
    %874 = arith.addf %868, %873 : vector<8x256xf32>
    %875 = vector.extract_strided_slice %851 {offsets = [4, 0], sizes = [1, 256], strides = [1, 1]} : vector<8x256xf32> to vector<1x256xf32>
    %c0_563 = arith.constant 0 : index
    %c4_564 = arith.constant 4 : index
    %c0_565 = arith.constant 0 : index
    %c0_566 = arith.constant 0 : index
    %876 = vector.load %arg5[%c0_563, %c4_564, %c0_565, %c0_566] : memref<1x8x8x256xf32, #tpu.memory_space<vmem>>, vector<1x1x8x256xf32>
    %877 = vector.shape_cast %876 : vector<1x1x8x256xf32> to vector<8x256xf32>
    %878 = vector.broadcast %875 : vector<1x256xf32> to vector<8x256xf32>
    %879 = arith.mulf %878, %877 : vector<8x256xf32>
    %880 = arith.addf %874, %879 : vector<8x256xf32>
    %881 = vector.extract_strided_slice %851 {offsets = [5, 0], sizes = [1, 256], strides = [1, 1]} : vector<8x256xf32> to vector<1x256xf32>
    %c0_567 = arith.constant 0 : index
    %c5_568 = arith.constant 5 : index
    %c0_569 = arith.constant 0 : index
    %c0_570 = arith.constant 0 : index
    %882 = vector.load %arg5[%c0_567, %c5_568, %c0_569, %c0_570] : memref<1x8x8x256xf32, #tpu.memory_space<vmem>>, vector<1x1x8x256xf32>
    %883 = vector.shape_cast %882 : vector<1x1x8x256xf32> to vector<8x256xf32>
    %884 = vector.broadcast %881 : vector<1x256xf32> to vector<8x256xf32>
    %885 = arith.mulf %884, %883 : vector<8x256xf32>
    %886 = arith.addf %880, %885 : vector<8x256xf32>
    %887 = vector.extract_strided_slice %851 {offsets = [6, 0], sizes = [1, 256], strides = [1, 1]} : vector<8x256xf32> to vector<1x256xf32>
    %c0_571 = arith.constant 0 : index
    %c6_572 = arith.constant 6 : index
    %c0_573 = arith.constant 0 : index
    %c0_574 = arith.constant 0 : index
    %888 = vector.load %arg5[%c0_571, %c6_572, %c0_573, %c0_574] : memref<1x8x8x256xf32, #tpu.memory_space<vmem>>, vector<1x1x8x256xf32>
    %889 = vector.shape_cast %888 : vector<1x1x8x256xf32> to vector<8x256xf32>
    %890 = vector.broadcast %887 : vector<1x256xf32> to vector<8x256xf32>
    %891 = arith.mulf %890, %889 : vector<8x256xf32>
    %892 = arith.addf %886, %891 : vector<8x256xf32>
    %893 = vector.extract_strided_slice %851 {offsets = [7, 0], sizes = [1, 256], strides = [1, 1]} : vector<8x256xf32> to vector<1x256xf32>
    %c0_575 = arith.constant 0 : index
    %c7_576 = arith.constant 7 : index
    %c0_577 = arith.constant 0 : index
    %c0_578 = arith.constant 0 : index
    %894 = vector.load %arg5[%c0_575, %c7_576, %c0_577, %c0_578] : memref<1x8x8x256xf32, #tpu.memory_space<vmem>>, vector<1x1x8x256xf32>
    %895 = vector.shape_cast %894 : vector<1x1x8x256xf32> to vector<8x256xf32>
    %896 = vector.broadcast %893 : vector<1x256xf32> to vector<8x256xf32>
    %897 = arith.mulf %896, %895 : vector<8x256xf32>
    %898 = arith.addf %892, %897 : vector<8x256xf32>
    %c88 = arith.constant 88 : index
    %c0_579 = arith.constant 0 : index
    %899 = vector.load %arg7[%c88, %c0_579] : memref<120x256xf32, #tpu.memory_space<vmem>>, vector<8x256xf32>
    tpu.vector_store %arg7[%c88, %c0_579], %898 {strides = array<i32>} : memref<120x256xf32, #tpu.memory_space<vmem>>, vector<8x256xf32>,
    %c0_580 = arith.constant 0 : index
    %c0_581 = arith.constant 0 : index
    %c0_582 = arith.constant 0 : index
    %c0_583 = arith.constant 0 : index
    %900 = vector.load %arg4[%c0_580, %c0_581, %c0_582, %c0_583] : memref<1x3x8x256xf32, #tpu.memory_space<vmem>>, vector<1x1x8x256xf32>
    %901 = vector.shape_cast %900 : vector<1x1x8x256xf32> to vector<8x256xf32>
    %c36 = arith.constant 36 : index
    %902 = memref.load %arg2[%c36] : memref<45xf32, #tpu.memory_space<smem>>
    %903 = vector.broadcast %902 : f32 to vector<8x256xf32>
    %904 = arith.subf %901, %903 : vector<8x256xf32>
    %905 = arith.mulf %904, %904 : vector<8x256xf32>
    %c0_584 = arith.constant 0 : index
    %c1_585 = arith.constant 1 : index
    %c0_586 = arith.constant 0 : index
    %c0_587 = arith.constant 0 : index
    %906 = vector.load %arg4[%c0_584, %c1_585, %c0_586, %c0_587] : memref<1x3x8x256xf32, #tpu.memory_space<vmem>>, vector<1x1x8x256xf32>
    %907 = vector.shape_cast %906 : vector<1x1x8x256xf32> to vector<8x256xf32>
    %c37 = arith.constant 37 : index
    %908 = memref.load %arg2[%c37] : memref<45xf32, #tpu.memory_space<smem>>
    %909 = vector.broadcast %908 : f32 to vector<8x256xf32>
    %910 = arith.subf %907, %909 : vector<8x256xf32>
    %911 = arith.mulf %910, %910 : vector<8x256xf32>
    %912 = arith.addf %905, %911 : vector<8x256xf32>
    %c0_588 = arith.constant 0 : index
    %c2_589 = arith.constant 2 : index
    %c0_590 = arith.constant 0 : index
    %c0_591 = arith.constant 0 : index
    %913 = vector.load %arg4[%c0_588, %c2_589, %c0_590, %c0_591] : memref<1x3x8x256xf32, #tpu.memory_space<vmem>>, vector<1x1x8x256xf32>
    %914 = vector.shape_cast %913 : vector<1x1x8x256xf32> to vector<8x256xf32>
    %c38 = arith.constant 38 : index
    %915 = memref.load %arg2[%c38] : memref<45xf32, #tpu.memory_space<smem>>
    %916 = vector.broadcast %915 : f32 to vector<8x256xf32>
    %917 = arith.subf %914, %916 : vector<8x256xf32>
    %918 = arith.mulf %917, %917 : vector<8x256xf32>
    %919 = arith.addf %912, %918 : vector<8x256xf32>
    %920 = math.sqrt %919 : vector<8x256xf32>
    %cst_592 = arith.constant 1.66666663 : f32
    %921 = vector.broadcast %cst_592 : f32 to vector<8x256xf32>
    %922 = arith.mulf %920, %921 : vector<8x256xf32>
    %cst_593 = arith.constant 1.000000e+00 : f32
    %923 = vector.broadcast %cst_593 : f32 to vector<8x256xf32>
    %924 = arith.subf %923, %922 : vector<8x256xf32>
    %cst_594 = arith.constant 0.000000e+00 : f32
    %925 = vector.broadcast %cst_594 : f32 to vector<8x256xf32>
    %926 = arith.maximumf %924, %925 : vector<8x256xf32>
    %927 = vector.extract_strided_slice %926 {offsets = [0, 0], sizes = [1, 256], strides = [1, 1]} : vector<8x256xf32> to vector<1x256xf32>
    %c0_595 = arith.constant 0 : index
    %c0_596 = arith.constant 0 : index
    %c0_597 = arith.constant 0 : index
    %c0_598 = arith.constant 0 : index
    %928 = vector.load %arg5[%c0_595, %c0_596, %c0_597, %c0_598] : memref<1x8x8x256xf32, #tpu.memory_space<vmem>>, vector<1x1x8x256xf32>
    %929 = vector.shape_cast %928 : vector<1x1x8x256xf32> to vector<8x256xf32>
    %930 = vector.broadcast %927 : vector<1x256xf32> to vector<8x256xf32>
    %931 = arith.mulf %930, %929 : vector<8x256xf32>
    %932 = vector.extract_strided_slice %926 {offsets = [1, 0], sizes = [1, 256], strides = [1, 1]} : vector<8x256xf32> to vector<1x256xf32>
    %c0_599 = arith.constant 0 : index
    %c1_600 = arith.constant 1 : index
    %c0_601 = arith.constant 0 : index
    %c0_602 = arith.constant 0 : index
    %933 = vector.load %arg5[%c0_599, %c1_600, %c0_601, %c0_602] : memref<1x8x8x256xf32, #tpu.memory_space<vmem>>, vector<1x1x8x256xf32>
    %934 = vector.shape_cast %933 : vector<1x1x8x256xf32> to vector<8x256xf32>
    %935 = vector.broadcast %932 : vector<1x256xf32> to vector<8x256xf32>
    %936 = arith.mulf %935, %934 : vector<8x256xf32>
    %937 = arith.addf %931, %936 : vector<8x256xf32>
    %938 = vector.extract_strided_slice %926 {offsets = [2, 0], sizes = [1, 256], strides = [1, 1]} : vector<8x256xf32> to vector<1x256xf32>
    %c0_603 = arith.constant 0 : index
    %c2_604 = arith.constant 2 : index
    %c0_605 = arith.constant 0 : index
    %c0_606 = arith.constant 0 : index
    %939 = vector.load %arg5[%c0_603, %c2_604, %c0_605, %c0_606] : memref<1x8x8x256xf32, #tpu.memory_space<vmem>>, vector<1x1x8x256xf32>
    %940 = vector.shape_cast %939 : vector<1x1x8x256xf32> to vector<8x256xf32>
    %941 = vector.broadcast %938 : vector<1x256xf32> to vector<8x256xf32>
    %942 = arith.mulf %941, %940 : vector<8x256xf32>
    %943 = arith.addf %937, %942 : vector<8x256xf32>
    %944 = vector.extract_strided_slice %926 {offsets = [3, 0], sizes = [1, 256], strides = [1, 1]} : vector<8x256xf32> to vector<1x256xf32>
    %c0_607 = arith.constant 0 : index
    %c3_608 = arith.constant 3 : index
    %c0_609 = arith.constant 0 : index
    %c0_610 = arith.constant 0 : index
    %945 = vector.load %arg5[%c0_607, %c3_608, %c0_609, %c0_610] : memref<1x8x8x256xf32, #tpu.memory_space<vmem>>, vector<1x1x8x256xf32>
    %946 = vector.shape_cast %945 : vector<1x1x8x256xf32> to vector<8x256xf32>
    %947 = vector.broadcast %944 : vector<1x256xf32> to vector<8x256xf32>
    %948 = arith.mulf %947, %946 : vector<8x256xf32>
    %949 = arith.addf %943, %948 : vector<8x256xf32>
    %950 = vector.extract_strided_slice %926 {offsets = [4, 0], sizes = [1, 256], strides = [1, 1]} : vector<8x256xf32> to vector<1x256xf32>
    %c0_611 = arith.constant 0 : index
    %c4_612 = arith.constant 4 : index
    %c0_613 = arith.constant 0 : index
    %c0_614 = arith.constant 0 : index
    %951 = vector.load %arg5[%c0_611, %c4_612, %c0_613, %c0_614] : memref<1x8x8x256xf32, #tpu.memory_space<vmem>>, vector<1x1x8x256xf32>
    %952 = vector.shape_cast %951 : vector<1x1x8x256xf32> to vector<8x256xf32>
    %953 = vector.broadcast %950 : vector<1x256xf32> to vector<8x256xf32>
    %954 = arith.mulf %953, %952 : vector<8x256xf32>
    %955 = arith.addf %949, %954 : vector<8x256xf32>
    %956 = vector.extract_strided_slice %926 {offsets = [5, 0], sizes = [1, 256], strides = [1, 1]} : vector<8x256xf32> to vector<1x256xf32>
    %c0_615 = arith.constant 0 : index
    %c5_616 = arith.constant 5 : index
    %c0_617 = arith.constant 0 : index
    %c0_618 = arith.constant 0 : index
    %957 = vector.load %arg5[%c0_615, %c5_616, %c0_617, %c0_618] : memref<1x8x8x256xf32, #tpu.memory_space<vmem>>, vector<1x1x8x256xf32>
    %958 = vector.shape_cast %957 : vector<1x1x8x256xf32> to vector<8x256xf32>
    %959 = vector.broadcast %956 : vector<1x256xf32> to vector<8x256xf32>
    %960 = arith.mulf %959, %958 : vector<8x256xf32>
    %961 = arith.addf %955, %960 : vector<8x256xf32>
    %962 = vector.extract_strided_slice %926 {offsets = [6, 0], sizes = [1, 256], strides = [1, 1]} : vector<8x256xf32> to vector<1x256xf32>
    %c0_619 = arith.constant 0 : index
    %c6_620 = arith.constant 6 : index
    %c0_621 = arith.constant 0 : index
    %c0_622 = arith.constant 0 : index
    %963 = vector.load %arg5[%c0_619, %c6_620, %c0_621, %c0_622] : memref<1x8x8x256xf32, #tpu.memory_space<vmem>>, vector<1x1x8x256xf32>
    %964 = vector.shape_cast %963 : vector<1x1x8x256xf32> to vector<8x256xf32>
    %965 = vector.broadcast %962 : vector<1x256xf32> to vector<8x256xf32>
    %966 = arith.mulf %965, %964 : vector<8x256xf32>
    %967 = arith.addf %961, %966 : vector<8x256xf32>
    %968 = vector.extract_strided_slice %926 {offsets = [7, 0], sizes = [1, 256], strides = [1, 1]} : vector<8x256xf32> to vector<1x256xf32>
    %c0_623 = arith.constant 0 : index
    %c7_624 = arith.constant 7 : index
    %c0_625 = arith.constant 0 : index
    %c0_626 = arith.constant 0 : index
    %969 = vector.load %arg5[%c0_623, %c7_624, %c0_625, %c0_626] : memref<1x8x8x256xf32, #tpu.memory_space<vmem>>, vector<1x1x8x256xf32>
    %970 = vector.shape_cast %969 : vector<1x1x8x256xf32> to vector<8x256xf32>
    %971 = vector.broadcast %968 : vector<1x256xf32> to vector<8x256xf32>
    %972 = arith.mulf %971, %970 : vector<8x256xf32>
    %973 = arith.addf %967, %972 : vector<8x256xf32>
    %c96 = arith.constant 96 : index
    %c0_627 = arith.constant 0 : index
    %974 = vector.load %arg7[%c96, %c0_627] : memref<120x256xf32, #tpu.memory_space<vmem>>, vector<8x256xf32>
    tpu.vector_store %arg7[%c96, %c0_627], %973 {strides = array<i32>} : memref<120x256xf32, #tpu.memory_space<vmem>>, vector<8x256xf32>,
    %c0_628 = arith.constant 0 : index
    %c0_629 = arith.constant 0 : index
    %c0_630 = arith.constant 0 : index
    %c0_631 = arith.constant 0 : index
    %975 = vector.load %arg4[%c0_628, %c0_629, %c0_630, %c0_631] : memref<1x3x8x256xf32, #tpu.memory_space<vmem>>, vector<1x1x8x256xf32>
    %976 = vector.shape_cast %975 : vector<1x1x8x256xf32> to vector<8x256xf32>
    %c39 = arith.constant 39 : index
    %977 = memref.load %arg2[%c39] : memref<45xf32, #tpu.memory_space<smem>>
    %978 = vector.broadcast %977 : f32 to vector<8x256xf32>
    %979 = arith.subf %976, %978 : vector<8x256xf32>
    %980 = arith.mulf %979, %979 : vector<8x256xf32>
    %c0_632 = arith.constant 0 : index
    %c1_633 = arith.constant 1 : index
    %c0_634 = arith.constant 0 : index
    %c0_635 = arith.constant 0 : index
    %981 = vector.load %arg4[%c0_632, %c1_633, %c0_634, %c0_635] : memref<1x3x8x256xf32, #tpu.memory_space<vmem>>, vector<1x1x8x256xf32>
    %982 = vector.shape_cast %981 : vector<1x1x8x256xf32> to vector<8x256xf32>
    %c40_636 = arith.constant 40 : index
    %983 = memref.load %arg2[%c40_636] : memref<45xf32, #tpu.memory_space<smem>>
    %984 = vector.broadcast %983 : f32 to vector<8x256xf32>
    %985 = arith.subf %982, %984 : vector<8x256xf32>
    %986 = arith.mulf %985, %985 : vector<8x256xf32>
    %987 = arith.addf %980, %986 : vector<8x256xf32>
    %c0_637 = arith.constant 0 : index
    %c2_638 = arith.constant 2 : index
    %c0_639 = arith.constant 0 : index
    %c0_640 = arith.constant 0 : index
    %988 = vector.load %arg4[%c0_637, %c2_638, %c0_639, %c0_640] : memref<1x3x8x256xf32, #tpu.memory_space<vmem>>, vector<1x1x8x256xf32>
    %989 = vector.shape_cast %988 : vector<1x1x8x256xf32> to vector<8x256xf32>
    %c41 = arith.constant 41 : index
    %990 = memref.load %arg2[%c41] : memref<45xf32, #tpu.memory_space<smem>>
    %991 = vector.broadcast %990 : f32 to vector<8x256xf32>
    %992 = arith.subf %989, %991 : vector<8x256xf32>
    %993 = arith.mulf %992, %992 : vector<8x256xf32>
    %994 = arith.addf %987, %993 : vector<8x256xf32>
    %995 = math.sqrt %994 : vector<8x256xf32>
    %cst_641 = arith.constant 1.66666663 : f32
    %996 = vector.broadcast %cst_641 : f32 to vector<8x256xf32>
    %997 = arith.mulf %995, %996 : vector<8x256xf32>
    %cst_642 = arith.constant 1.000000e+00 : f32
    %998 = vector.broadcast %cst_642 : f32 to vector<8x256xf32>
    %999 = arith.subf %998, %997 : vector<8x256xf32>
    %cst_643 = arith.constant 0.000000e+00 : f32
    %1000 = vector.broadcast %cst_643 : f32 to vector<8x256xf32>
    %1001 = arith.maximumf %999, %1000 : vector<8x256xf32>
    %1002 = vector.extract_strided_slice %1001 {offsets = [0, 0], sizes = [1, 256], strides = [1, 1]} : vector<8x256xf32> to vector<1x256xf32>
    %c0_644 = arith.constant 0 : index
    %c0_645 = arith.constant 0 : index
    %c0_646 = arith.constant 0 : index
    %c0_647 = arith.constant 0 : index
    %1003 = vector.load %arg5[%c0_644, %c0_645, %c0_646, %c0_647] : memref<1x8x8x256xf32, #tpu.memory_space<vmem>>, vector<1x1x8x256xf32>
    %1004 = vector.shape_cast %1003 : vector<1x1x8x256xf32> to vector<8x256xf32>
    %1005 = vector.broadcast %1002 : vector<1x256xf32> to vector<8x256xf32>
    %1006 = arith.mulf %1005, %1004 : vector<8x256xf32>
    %1007 = vector.extract_strided_slice %1001 {offsets = [1, 0], sizes = [1, 256], strides = [1, 1]} : vector<8x256xf32> to vector<1x256xf32>
    %c0_648 = arith.constant 0 : index
    %c1_649 = arith.constant 1 : index
    %c0_650 = arith.constant 0 : index
    %c0_651 = arith.constant 0 : index
    %1008 = vector.load %arg5[%c0_648, %c1_649, %c0_650, %c0_651] : memref<1x8x8x256xf32, #tpu.memory_space<vmem>>, vector<1x1x8x256xf32>
    %1009 = vector.shape_cast %1008 : vector<1x1x8x256xf32> to vector<8x256xf32>
    %1010 = vector.broadcast %1007 : vector<1x256xf32> to vector<8x256xf32>
    %1011 = arith.mulf %1010, %1009 : vector<8x256xf32>
    %1012 = arith.addf %1006, %1011 : vector<8x256xf32>
    %1013 = vector.extract_strided_slice %1001 {offsets = [2, 0], sizes = [1, 256], strides = [1, 1]} : vector<8x256xf32> to vector<1x256xf32>
    %c0_652 = arith.constant 0 : index
    %c2_653 = arith.constant 2 : index
    %c0_654 = arith.constant 0 : index
    %c0_655 = arith.constant 0 : index
    %1014 = vector.load %arg5[%c0_652, %c2_653, %c0_654, %c0_655] : memref<1x8x8x256xf32, #tpu.memory_space<vmem>>, vector<1x1x8x256xf32>
    %1015 = vector.shape_cast %1014 : vector<1x1x8x256xf32> to vector<8x256xf32>
    %1016 = vector.broadcast %1013 : vector<1x256xf32> to vector<8x256xf32>
    %1017 = arith.mulf %1016, %1015 : vector<8x256xf32>
    %1018 = arith.addf %1012, %1017 : vector<8x256xf32>
    %1019 = vector.extract_strided_slice %1001 {offsets = [3, 0], sizes = [1, 256], strides = [1, 1]} : vector<8x256xf32> to vector<1x256xf32>
    %c0_656 = arith.constant 0 : index
    %c3_657 = arith.constant 3 : index
    %c0_658 = arith.constant 0 : index
    %c0_659 = arith.constant 0 : index
    %1020 = vector.load %arg5[%c0_656, %c3_657, %c0_658, %c0_659] : memref<1x8x8x256xf32, #tpu.memory_space<vmem>>, vector<1x1x8x256xf32>
    %1021 = vector.shape_cast %1020 : vector<1x1x8x256xf32> to vector<8x256xf32>
    %1022 = vector.broadcast %1019 : vector<1x256xf32> to vector<8x256xf32>
    %1023 = arith.mulf %1022, %1021 : vector<8x256xf32>
    %1024 = arith.addf %1018, %1023 : vector<8x256xf32>
    %1025 = vector.extract_strided_slice %1001 {offsets = [4, 0], sizes = [1, 256], strides = [1, 1]} : vector<8x256xf32> to vector<1x256xf32>
    %c0_660 = arith.constant 0 : index
    %c4_661 = arith.constant 4 : index
    %c0_662 = arith.constant 0 : index
    %c0_663 = arith.constant 0 : index
    %1026 = vector.load %arg5[%c0_660, %c4_661, %c0_662, %c0_663] : memref<1x8x8x256xf32, #tpu.memory_space<vmem>>, vector<1x1x8x256xf32>
    %1027 = vector.shape_cast %1026 : vector<1x1x8x256xf32> to vector<8x256xf32>
    %1028 = vector.broadcast %1025 : vector<1x256xf32> to vector<8x256xf32>
    %1029 = arith.mulf %1028, %1027 : vector<8x256xf32>
    %1030 = arith.addf %1024, %1029 : vector<8x256xf32>
    %1031 = vector.extract_strided_slice %1001 {offsets = [5, 0], sizes = [1, 256], strides = [1, 1]} : vector<8x256xf32> to vector<1x256xf32>
    %c0_664 = arith.constant 0 : index
    %c5_665 = arith.constant 5 : index
    %c0_666 = arith.constant 0 : index
    %c0_667 = arith.constant 0 : index
    %1032 = vector.load %arg5[%c0_664, %c5_665, %c0_666, %c0_667] : memref<1x8x8x256xf32, #tpu.memory_space<vmem>>, vector<1x1x8x256xf32>
    %1033 = vector.shape_cast %1032 : vector<1x1x8x256xf32> to vector<8x256xf32>
    %1034 = vector.broadcast %1031 : vector<1x256xf32> to vector<8x256xf32>
    %1035 = arith.mulf %1034, %1033 : vector<8x256xf32>
    %1036 = arith.addf %1030, %1035 : vector<8x256xf32>
    %1037 = vector.extract_strided_slice %1001 {offsets = [6, 0], sizes = [1, 256], strides = [1, 1]} : vector<8x256xf32> to vector<1x256xf32>
    %c0_668 = arith.constant 0 : index
    %c6_669 = arith.constant 6 : index
    %c0_670 = arith.constant 0 : index
    %c0_671 = arith.constant 0 : index
    %1038 = vector.load %arg5[%c0_668, %c6_669, %c0_670, %c0_671] : memref<1x8x8x256xf32, #tpu.memory_space<vmem>>, vector<1x1x8x256xf32>
    %1039 = vector.shape_cast %1038 : vector<1x1x8x256xf32> to vector<8x256xf32>
    %1040 = vector.broadcast %1037 : vector<1x256xf32> to vector<8x256xf32>
    %1041 = arith.mulf %1040, %1039 : vector<8x256xf32>
    %1042 = arith.addf %1036, %1041 : vector<8x256xf32>
    %1043 = vector.extract_strided_slice %1001 {offsets = [7, 0], sizes = [1, 256], strides = [1, 1]} : vector<8x256xf32> to vector<1x256xf32>
    %c0_672 = arith.constant 0 : index
    %c7_673 = arith.constant 7 : index
    %c0_674 = arith.constant 0 : index
    %c0_675 = arith.constant 0 : index
    %1044 = vector.load %arg5[%c0_672, %c7_673, %c0_674, %c0_675] : memref<1x8x8x256xf32, #tpu.memory_space<vmem>>, vector<1x1x8x256xf32>
    %1045 = vector.shape_cast %1044 : vector<1x1x8x256xf32> to vector<8x256xf32>
    %1046 = vector.broadcast %1043 : vector<1x256xf32> to vector<8x256xf32>
    %1047 = arith.mulf %1046, %1045 : vector<8x256xf32>
    %1048 = arith.addf %1042, %1047 : vector<8x256xf32>
    %c104 = arith.constant 104 : index
    %c0_676 = arith.constant 0 : index
    %1049 = vector.load %arg7[%c104, %c0_676] : memref<120x256xf32, #tpu.memory_space<vmem>>, vector<8x256xf32>
    tpu.vector_store %arg7[%c104, %c0_676], %1048 {strides = array<i32>} : memref<120x256xf32, #tpu.memory_space<vmem>>, vector<8x256xf32>,
    %c0_677 = arith.constant 0 : index
    %c0_678 = arith.constant 0 : index
    %c0_679 = arith.constant 0 : index
    %c0_680 = arith.constant 0 : index
    %1050 = vector.load %arg4[%c0_677, %c0_678, %c0_679, %c0_680] : memref<1x3x8x256xf32, #tpu.memory_space<vmem>>, vector<1x1x8x256xf32>
    %1051 = vector.shape_cast %1050 : vector<1x1x8x256xf32> to vector<8x256xf32>
    %c42 = arith.constant 42 : index
    %1052 = memref.load %arg2[%c42] : memref<45xf32, #tpu.memory_space<smem>>
    %1053 = vector.broadcast %1052 : f32 to vector<8x256xf32>
    %1054 = arith.subf %1051, %1053 : vector<8x256xf32>
    %1055 = arith.mulf %1054, %1054 : vector<8x256xf32>
    %c0_681 = arith.constant 0 : index
    %c1_682 = arith.constant 1 : index
    %c0_683 = arith.constant 0 : index
    %c0_684 = arith.constant 0 : index
    %1056 = vector.load %arg4[%c0_681, %c1_682, %c0_683, %c0_684] : memref<1x3x8x256xf32, #tpu.memory_space<vmem>>, vector<1x1x8x256xf32>
    %1057 = vector.shape_cast %1056 : vector<1x1x8x256xf32> to vector<8x256xf32>
    %c43 = arith.constant 43 : index
    %1058 = memref.load %arg2[%c43] : memref<45xf32, #tpu.memory_space<smem>>
    %1059 = vector.broadcast %1058 : f32 to vector<8x256xf32>
    %1060 = arith.subf %1057, %1059 : vector<8x256xf32>
    %1061 = arith.mulf %1060, %1060 : vector<8x256xf32>
    %1062 = arith.addf %1055, %1061 : vector<8x256xf32>
    %c0_685 = arith.constant 0 : index
    %c2_686 = arith.constant 2 : index
    %c0_687 = arith.constant 0 : index
    %c0_688 = arith.constant 0 : index
    %1063 = vector.load %arg4[%c0_685, %c2_686, %c0_687, %c0_688] : memref<1x3x8x256xf32, #tpu.memory_space<vmem>>, vector<1x1x8x256xf32>
    %1064 = vector.shape_cast %1063 : vector<1x1x8x256xf32> to vector<8x256xf32>
    %c44 = arith.constant 44 : index
    %1065 = memref.load %arg2[%c44] : memref<45xf32, #tpu.memory_space<smem>>
    %1066 = vector.broadcast %1065 : f32 to vector<8x256xf32>
    %1067 = arith.subf %1064, %1066 : vector<8x256xf32>
    %1068 = arith.mulf %1067, %1067 : vector<8x256xf32>
    %1069 = arith.addf %1062, %1068 : vector<8x256xf32>
    %1070 = math.sqrt %1069 : vector<8x256xf32>
    %cst_689 = arith.constant 1.66666663 : f32
    %1071 = vector.broadcast %cst_689 : f32 to vector<8x256xf32>
    %1072 = arith.mulf %1070, %1071 : vector<8x256xf32>
    %cst_690 = arith.constant 1.000000e+00 : f32
    %1073 = vector.broadcast %cst_690 : f32 to vector<8x256xf32>
    %1074 = arith.subf %1073, %1072 : vector<8x256xf32>
    %cst_691 = arith.constant 0.000000e+00 : f32
    %1075 = vector.broadcast %cst_691 : f32 to vector<8x256xf32>
    %1076 = arith.maximumf %1074, %1075 : vector<8x256xf32>
    %1077 = vector.extract_strided_slice %1076 {offsets = [0, 0], sizes = [1, 256], strides = [1, 1]} : vector<8x256xf32> to vector<1x256xf32>
    %c0_692 = arith.constant 0 : index
    %c0_693 = arith.constant 0 : index
    %c0_694 = arith.constant 0 : index
    %c0_695 = arith.constant 0 : index
    %1078 = vector.load %arg5[%c0_692, %c0_693, %c0_694, %c0_695] : memref<1x8x8x256xf32, #tpu.memory_space<vmem>>, vector<1x1x8x256xf32>
    %1079 = vector.shape_cast %1078 : vector<1x1x8x256xf32> to vector<8x256xf32>
    %1080 = vector.broadcast %1077 : vector<1x256xf32> to vector<8x256xf32>
    %1081 = arith.mulf %1080, %1079 : vector<8x256xf32>
    %1082 = vector.extract_strided_slice %1076 {offsets = [1, 0], sizes = [1, 256], strides = [1, 1]} : vector<8x256xf32> to vector<1x256xf32>
    %c0_696 = arith.constant 0 : index
    %c1_697 = arith.constant 1 : index
    %c0_698 = arith.constant 0 : index
    %c0_699 = arith.constant 0 : index
    %1083 = vector.load %arg5[%c0_696, %c1_697, %c0_698, %c0_699] : memref<1x8x8x256xf32, #tpu.memory_space<vmem>>, vector<1x1x8x256xf32>
    %1084 = vector.shape_cast %1083 : vector<1x1x8x256xf32> to vector<8x256xf32>
    %1085 = vector.broadcast %1082 : vector<1x256xf32> to vector<8x256xf32>
    %1086 = arith.mulf %1085, %1084 : vector<8x256xf32>
    %1087 = arith.addf %1081, %1086 : vector<8x256xf32>
    %1088 = vector.extract_strided_slice %1076 {offsets = [2, 0], sizes = [1, 256], strides = [1, 1]} : vector<8x256xf32> to vector<1x256xf32>
    %c0_700 = arith.constant 0 : index
    %c2_701 = arith.constant 2 : index
    %c0_702 = arith.constant 0 : index
    %c0_703 = arith.constant 0 : index
    %1089 = vector.load %arg5[%c0_700, %c2_701, %c0_702, %c0_703] : memref<1x8x8x256xf32, #tpu.memory_space<vmem>>, vector<1x1x8x256xf32>
    %1090 = vector.shape_cast %1089 : vector<1x1x8x256xf32> to vector<8x256xf32>
    %1091 = vector.broadcast %1088 : vector<1x256xf32> to vector<8x256xf32>
    %1092 = arith.mulf %1091, %1090 : vector<8x256xf32>
    %1093 = arith.addf %1087, %1092 : vector<8x256xf32>
    %1094 = vector.extract_strided_slice %1076 {offsets = [3, 0], sizes = [1, 256], strides = [1, 1]} : vector<8x256xf32> to vector<1x256xf32>
    %c0_704 = arith.constant 0 : index
    %c3_705 = arith.constant 3 : index
    %c0_706 = arith.constant 0 : index
    %c0_707 = arith.constant 0 : index
    %1095 = vector.load %arg5[%c0_704, %c3_705, %c0_706, %c0_707] : memref<1x8x8x256xf32, #tpu.memory_space<vmem>>, vector<1x1x8x256xf32>
    %1096 = vector.shape_cast %1095 : vector<1x1x8x256xf32> to vector<8x256xf32>
    %1097 = vector.broadcast %1094 : vector<1x256xf32> to vector<8x256xf32>
    %1098 = arith.mulf %1097, %1096 : vector<8x256xf32>
    %1099 = arith.addf %1093, %1098 : vector<8x256xf32>
    %1100 = vector.extract_strided_slice %1076 {offsets = [4, 0], sizes = [1, 256], strides = [1, 1]} : vector<8x256xf32> to vector<1x256xf32>
    %c0_708 = arith.constant 0 : index
    %c4_709 = arith.constant 4 : index
    %c0_710 = arith.constant 0 : index
    %c0_711 = arith.constant 0 : index
    %1101 = vector.load %arg5[%c0_708, %c4_709, %c0_710, %c0_711] : memref<1x8x8x256xf32, #tpu.memory_space<vmem>>, vector<1x1x8x256xf32>
    %1102 = vector.shape_cast %1101 : vector<1x1x8x256xf32> to vector<8x256xf32>
    %1103 = vector.broadcast %1100 : vector<1x256xf32> to vector<8x256xf32>
    %1104 = arith.mulf %1103, %1102 : vector<8x256xf32>
    %1105 = arith.addf %1099, %1104 : vector<8x256xf32>
    %1106 = vector.extract_strided_slice %1076 {offsets = [5, 0], sizes = [1, 256], strides = [1, 1]} : vector<8x256xf32> to vector<1x256xf32>
    %c0_712 = arith.constant 0 : index
    %c5_713 = arith.constant 5 : index
    %c0_714 = arith.constant 0 : index
    %c0_715 = arith.constant 0 : index
    %1107 = vector.load %arg5[%c0_712, %c5_713, %c0_714, %c0_715] : memref<1x8x8x256xf32, #tpu.memory_space<vmem>>, vector<1x1x8x256xf32>
    %1108 = vector.shape_cast %1107 : vector<1x1x8x256xf32> to vector<8x256xf32>
    %1109 = vector.broadcast %1106 : vector<1x256xf32> to vector<8x256xf32>
    %1110 = arith.mulf %1109, %1108 : vector<8x256xf32>
    %1111 = arith.addf %1105, %1110 : vector<8x256xf32>
    %1112 = vector.extract_strided_slice %1076 {offsets = [6, 0], sizes = [1, 256], strides = [1, 1]} : vector<8x256xf32> to vector<1x256xf32>
    %c0_716 = arith.constant 0 : index
    %c6_717 = arith.constant 6 : index
    %c0_718 = arith.constant 0 : index
    %c0_719 = arith.constant 0 : index
    %1113 = vector.load %arg5[%c0_716, %c6_717, %c0_718, %c0_719] : memref<1x8x8x256xf32, #tpu.memory_space<vmem>>, vector<1x1x8x256xf32>
    %1114 = vector.shape_cast %1113 : vector<1x1x8x256xf32> to vector<8x256xf32>
    %1115 = vector.broadcast %1112 : vector<1x256xf32> to vector<8x256xf32>
    %1116 = arith.mulf %1115, %1114 : vector<8x256xf32>
    %1117 = arith.addf %1111, %1116 : vector<8x256xf32>
    %1118 = vector.extract_strided_slice %1076 {offsets = [7, 0], sizes = [1, 256], strides = [1, 1]} : vector<8x256xf32> to vector<1x256xf32>
    %c0_720 = arith.constant 0 : index
    %c7_721 = arith.constant 7 : index
    %c0_722 = arith.constant 0 : index
    %c0_723 = arith.constant 0 : index
    %1119 = vector.load %arg5[%c0_720, %c7_721, %c0_722, %c0_723] : memref<1x8x8x256xf32, #tpu.memory_space<vmem>>, vector<1x1x8x256xf32>
    %1120 = vector.shape_cast %1119 : vector<1x1x8x256xf32> to vector<8x256xf32>
    %1121 = vector.broadcast %1118 : vector<1x256xf32> to vector<8x256xf32>
    %1122 = arith.mulf %1121, %1120 : vector<8x256xf32>
    %1123 = arith.addf %1117, %1122 : vector<8x256xf32>
    %c112 = arith.constant 112 : index
    %c0_724 = arith.constant 0 : index
    %1124 = vector.load %arg7[%c112, %c0_724] : memref<120x256xf32, #tpu.memory_space<vmem>>, vector<8x256xf32>
    tpu.vector_store %arg7[%c112, %c0_724], %1123 {strides = array<i32>} : memref<120x256xf32, #tpu.memory_space<vmem>>, vector<8x256xf32>,
    %c0_725 = arith.constant 0 : index
    %c0_726 = arith.constant 0 : index
    %1125 = vector.load %arg3[%c0_725, %c0_726] : memref<8x120xf32, #tpu.memory_space<vmem>>, vector<8x120xf32>
    %c0_727 = arith.constant 0 : index
    %c0_728 = arith.constant 0 : index
    %1126 = vector.load %arg7[%c0_727, %c0_728] : memref<120x256xf32, #tpu.memory_space<vmem>>, vector<120x256xf32>
    %cst_729 = arith.constant dense<0.000000e+00> : vector<8x256xf32>
    %1127 = tpu.matmul %1125, %1126, %cst_729 {dimension_numbers = #tpu.dot_dimension_numbers<[1], [0], [0], [1], [0, 0, 1, 1], [], []>} : vector<8x120xf32>, vector<120x256xf32>, vector<8x256xf32> -> vector<8x256xf32>
    %c0_730 = arith.constant 0 : index
    %c0_731 = arith.constant 0 : index
    %c0_732 = arith.constant 0 : index
    %1128 = vector.load %arg6[%c0_730, %c0_731, %c0_732] : memref<1x8x256xf32, #tpu.memory_space<vmem>>, vector<1x8x256xf32>
    %1129 = vector.shape_cast %1128 : vector<1x8x256xf32> to vector<8x256xf32>
    %1130 = vector.shape_cast %1127 : vector<8x256xf32> to vector<1x8x256xf32>
    tpu.vector_store %arg6[%c0_730, %c0_731, %c0_732], %1130 {strides = array<i32>} : memref<1x8x256xf32, #tpu.memory_space<vmem>>, vector<1x8x256xf32>,
    return
  }
  func.func @transform_0(%arg0: i32, %arg1: i32) -> i32 {
    %c0_i32 = arith.constant 0 : i32
    %c0_i32_0 = arith.constant 0 : i32
    return %c0_i32 : i32
  }
  func.func @transform_1(%arg0: i32, %arg1: i32) -> (i32, i32) {
    %c0_i32 = arith.constant 0 : i32
    %c0_i32_0 = arith.constant 0 : i32
    %c0_i32_1 = arith.constant 0 : i32
    return %c0_i32, %c0_i32_0 : i32, i32
  }
  func.func @transform_2(%arg0: i32, %arg1: i32) -> (i32, i32, i32, i32) {
    %c0_i32 = arith.constant 0 : i32
    %c0_i32_0 = arith.constant 0 : i32
    %c0_i32_1 = arith.constant 0 : i32
    return %arg0, %c0_i32, %c0_i32_0, %arg1 : i32, i32, i32, i32
  }
  func.func @transform_3(%arg0: i32, %arg1: i32) -> (i32, i32, i32, i32) {
    %c0_i32 = arith.constant 0 : i32
    %c0_i32_0 = arith.constant 0 : i32
    %c0_i32_1 = arith.constant 0 : i32
    return %arg0, %c0_i32, %c0_i32_0, %arg1 : i32, i32, i32, i32
  }
  func.func @transform_4(%arg0: i32, %arg1: i32) -> (i32, i32, i32) {
    %c0_i32 = arith.constant 0 : i32
    %c0_i32_0 = arith.constant 0 : i32
    return %arg0, %c0_i32, %arg1 : i32, i32, i32
  }
}

</mosaic_0001>

<llo_original>
// kernel: tpu_custom_call.1
$region0: #{tpu_custom_call.1}
  #allocation0 [shape = 'u32[]', space=smem, size = 0x4, offset = 0x4, fixed_abs, tag = 'smem constant byte address 0x4 - core index']
  #allocation1 [shape = 'u32[144,128]{1,0:T(1,128)}', space=vmem, size = 0x12000, scoped, tag = 'internal scratch']
  #allocation2 [shape = 'f32[120,256]{1,0:T(8,128)}', space=vmem, size = 0x1e000, scoped, tag = 'scratch operand']
  %s0 = inlined_call_operand.hbm [shape: f32[45], index: 0, kind: input, shape index: {}]
  %s1 = inlined_call_operand.hbm [shape: f32[8,120], index: 1, kind: input, shape index: {}]
  %s2 = inlined_call_operand.hbm [shape: f32[2,3,8,256], index: 2, kind: input, shape index: {}]
  %s3 = inlined_call_operand.hbm [shape: f32[2,8,8,256], index: 3, kind: input, shape index: {}]
  %s4 = inlined_call_operand.hbm [shape: f32[2,8,256], index: 4, kind: output, shape index: {}]
  %s5 = sld [smem:[#allocation0]]
  $region65: #{tpu_custom_call.1} parent=0
    _
  %s7 = ssub.s32 1, %s5
  %s8 = scalar_select 0, %s7, %s5
  $region1: #{tpu_custom_call.1} parent=0
    #allocation3 [shape = 'u8[512]{0}', space=smem, size = 0x200, scoped, tag = 'input window, operand 0, single buffered']
    #allocation4 [shape = 's32[2]{0}', space=sflag, size = 0x8, scoped, tag = 'scoped memory for tpu_custom_call.1']
    #allocation5 [shape = 's32[2]{0}', space=sflag, size = 0x8, scoped, tag = 'scoped memory for tpu_custom_call.1']
    #allocation6 [shape = 's32[2]{0}', space=sflag, size = 0x8, scoped, tag = 'scoped memory for tpu_custom_call.1']
    #allocation7 [shape = 'u8[4096]{0}', space=vmem, size = 0x1000, scoped, tag = 'input window, operand 1, single buffered']
    #allocation8 [shape = 'u8[49152]{0}', space=vmem, size = 0xc000, scoped, tag = 'input window, operand 2']
    #allocation9 [shape = 's32[2]{0}', space=sflag, size = 0x8, scoped, tag = 'scoped memory for tpu_custom_call.1']
    #allocation10 [shape = 'u8[131072]{0}', space=vmem, size = 0x20000, scoped, tag = 'input window, operand 3']
    #allocation11 [shape = 'u8[16384]{0}', space=vmem, size = 0x4000, scoped, tag = 'output window, operand 0']
    %9 = vsyncpa [#allocation6], 0
    %10 = vsyncpa [#allocation4], 0
    %11 = vsyncpa [#allocation9], 0
    %s12 = scalar_lea.sflag [#allocation9], 1
    %13 = vsyncpa %s12, 0
    %14 = vsyncpa [#allocation5], 0
    %s15 = scalar_lea.sflag [#allocation5], 1
    %16 = vsyncpa %s15, 0
    loop: start=0, step=1, limit=4
    $region2: #{tpu_custom_call.1} parent=1 // loop_pre_header
      _
    $region3: #{tpu_custom_call.1} parent=1 // loop_header
      %s18 = sphi 0, %s22
      %p19 = scmp.ge.s32.totalorder %s18, 4
      %s25 = sphi 0, %s37
      %s26 = sphi 0, %s33
      %s27 = sphi 0, %s25
      %s28 = sphi 0, %s26
      %s29 = sphi 0, %s27
      %s30 = sphi 0, %s28
      %s38 = sphi 0, %s38
      %s40 = sphi 0, %s38
      %s41 = sphi 0, %s40
      %s55 = sphi 0, %s41
      %s59 = sphi 0, %s59
      %s61 = sphi 0, %s59
      %s62 = sphi 0, %s61
      %s76 = sphi 0, %s62
      %s84 = sphi 0, %s86
      %s87 = sphi 0, %s84
      %s88 = sphi 0, %s87
      %s104 = sphi 0, %s88
      %s112 = sphi 0, %s114
      %s115 = sphi 0, %s112
      %s116 = sphi 0, %s115
      %s132 = sphi 0, %s116
      %s140 = sphi 0, %s142
      %s143 = sphi 0, %s140
      %s144 = sphi 0, %s143
      %s160 = sphi 0, %s144
    $region4: #{tpu_custom_call.1} parent=1 // loop_header_branch
      %21 = sbr.rel (%p19) target = $region8
    $region5: #{tpu_custom_call.1} parent=1 // loop_body
      %s23 = ssub.s32 %s18, 1
      %s24 = ssub.s32 %s18, 2
      %s31 = sadd.s32 1, %s26
      %p32 = scmp.ge.s32.totalorder %s31, 1
      %s33 = scalar_select %p32, 0, %s31
      %s34 = sadd.s32 1, %s25
      %s35 = scalar_select %p32, %s34, %s25
      %p36 = scmp.ge.s32.totalorder %s35, 2
      %s37 = scalar_select %p36, 0, %s35
      %s39 = sadd.s32 %s38, 1
      %p42 = scmp.eq.s32.totalorder %s18, 1
      %p43 = scmp.ne.s32.totalorder %s38, %s40
      %p44 = scmp.eq.s32.totalorder %s18, 0
      %p45 = por %p43, %p44
      %p46 = scmp.ne.s32.totalorder %s38, %s40
      %p47 = scmp.eq.s32.totalorder %s23, 1
      %p48 = por %p46, %p47
      %p49 = scmp.ne.s32.totalorder %s40, %s41
      %p50 = scmp.eq.s32.totalorder %s23, 0
      %p51 = por %p49, %p50
      %p52 = scmp.ne.s32.totalorder %s40, %s41
      %p53 = scmp.eq.s32.totalorder %s24, 1
      %p54 = por %p52, %p53
      %p56 = scmp.ne.s32.totalorder %s41, %s55
      %p57 = scmp.eq.s32.totalorder %s24, 0
      %p58 = por %p56, %p57
      %s60 = sadd.s32 %s59, 1
      %p63 = scmp.eq.s32.totalorder %s18, 1
      %p64 = scmp.ne.s32.totalorder %s59, %s61
      %p65 = scmp.eq.s32.totalorder %s18, 0
      %p66 = por %p64, %p65
      %p67 = scmp.ne.s32.totalorder %s59, %s61
      %p68 = scmp.eq.s32.totalorder %s23, 1
      %p69 = por %p67, %p68
      %p70 = scmp.ne.s32.totalorder %s61, %s62
      %p71 = scmp.eq.s32.totalorder %s23, 0
      %p72 = por %p70, %p71
      %p73 = scmp.ne.s32.totalorder %s61, %s62
      %p74 = scmp.eq.s32.totalorder %s24, 1
      %p75 = por %p73, %p74
      %p77 = scmp.ne.s32.totalorder %s62, %s76
      %p78 = scmp.eq.s32.totalorder %s24, 0
      %p79 = por %p77, %p78
      %s80 = ssub.s32 %s25, %s37
      %s81 = ssub.s32 %s26, %s33
      %s82 = sor.u32 %s80, %s81
      %p83 = scmp.eq.s32.totalorder %s82, 0
      %s85 = sadd.s32 %s84, 1
      %s86 = scalar_select %p83, %s84, %s85
      %p89 = pneg %p83
      %p90 = scmp.eq.s32.totalorder %s18, 1
      %p91 = por %p89, %p90
      %p92 = scmp.ne.s32.totalorder %s84, %s87
      %p93 = scmp.eq.s32.totalorder %s18, 0
      %p94 = por %p92, %p93
      %p95 = scmp.ne.s32.totalorder %s84, %s87
      %p96 = scmp.eq.s32.totalorder %s23, 1
      %p97 = por %p95, %p96
      %p98 = scmp.ne.s32.totalorder %s87, %s88
      %p99 = scmp.eq.s32.totalorder %s23, 0
      %p100 = por %p98, %p99
      %p101 = scmp.ne.s32.totalorder %s87, %s88
      %p102 = scmp.eq.s32.totalorder %s24, 1
      %p103 = por %p101, %p102
      %p105 = scmp.ne.s32.totalorder %s88, %s104
      %p106 = scmp.eq.s32.totalorder %s24, 0
      %p107 = por %p105, %p106
      %s108 = ssub.s32 %s25, %s37
      %s109 = ssub.s32 %s26, %s33
      %s110 = sor.u32 %s108, %s109
      %p111 = scmp.eq.s32.totalorder %s110, 0
      %s113 = sadd.s32 %s112, 1
      %s114 = scalar_select %p111, %s112, %s113
      %p117 = pneg %p111
      %p118 = scmp.eq.s32.totalorder %s18, 1
      %p119 = por %p117, %p118
      %p120 = scmp.ne.s32.totalorder %s112, %s115
      %p121 = scmp.eq.s32.totalorder %s18, 0
      %p122 = por %p120, %p121
      %p123 = scmp.ne.s32.totalorder %s112, %s115
      %p124 = scmp.eq.s32.totalorder %s23, 1
      %p125 = por %p123, %p124
      %p126 = scmp.ne.s32.totalorder %s115, %s116
      %p127 = scmp.eq.s32.totalorder %s23, 0
      %p128 = por %p126, %p127
      %p129 = scmp.ne.s32.totalorder %s115, %s116
      %p130 = scmp.eq.s32.totalorder %s24, 1
      %p131 = por %p129, %p130
      %p133 = scmp.ne.s32.totalorder %s116, %s132
      %p134 = scmp.eq.s32.totalorder %s24, 0
      %p135 = por %p133, %p134
      %s136 = ssub.s32 %s25, %s37
      %s137 = ssub.s32 %s26, %s33
      %s138 = sor.u32 %s136, %s137
      %p139 = scmp.eq.s32.totalorder %s138, 0
      %s141 = sadd.s32 %s140, 1
      %s142 = scalar_select %p139, %s140, %s141
      %p145 = pneg %p139
      %p146 = scmp.eq.s32.totalorder %s18, 1
      %p147 = por %p145, %p146
      %p148 = scmp.ne.s32.totalorder %s140, %s143
      %p149 = scmp.eq.s32.totalorder %s18, 0
      %p150 = por %p148, %p149
      %p151 = scmp.ne.s32.totalorder %s140, %s143
      %p152 = scmp.eq.s32.totalorder %s23, 1
      %p153 = por %p151, %p152
      %p154 = scmp.ne.s32.totalorder %s143, %s144
      %p155 = scmp.eq.s32.totalorder %s23, 0
      %p156 = por %p154, %p155
      %p157 = scmp.ne.s32.totalorder %s143, %s144
      %p158 = scmp.eq.s32.totalorder %s24, 1
      %p159 = por %p157, %p158
      %p161 = scmp.ne.s32.totalorder %s144, %s160
      %p162 = scmp.eq.s32.totalorder %s24, 0
      %p163 = por %p161, %p162
      %p164 = scmp.le.s32.totalorder 1, %s18
      %p165 = scmp.lt.s32.totalorder %s18, 3
      %p166 = pnand %p164, %p165
      %p167 = pneg %p166
      // Predicated region
      $region9: #{tpu_custom_call.1} parent=5 // pred_check
        _
      $region10: #{tpu_custom_call.1} parent=5 // pred_check_branch
        %169 = sbr.rel (%p166) target = $region12
      $region11: #{tpu_custom_call.1} parent=5 // pred_region
        %s170 = ssub.s32 %s18, 1
        // Predicated region
        $region13: #{tpu_custom_call.1} parent=11 // pred_check
          %p171 = pneg %p51
        $region14: #{tpu_custom_call.1} parent=11 // pred_check_branch
          %173 = sbr.rel (%p171) target = $region16
        $region15: #{tpu_custom_call.1} parent=11 // pred_region
          %s175 = ssub.s32 16, 16
          %176 = vsyncadd [#allocation6], %s175
          %179 = dma.hbm_to_smem %s0, 16, [#allocation3], [#allocation6]
        $region16: #{tpu_custom_call.1} parent=11 // pred_fallthru
          _
        // Predicated region
        $region17: #{tpu_custom_call.1} parent=11 // pred_check
          %p180 = pneg %p72
        $region18: #{tpu_custom_call.1} parent=11 // pred_check_branch
          %182 = sbr.rel (%p180) target = $region20
        $region19: #{tpu_custom_call.1} parent=11 // pred_region
          %s184 = ssub.s32 128, 128
          %185 = vsyncadd [#allocation4], %s184
          %s187 = sshll.u32 [#allocation7], 4
          %s188 = int_to_ptr.vmem [resolvable:$true] %s187
          %190 = dma.hbm_to_vmem [thread:$0]  %s1, 128, %s188, [#allocation4]
        $region20: #{tpu_custom_call.1} parent=11 // pred_fallthru
          _
      $region12: #{tpu_custom_call.1} parent=5 // pred_fallthru
        _
      %p191 = scmp.lt.s32.totalorder %s18, 2
      // Predicated region
      $region21: #{tpu_custom_call.1} parent=5 // pred_check
        %p192 = pneg %p191
      $region22: #{tpu_custom_call.1} parent=5 // pred_check_branch
        %194 = sbr.rel (%p192) target = $region24
      $region23: #{tpu_custom_call.1} parent=5 // pred_region
        // Predicated region
        $region25: #{tpu_custom_call.1} parent=23 // pred_check
          %p195 = pneg %p94
        $region26: #{tpu_custom_call.1} parent=23 // pred_check_branch
          %197 = sbr.rel (%p195) target = $region28
        $region27: #{tpu_custom_call.1} parent=23 // pred_region
          %s198 = sand.u32 %s18, 1
          %s199 = scalar_lea.sflag [#allocation9], %s198
          %s200 = sand.u32 %s84, 1
          %s201 = smul.addr %s200, 48
          %s202 = scalar_lea.vmem [#allocation8], %s201
          %s203 = smul.u32 2, %s26
          %s205 = ssub.s32 768, 768
          %206 = vsyncadd %s199, %s205
          %s207 = smul.addr %s25, 6
          %s208 = sadd.s32 %s203, %s207
          %s209 = smul.addr %s208, 128
          %s210 = scalar_lea.hbm %s2, %s209
          %s211 = sshll.u32 %s202, 4
          %s212 = int_to_ptr.vmem [resolvable:$true] %s211
          %217 = dma.hbm_to_vmem [thread:$0]  %s210, 768, %s212, %s199, 256, 256, 16
        $region28: #{tpu_custom_call.1} parent=23 // pred_fallthru
          _
        // Predicated region
        $region29: #{tpu_custom_call.1} parent=23 // pred_check
          %p218 = pneg %p122
        $region30: #{tpu_custom_call.1} parent=23 // pred_check_branch
          %220 = sbr.rel (%p218) target = $region32
        $region31: #{tpu_custom_call.1} parent=23 // pred_region
          %s221 = sand.u32 %s18, 1
          %s222 = scalar_lea.sflag [#allocation9], %s221
          %s223 = sand.u32 %s112, 1
          %s224 = smul.addr %s223, 128
          %s225 = scalar_lea.vmem [#allocation10], %s224
          %s226 = smul.u32 2, %s26
          %s228 = ssub.s32 2048, 2048
          %229 = vsyncadd %s222, %s228
          %s230 = smul.addr %s25, 16
          %s231 = sadd.s32 %s226, %s230
          %s232 = smul.addr %s231, 128
          %s233 = scalar_lea.hbm %s3, %s232
          %s234 = sshll.u32 %s225, 4
          %s235 = int_to_ptr.vmem [resolvable:$true] %s234
          %240 = dma.hbm_to_vmem [thread:$0]  %s233, 2048, %s235, %s222, 256, 256, 16
        $region32: #{tpu_custom_call.1} parent=23 // pred_fallthru
          _
      $region24: #{tpu_custom_call.1} parent=5 // pred_fallthru
        _
      %p241 = scmp.le.s32.totalorder 1, %s18
      %p242 = scmp.lt.s32.totalorder %s18, 3
      %p243 = pnand %p241, %p242
      %p244 = pneg %p243
      // Predicated region
      $region33: #{tpu_custom_call.1} parent=5 // pred_check
        _
      $region34: #{tpu_custom_call.1} parent=5 // pred_check_branch
        %246 = sbr.rel (%p243) target = $region36
      $region35: #{tpu_custom_call.1} parent=5 // pred_region
        %s247 = ssub.s32 %s18, 1
        // Predicated region
        $region37: #{tpu_custom_call.1} parent=35 // pred_check
          %p248 = pneg %p51
        $region38: #{tpu_custom_call.1} parent=35 // pred_check_branch
          %250 = sbr.rel (%p248) target = $region40
        $region39: #{tpu_custom_call.1} parent=35 // pred_region
          %251 = dma.done [#allocation6], 16
        $region40: #{tpu_custom_call.1} parent=35 // pred_fallthru
          _
        // Predicated region
        $region41: #{tpu_custom_call.1} parent=35 // pred_check
          %p252 = pneg %p72
        $region42: #{tpu_custom_call.1} parent=35 // pred_check_branch
          %254 = sbr.rel (%p252) target = $region44
        $region43: #{tpu_custom_call.1} parent=35 // pred_region
          %255 = dma.done [#allocation4], 128
        $region44: #{tpu_custom_call.1} parent=35 // pred_fallthru
          _
        %s256 = sand.u32 %s23, 1
        %s257 = scalar_lea.sflag [#allocation9], %s256
        %s258 = sand.u32 %s87, 1
        %s259 = smul.addr %s258, 48
        %s260 = scalar_lea.vmem [#allocation8], %s259
        // Predicated region
        $region45: #{tpu_custom_call.1} parent=35 // pred_check
          %p261 = pneg %p100
        $region46: #{tpu_custom_call.1} parent=35 // pred_check_branch
          %263 = sbr.rel (%p261) target = $region48
        $region47: #{tpu_custom_call.1} parent=35 // pred_region
          %264 = dma.done %s257, 768
        $region48: #{tpu_custom_call.1} parent=35 // pred_fallthru
          _
        %s265 = sand.u32 %s23, 1
        %s266 = scalar_lea.sflag [#allocation9], %s265
        %s267 = sand.u32 %s115, 1
        %s268 = smul.addr %s267, 128
        %s269 = scalar_lea.vmem [#allocation10], %s268
        // Predicated region
        $region49: #{tpu_custom_call.1} parent=35 // pred_check
          %p270 = pneg %p128
        $region50: #{tpu_custom_call.1} parent=35 // pred_check_branch
          %272 = sbr.rel (%p270) target = $region52
        $region51: #{tpu_custom_call.1} parent=35 // pred_region
          %273 = dma.done %s266, 2048
        $region52: #{tpu_custom_call.1} parent=35 // pred_fallthru
          _
        %274 = sfence
        %p275 = pneg %p51
        %p276 = pneg %p48
        %p277 = pneg %p72
        %p278 = pneg %p69
        %s279 = sand.u32 %s23, 1
        %s280 = scalar_lea.sflag [#allocation9], %s279
        %s281 = sand.u32 %s87, 1
        %s282 = smul.addr %s281, 48
        %s283 = scalar_lea.vmem [#allocation8], %s282
        %p284 = pneg %p100
        %p285 = pneg %p97
        %s286 = sand.u32 %s23, 1
        %s287 = scalar_lea.sflag [#allocation9], %s286
        %s288 = sand.u32 %s115, 1
        %s289 = smul.addr %s288, 128
        %s290 = scalar_lea.vmem [#allocation10], %s289
        %p291 = pneg %p128
        %p292 = pneg %p125
        %p293 = pneg %p156
        %p294 = pneg %p153
        %s295 = sand.u32 %s143, 1
        %s296 = scalar_lea.sflag [#allocation5], %s295
        %s297 = sand.u32 %s143, 1
        %s298 = smul.addr %s297, 16
        %s299 = scalar_lea.vmem [#allocation11], %s298
        %s300 = smul.u32 2, %s28
        %s301 = smul.u32 2, %s28
        %s302 = smul.u32 2, %s28
        %v303 = vld [vmem:[%s260] sm:$0xff]
        %v304 = vld [vmem:[%s260 + $0x8] sm:$0xff]
        %s305 = sld [smem:[#allocation3]]
        %v306 = vstv %s305
        %v307 = vsub.f32 %v303, %v306
        %v308 = vsub.f32 %v304, %v306
        %v309 = vmul.f32 %v307, %v307
        %v310 = vmul.f32 %v308, %v308
        %s311 = scalar_lea.vmem %s260, 16 [#allocation8]
        %v312 = vld [vmem:[%s311] sm:$0xff]
        %v313 = vld [vmem:[%s311 + $0x8] sm:$0xff]
        %s314 = sld [smem:[#allocation3 + $0x1]]
        %v315 = vstv %s314
        %v316 = vsub.f32 %v312, %v315
        %v317 = vsub.f32 %v313, %v315
        %v318 = vmul.f32 %v316, %v316
        %v319 = vmul.f32 %v317, %v317
        %v320 = vadd.f32 %v309, %v318
        %v321 = vadd.f32 %v310, %v319
        %s322 = scalar_lea.vmem %s260, 32 [#allocation8]
        %v323 = vld [vmem:[%s322] sm:$0xff]
        %v324 = vld [vmem:[%s322 + $0x8] sm:$0xff]
        %s325 = sld [smem:[#allocation3 + $0x2]]
        %v326 = vstv %s325
        %v327 = vsub.f32 %v323, %v326
        %v328 = vsub.f32 %v324, %v326
        %v329 = vmul.f32 %v327, %v327
        %v330 = vmul.f32 %v328, %v328
        %v331 = vadd.f32 %v320, %v329
        %v332 = vadd.f32 %v321, %v330
        %v333 = vrsqrt.pop %v331
        %v334 = vmul.f32 %v331, %v333
        %vm335 = vcmp.eq.f32.partialorder %v331, inf
        %v336 = vsel %vm335, %v331, %v334
        %vm337 = vcmp.eq.f32.partialorder %v331, 0.0
        %v338 = vand.u32 %v331, 2147483648
        %v339 = vsel %vm337, %v338, %v336
        %v340 = vrsqrt.pop %v332
        %v341 = vmul.f32 %v332, %v340
        %vm342 = vcmp.eq.f32.partialorder %v332, inf
        %v343 = vsel %vm342, %v332, %v341
        %vm344 = vcmp.eq.f32.partialorder %v332, 0.0
        %v345 = vand.u32 %v332, 2147483648
        %v346 = vsel %vm344, %v345, %v343
        %v347 = vmul.f32 %v339, 1.6666666
        %v348 = vmul.f32 %v346, 1.6666666
        %v349 = vsub.f32 1.0, %v347
        %v350 = vsub.f32 1.0, %v348
        %v351 = vmax.f32 %v349, 0.0
        %v352 = vmax.f32 %v350, 0.0
        %v353 = vld [vmem:[%s269] sm:$0xff]
        %v354 = vld [vmem:[%s269 + $0x8] sm:$0xff]
        %v355 = vlaneseq
        %v356 = vshrl.u32 %v355, 7
        %v357 = vsub.s32 0, %v356
        %v358 = vrot.slane %v351, %v357
        %v359 = vlaneseq
        %v360 = vshrl.u32 %v359, 7
        %v361 = vsub.s32 0, %v360
        %v362 = vrot.slane %v352, %v361
        %v363 = vmul.f32 %v358, %v353
        %v364 = vmul.f32 %v362, %v354
        %s365 = scalar_lea.vmem %s269, 16 [#allocation10]
        %v366 = vld [vmem:[%s365] sm:$0xff]
        %v367 = vld [vmem:[%s365 + $0x8] sm:$0xff]
        %v368 = vlaneseq
        %v369 = vshrl.u32 %v368, 7
        %v370 = vsub.s32 1, %v369
        %v371 = vrot.slane %v351, %v370
        %v372 = vlaneseq
        %v373 = vshrl.u32 %v372, 7
        %v374 = vsub.s32 1, %v373
        %v375 = vrot.slane %v352, %v374
        %v376 = vmul.f32 %v371, %v366
        %v377 = vmul.f32 %v375, %v367
        %v378 = vadd.f32 %v363, %v376
        %v379 = vadd.f32 %v364, %v377
        %s380 = scalar_lea.vmem %s269, 32 [#allocation10]
        %v381 = vld [vmem:[%s380] sm:$0xff]
        %v382 = vld [vmem:[%s380 + $0x8] sm:$0xff]
        %v383 = vlaneseq
        %v384 = vshrl.u32 %v383, 7
        %v385 = vsub.s32 2, %v384
        %v386 = vrot.slane %v351, %v385
        %v387 = vlaneseq
        %v388 = vshrl.u32 %v387, 7
        %v389 = vsub.s32 2, %v388
        %v390 = vrot.slane %v352, %v389
        %v391 = vmul.f32 %v386, %v381
        %v392 = vmul.f32 %v390, %v382
        %v393 = vadd.f32 %v378, %v391
        %v394 = vadd.f32 %v379, %v392
        %s395 = scalar_lea.vmem %s269, 48 [#allocation10]
        %v396 = vld [vmem:[%s395] sm:$0xff]
        %v397 = vld [vmem:[%s395 + $0x8] sm:$0xff]
        %v398 = vlaneseq
        %v399 = vshrl.u32 %v398, 7
        %v400 = vsub.s32 3, %v399
        %v401 = vrot.slane %v351, %v400
        %v402 = vlaneseq
        %v403 = vshrl.u32 %v402, 7
        %v404 = vsub.s32 3, %v403
        %v405 = vrot.slane %v352, %v404
        %v406 = vmul.f32 %v401, %v396
        %v407 = vmul.f32 %v405, %v397
        %v408 = vadd.f32 %v393, %v406
        %v409 = vadd.f32 %v394, %v407
        %s410 = scalar_lea.vmem %s269, 64 [#allocation10]
        %v411 = vld [vmem:[%s410] sm:$0xff]
        %v412 = vld [vmem:[%s410 + $0x8] sm:$0xff]
        %v413 = vlaneseq
        %v414 = vshrl.u32 %v413, 7
        %v415 = vsub.s32 4, %v414
        %v416 = vrot.slane %v351, %v415
        %v417 = vlaneseq
        %v418 = vshrl.u32 %v417, 7
        %v419 = vsub.s32 4, %v418
        %v420 = vrot.slane %v352, %v419
        %v421 = vmul.f32 %v416, %v411
        %v422 = vmul.f32 %v420, %v412
        %v423 = vadd.f32 %v408, %v421
        %v424 = vadd.f32 %v409, %v422
        %s425 = scalar_lea.vmem %s269, 80 [#allocation10]
        %v426 = vld [vmem:[%s425] sm:$0xff]
        %v427 = vld [vmem:[%s425 + $0x8] sm:$0xff]
        %v428 = vlaneseq
        %v429 = vshrl.u32 %v428, 7
        %v430 = vsub.s32 5, %v429
        %v431 = vrot.slane %v351, %v430
        %v432 = vlaneseq
        %v433 = vshrl.u32 %v432, 7
        %v434 = vsub.s32 5, %v433
        %v435 = vrot.slane %v352, %v434
        %v436 = vmul.f32 %v431, %v426
        %v437 = vmul.f32 %v435, %v427
        %v438 = vadd.f32 %v423, %v436
        %v439 = vadd.f32 %v424, %v437
        %s440 = scalar_lea.vmem %s269, 96 [#allocation10]
        %v441 = vld [vmem:[%s440] sm:$0xff]
        %v442 = vld [vmem:[%s440 + $0x8] sm:$0xff]
        %v443 = vlaneseq
        %v444 = vshrl.u32 %v443, 7
        %v445 = vsub.s32 6, %v444
        %v446 = vrot.slane %v351, %v445
        %v447 = vlaneseq
        %v448 = vshrl.u32 %v447, 7
        %v449 = vsub.s32 6, %v448
        %v450 = vrot.slane %v352, %v449
        %v451 = vmul.f32 %v446, %v441
        %v452 = vmul.f32 %v450, %v442
        %v453 = vadd.f32 %v438, %v451
        %v454 = vadd.f32 %v439, %v452
        %s455 = scalar_lea.vmem %s269, 112 [#allocation10]
        %v456 = vld [vmem:[%s455] sm:$0xff]
        %v457 = vld [vmem:[%s455 + $0x8] sm:$0xff]
        %v458 = vlaneseq
        %v459 = vshrl.u32 %v458, 7
        %v460 = vsub.s32 7, %v459
        %v461 = vrot.slane %v351, %v460
        %v462 = vlaneseq
        %v463 = vshrl.u32 %v462, 7
        %v464 = vsub.s32 7, %v463
        %v465 = vrot.slane %v352, %v464
        %v466 = vmul.f32 %v461, %v456
        %v467 = vmul.f32 %v465, %v457
        %v468 = vadd.f32 %v453, %v466
        %v469 = vadd.f32 %v454, %v467
        %470 = vst [vmem:[#allocation2] sm:$0xff] %v468
        %471 = vst [vmem:[#allocation2 + $0x8] sm:$0xff] %v469
        %v472 = vld [vmem:[%s260] sm:$0xff]
        %v473 = vld [vmem:[%s260 + $0x8] sm:$0xff]
        %s474 = sld [smem:[#allocation3 + $0x3]]
        %v475 = vstv %s474
        %v476 = vsub.f32 %v472, %v475
        %v477 = vsub.f32 %v473, %v475
        %v478 = vmul.f32 %v476, %v476
        %v479 = vmul.f32 %v477, %v477
        %v480 = vld [vmem:[%s311] sm:$0xff]
        %v481 = vld [vmem:[%s311 + $0x8] sm:$0xff]
        %s482 = sld [smem:[#allocation3 + $0x4]]
        %v483 = vstv %s482
        %v484 = vsub.f32 %v480, %v483
        %v485 = vsub.f32 %v481, %v483
        %v486 = vmul.f32 %v484, %v484
        %v487 = vmul.f32 %v485, %v485
        %v488 = vadd.f32 %v478, %v486
        %v489 = vadd.f32 %v479, %v487
        %v490 = vld [vmem:[%s322] sm:$0xff]
        %v491 = vld [vmem:[%s322 + $0x8] sm:$0xff]
        %s492 = sld [smem:[#allocation3 + $0x5]]
        %v493 = vstv %s492
        %v494 = vsub.f32 %v490, %v493
        %v495 = vsub.f32 %v491, %v493
        %v496 = vmul.f32 %v494, %v494
        %v497 = vmul.f32 %v495, %v495
        %v498 = vadd.f32 %v488, %v496
        %v499 = vadd.f32 %v489, %v497
        %v500 = vrsqrt.pop %v498
        %v501 = vmul.f32 %v498, %v500
        %vm502 = vcmp.eq.f32.partialorder %v498, inf
        %v503 = vsel %vm502, %v498, %v501
        %vm504 = vcmp.eq.f32.partialorder %v498, 0.0
        %v505 = vand.u32 %v498, 2147483648
        %v506 = vsel %vm504, %v505, %v503
        %v507 = vrsqrt.pop %v499
        %v508 = vmul.f32 %v499, %v507
        %vm509 = vcmp.eq.f32.partialorder %v499, inf
        %v510 = vsel %vm509, %v499, %v508
        %vm511 = vcmp.eq.f32.partialorder %v499, 0.0
        %v512 = vand.u32 %v499, 2147483648
        %v513 = vsel %vm511, %v512, %v510
        %v514 = vmul.f32 %v506, 1.6666666
        %v515 = vmul.f32 %v513, 1.6666666
        %v516 = vsub.f32 1.0, %v514
        %v517 = vsub.f32 1.0, %v515
        %v518 = vmax.f32 %v516, 0.0
        %v519 = vmax.f32 %v517, 0.0
        %v520 = vld [vmem:[%s269] sm:$0xff]
        %v521 = vld [vmem:[%s269 + $0x8] sm:$0xff]
        %v522 = vlaneseq
        %v523 = vshrl.u32 %v522, 7
        %v524 = vsub.s32 0, %v523
        %v525 = vrot.slane %v518, %v524
        %v526 = vlaneseq
        %v527 = vshrl.u32 %v526, 7
        %v528 = vsub.s32 0, %v527
        %v529 = vrot.slane %v519, %v528
        %v530 = vmul.f32 %v525, %v520
        %v531 = vmul.f32 %v529, %v521
        %v532 = vld [vmem:[%s365] sm:$0xff]
        %v533 = vld [vmem:[%s365 + $0x8] sm:$0xff]
        %v534 = vlaneseq
        %v535 = vshrl.u32 %v534, 7
        %v536 = vsub.s32 1, %v535
        %v537 = vrot.slane %v518, %v536
        %v538 = vlaneseq
        %v539 = vshrl.u32 %v538, 7
        %v540 = vsub.s32 1, %v539
        %v541 = vrot.slane %v519, %v540
        %v542 = vmul.f32 %v537, %v532
        %v543 = vmul.f32 %v541, %v533
        %v544 = vadd.f32 %v530, %v542
        %v545 = vadd.f32 %v531, %v543
        %v546 = vld [vmem:[%s380] sm:$0xff]
        %v547 = vld [vmem:[%s380 + $0x8] sm:$0xff]
        %v548 = vlaneseq
        %v549 = vshrl.u32 %v548, 7
        %v550 = vsub.s32 2, %v549
        %v551 = vrot.slane %v518, %v550
        %v552 = vlaneseq
        %v553 = vshrl.u32 %v552, 7
        %v554 = vsub.s32 2, %v553
        %v555 = vrot.slane %v519, %v554
        %v556 = vmul.f32 %v551, %v546
        %v557 = vmul.f32 %v555, %v547
        %v558 = vadd.f32 %v544, %v556
        %v559 = vadd.f32 %v545, %v557
        %v560 = vld [vmem:[%s395] sm:$0xff]
        %v561 = vld [vmem:[%s395 + $0x8] sm:$0xff]
        %v562 = vlaneseq
        %v563 = vshrl.u32 %v562, 7
        %v564 = vsub.s32 3, %v563
        %v565 = vrot.slane %v518, %v564
        %v566 = vlaneseq
        %v567 = vshrl.u32 %v566, 7
        %v568 = vsub.s32 3, %v567
        %v569 = vrot.slane %v519, %v568
        %v570 = vmul.f32 %v565, %v560
        %v571 = vmul.f32 %v569, %v561
        %v572 = vadd.f32 %v558, %v570
        %v573 = vadd.f32 %v559, %v571
        %v574 = vld [vmem:[%s410] sm:$0xff]
        %v575 = vld [vmem:[%s410 + $0x8] sm:$0xff]
        %v576 = vlaneseq
        %v577 = vshrl.u32 %v576, 7
        %v578 = vsub.s32 4, %v577
        %v579 = vrot.slane %v518, %v578
        %v580 = vlaneseq
        %v581 = vshrl.u32 %v580, 7
        %v582 = vsub.s32 4, %v581
        %v583 = vrot.slane %v519, %v582
        %v584 = vmul.f32 %v579, %v574
        %v585 = vmul.f32 %v583, %v575
        %v586 = vadd.f32 %v572, %v584
        %v587 = vadd.f32 %v573, %v585
        %v588 = vld [vmem:[%s425] sm:$0xff]
        %v589 = vld [vmem:[%s425 + $0x8] sm:$0xff]
        %v590 = vlaneseq
        %v591 = vshrl.u32 %v590, 7
        %v592 = vsub.s32 5, %v591
        %v593 = vrot.slane %v518, %v592
        %v594 = vlaneseq
        %v595 = vshrl.u32 %v594, 7
        %v596 = vsub.s32 5, %v595
        %v597 = vrot.slane %v519, %v596
        %v598 = vmul.f32 %v593, %v588
        %v599 = vmul.f32 %v597, %v589
        %v600 = vadd.f32 %v586, %v598
        %v601 = vadd.f32 %v587, %v599
        %v602 = vld [vmem:[%s440] sm:$0xff]
        %v603 = vld [vmem:[%s440 + $0x8] sm:$0xff]
        %v604 = vlaneseq
        %v605 = vshrl.u32 %v604, 7
        %v606 = vsub.s32 6, %v605
        %v607 = vrot.slane %v518, %v606
        %v608 = vlaneseq
        %v609 = vshrl.u32 %v608, 7
        %v610 = vsub.s32 6, %v609
        %v611 = vrot.slane %v519, %v610
        %v612 = vmul.f32 %v607, %v602
        %v613 = vmul.f32 %v611, %v603
        %v614 = vadd.f32 %v600, %v612
        %v615 = vadd.f32 %v601, %v613
        %v616 = vld [vmem:[%s455] sm:$0xff]
        %v617 = vld [vmem:[%s455 + $0x8] sm:$0xff]
        %v618 = vlaneseq
        %v619 = vshrl.u32 %v618, 7
        %v620 = vsub.s32 7, %v619
        %v621 = vrot.slane %v518, %v620
        %v622 = vlaneseq
        %v623 = vshrl.u32 %v622, 7
        %v624 = vsub.s32 7, %v623
        %v625 = vrot.slane %v519, %v624
        %v626 = vmul.f32 %v621, %v616
        %v627 = vmul.f32 %v625, %v617
        %v628 = vadd.f32 %v614, %v626
        %v629 = vadd.f32 %v615, %v627
        %630 = vst [vmem:[#allocation2 + $0x10] sm:$0xff] %v628
        %631 = vst [vmem:[#allocation2 + $0x18] sm:$0xff] %v629
        %v632 = vld [vmem:[%s260] sm:$0xff]
        %v633 = vld [vmem:[%s260 + $0x8] sm:$0xff]
        %s634 = sld [smem:[#allocation3 + $0x6]]
        %v635 = vstv %s634
        %v636 = vsub.f32 %v632, %v635
        %v637 = vsub.f32 %v633, %v635
        %v638 = vmul.f32 %v636, %v636
        %v639 = vmul.f32 %v637, %v637
        %v640 = vld [vmem:[%s311] sm:$0xff]
        %v641 = vld [vmem:[%s311 + $0x8] sm:$0xff]
        %s642 = sld [smem:[#allocation3 + $0x7]]
        %v643 = vstv %s642
        %v644 = vsub.f32 %v640, %v643
        %v645 = vsub.f32 %v641, %v643
        %v646 = vmul.f32 %v644, %v644
        %v647 = vmul.f32 %v645, %v645
        %v648 = vadd.f32 %v638, %v646
        %v649 = vadd.f32 %v639, %v647
        %v650 = vld [vmem:[%s322] sm:$0xff]
        %v651 = vld [vmem:[%s322 + $0x8] sm:$0xff]
        %s652 = sld [smem:[#allocation3 + $0x8]]
        %v653 = vstv %s652
        %v654 = vsub.f32 %v650, %v653
        %v655 = vsub.f32 %v651, %v653
        %v656 = vmul.f32 %v654, %v654
        %v657 = vmul.f32 %v655, %v655
        %v658 = vadd.f32 %v648, %v656
        %v659 = vadd.f32 %v649, %v657
        %v660 = vrsqrt.pop %v658
        %v661 = vmul.f32 %v658, %v660
        %vm662 = vcmp.eq.f32.partialorder %v658, inf
        %v663 = vsel %vm662, %v658, %v661
        %vm664 = vcmp.eq.f32.partialorder %v658, 0.0
        %v665 = vand.u32 %v658, 2147483648
        %v666 = vsel %vm664, %v665, %v663
        %v667 = vrsqrt.pop %v659
        %v668 = vmul.f32 %v659, %v667
        %vm669 = vcmp.eq.f32.partialorder %v659, inf
        %v670 = vsel %vm669, %v659, %v668
        %vm671 = vcmp.eq.f32.partialorder %v659, 0.0
        %v672 = vand.u32 %v659, 2147483648
        %v673 = vsel %vm671, %v672, %v670
        %v674 = vmul.f32 %v666, 1.6666666
        %v675 = vmul.f32 %v673, 1.6666666
        %v676 = vsub.f32 1.0, %v674
        %v677 = vsub.f32 1.0, %v675
        %v678 = vmax.f32 %v676, 0.0
        %v679 = vmax.f32 %v677, 0.0
        %v680 = vld [vmem:[%s269] sm:$0xff]
        %v681 = vld [vmem:[%s269 + $0x8] sm:$0xff]
        %v682 = vlaneseq
        %v683 = vshrl.u32 %v682, 7
        %v684 = vsub.s32 0, %v683
        %v685 = vrot.slane %v678, %v684
        %v686 = vlaneseq
        %v687 = vshrl.u32 %v686, 7
        %v688 = vsub.s32 0, %v687
        %v689 = vrot.slane %v679, %v688
        %v690 = vmul.f32 %v685, %v680
        %v691 = vmul.f32 %v689, %v681
        %v692 = vld [vmem:[%s365] sm:$0xff]
        %v693 = vld [vmem:[%s365 + $0x8] sm:$0xff]
        %v694 = vlaneseq
        %v695 = vshrl.u32 %v694, 7
        %v696 = vsub.s32 1, %v695
        %v697 = vrot.slane %v678, %v696
        %v698 = vlaneseq
        %v699 = vshrl.u32 %v698, 7
        %v700 = vsub.s32 1, %v699
        %v701 = vrot.slane %v679, %v700
        %v702 = vmul.f32 %v697, %v692
        %v703 = vmul.f32 %v701, %v693
        %v704 = vadd.f32 %v690, %v702
        %v705 = vadd.f32 %v691, %v703
        %v706 = vld [vmem:[%s380] sm:$0xff]
        %v707 = vld [vmem:[%s380 + $0x8] sm:$0xff]
        %v708 = vlaneseq
        %v709 = vshrl.u32 %v708, 7
        %v710 = vsub.s32 2, %v709
        %v711 = vrot.slane %v678, %v710
        %v712 = vlaneseq
        %v713 = vshrl.u32 %v712, 7
        %v714 = vsub.s32 2, %v713
        %v715 = vrot.slane %v679, %v714
        %v716 = vmul.f32 %v711, %v706
        %v717 = vmul.f32 %v715, %v707
        %v718 = vadd.f32 %v704, %v716
        %v719 = vadd.f32 %v705, %v717
        %v720 = vld [vmem:[%s395] sm:$0xff]
        %v721 = vld [vmem:[%s395 + $0x8] sm:$0xff]
        %v722 = vlaneseq
        %v723 = vshrl.u32 %v722, 7
        %v724 = vsub.s32 3, %v723
        %v725 = vrot.slane %v678, %v724
        %v726 = vlaneseq
        %v727 = vshrl.u32 %v726, 7
        %v728 = vsub.s32 3, %v727
        %v729 = vrot.slane %v679, %v728
        %v730 = vmul.f32 %v725, %v720
        %v731 = vmul.f32 %v729, %v721
        %v732 = vadd.f32 %v718, %v730
        %v733 = vadd.f32 %v719, %v731
        %v734 = vld [vmem:[%s410] sm:$0xff]
        %v735 = vld [vmem:[%s410 + $0x8] sm:$0xff]
        %v736 = vlaneseq
        %v737 = vshrl.u32 %v736, 7
        %v738 = vsub.s32 4, %v737
        %v739 = vrot.slane %v678, %v738
        %v740 = vlaneseq
        %v741 = vshrl.u32 %v740, 7
        %v742 = vsub.s32 4, %v741
        %v743 = vrot.slane %v679, %v742
        %v744 = vmul.f32 %v739, %v734
        %v745 = vmul.f32 %v743, %v735
        %v746 = vadd.f32 %v732, %v744
        %v747 = vadd.f32 %v733, %v745
        %v748 = vld [vmem:[%s425] sm:$0xff]
        %v749 = vld [vmem:[%s425 + $0x8] sm:$0xff]
        %v750 = vlaneseq
        %v751 = vshrl.u32 %v750, 7
        %v752 = vsub.s32 5, %v751
        %v753 = vrot.slane %v678, %v752
        %v754 = vlaneseq
        %v755 = vshrl.u32 %v754, 7
        %v756 = vsub.s32 5, %v755
        %v757 = vrot.slane %v679, %v756
        %v758 = vmul.f32 %v753, %v748
        %v759 = vmul.f32 %v757, %v749
        %v760 = vadd.f32 %v746, %v758
        %v761 = vadd.f32 %v747, %v759
        %v762 = vld [vmem:[%s440] sm:$0xff]
        %v763 = vld [vmem:[%s440 + $0x8] sm:$0xff]
        %v764 = vlaneseq
        %v765 = vshrl.u32 %v764, 7
        %v766 = vsub.s32 6, %v765
        %v767 = vrot.slane %v678, %v766
        %v768 = vlaneseq
        %v769 = vshrl.u32 %v768, 7
        %v770 = vsub.s32 6, %v769
        %v771 = vrot.slane %v679, %v770
        %v772 = vmul.f32 %v767, %v762
        %v773 = vmul.f32 %v771, %v763
        %v774 = vadd.f32 %v760, %v772
        %v775 = vadd.f32 %v761, %v773
        %v776 = vld [vmem:[%s455] sm:$0xff]
        %v777 = vld [vmem:[%s455 + $0x8] sm:$0xff]
        %v778 = vlaneseq
        %v779 = vshrl.u32 %v778, 7
        %v780 = vsub.s32 7, %v779
        %v781 = vrot.slane %v678, %v780
        %v782 = vlaneseq
        %v783 = vshrl.u32 %v782, 7
        %v784 = vsub.s32 7, %v783
        %v785 = vrot.slane %v679, %v784
        %v786 = vmul.f32 %v781, %v776
        %v787 = vmul.f32 %v785, %v777
        %v788 = vadd.f32 %v774, %v786
        %v789 = vadd.f32 %v775, %v787
        %790 = vst [vmem:[#allocation2 + $0x20] sm:$0xff] %v788
        %791 = vst [vmem:[#allocation2 + $0x28] sm:$0xff] %v789
        %v792 = vld [vmem:[%s260] sm:$0xff]
        %v793 = vld [vmem:[%s260 + $0x8] sm:$0xff]
        %s794 = sld [smem:[#allocation3 + $0x9]]
        %v795 = vstv %s794
        %v796 = vsub.f32 %v792, %v795
        %v797 = vsub.f32 %v793, %v795
        %v798 = vmul.f32 %v796, %v796
        %v799 = vmul.f32 %v797, %v797
        %v800 = vld [vmem:[%s311] sm:$0xff]
        %v801 = vld [vmem:[%s311 + $0x8] sm:$0xff]
        %s802 = sld [smem:[#allocation3 + $0xa]]
        %v803 = vstv %s802
        %v804 = vsub.f32 %v800, %v803
        %v805 = vsub.f32 %v801, %v803
        %v806 = vmul.f32 %v804, %v804
        %v807 = vmul.f32 %v805, %v805
        %v808 = vadd.f32 %v798, %v806
        %v809 = vadd.f32 %v799, %v807
        %v810 = vld [vmem:[%s322] sm:$0xff]
        %v811 = vld [vmem:[%s322 + $0x8] sm:$0xff]
        %s812 = sld [smem:[#allocation3 + $0xb]]
        %v813 = vstv %s812
        %v814 = vsub.f32 %v810, %v813
        %v815 = vsub.f32 %v811, %v813
        %v816 = vmul.f32 %v814, %v814
        %v817 = vmul.f32 %v815, %v815
        %v818 = vadd.f32 %v808, %v816
        %v819 = vadd.f32 %v809, %v817
        %v820 = vrsqrt.pop %v818
        %v821 = vmul.f32 %v818, %v820
        %vm822 = vcmp.eq.f32.partialorder %v818, inf
        %v823 = vsel %vm822, %v818, %v821
        %vm824 = vcmp.eq.f32.partialorder %v818, 0.0
        %v825 = vand.u32 %v818, 2147483648
        %v826 = vsel %vm824, %v825, %v823
        %v827 = vrsqrt.pop %v819
        %v828 = vmul.f32 %v819, %v827
        %vm829 = vcmp.eq.f32.partialorder %v819, inf
        %v830 = vsel %vm829, %v819, %v828
        %vm831 = vcmp.eq.f32.partialorder %v819, 0.0
        %v832 = vand.u32 %v819, 2147483648
        %v833 = vsel %vm831, %v832, %v830
        %v834 = vmul.f32 %v826, 1.6666666
        %v835 = vmul.f32 %v833, 1.6666666
        %v836 = vsub.f32 1.0, %v834
        %v837 = vsub.f32 1.0, %v835
        %v838 = vmax.f32 %v836, 0.0
        %v839 = vmax.f32 %v837, 0.0
        %v840 = vld [vmem:[%s269] sm:$0xff]
        %v841 = vld [vmem:[%s269 + $0x8] sm:$0xff]
        %v842 = vlaneseq
        %v843 = vshrl.u32 %v842, 7
        %v844 = vsub.s32 0, %v843
        %v845 = vrot.slane %v838, %v844
        %v846 = vlaneseq
        %v847 = vshrl.u32 %v846, 7
        %v848 = vsub.s32 0, %v847
        %v849 = vrot.slane %v839, %v848
        %v850 = vmul.f32 %v845, %v840
        %v851 = vmul.f32 %v849, %v841
        %v852 = vld [vmem:[%s365] sm:$0xff]
        %v853 = vld [vmem:[%s365 + $0x8] sm:$0xff]
        %v854 = vlaneseq
        %v855 = vshrl.u32 %v854, 7
        %v856 = vsub.s32 1, %v855
        %v857 = vrot.slane %v838, %v856
        %v858 = vlaneseq
        %v859 = vshrl.u32 %v858, 7
        %v860 = vsub.s32 1, %v859
        %v861 = vrot.slane %v839, %v860
        %v862 = vmul.f32 %v857, %v852
        %v863 = vmul.f32 %v861, %v853
        %v864 = vadd.f32 %v850, %v862
        %v865 = vadd.f32 %v851, %v863
        %v866 = vld [vmem:[%s380] sm:$0xff]
        %v867 = vld [vmem:[%s380 + $0x8] sm:$0xff]
        %v868 = vlaneseq
        %v869 = vshrl.u32 %v868, 7
        %v870 = vsub.s32 2, %v869
        %v871 = vrot.slane %v838, %v870
        %v872 = vlaneseq
        %v873 = vshrl.u32 %v872, 7
        %v874 = vsub.s32 2, %v873
        %v875 = vrot.slane %v839, %v874
        %v876 = vmul.f32 %v871, %v866
        %v877 = vmul.f32 %v875, %v867
        %v878 = vadd.f32 %v864, %v876
        %v879 = vadd.f32 %v865, %v877
        %v880 = vld [vmem:[%s395] sm:$0xff]
        %v881 = vld [vmem:[%s395 + $0x8] sm:$0xff]
        %v882 = vlaneseq
        %v883 = vshrl.u32 %v882, 7
        %v884 = vsub.s32 3, %v883
        %v885 = vrot.slane %v838, %v884
        %v886 = vlaneseq
        %v887 = vshrl.u32 %v886, 7
        %v888 = vsub.s32 3, %v887
        %v889 = vrot.slane %v839, %v888
        %v890 = vmul.f32 %v885, %v880
        %v891 = vmul.f32 %v889, %v881
        %v892 = vadd.f32 %v878, %v890
        %v893 = vadd.f32 %v879, %v891
        %v894 = vld [vmem:[%s410] sm:$0xff]
        %v895 = vld [vmem:[%s410 + $0x8] sm:$0xff]
        %v896 = vlaneseq
        %v897 = vshrl.u32 %v896, 7
        %v898 = vsub.s32 4, %v897
        %v899 = vrot.slane %v838, %v898
        %v900 = vlaneseq
        %v901 = vshrl.u32 %v900, 7
        %v902 = vsub.s32 4, %v901
        %v903 = vrot.slane %v839, %v902
        %v904 = vmul.f32 %v899, %v894
        %v905 = vmul.f32 %v903, %v895
        %v906 = vadd.f32 %v892, %v904
        %v907 = vadd.f32 %v893, %v905
        %v908 = vld [vmem:[%s425] sm:$0xff]
        %v909 = vld [vmem:[%s425 + $0x8] sm:$0xff]
        %v910 = vlaneseq
        %v911 = vshrl.u32 %v910, 7
        %v912 = vsub.s32 5, %v911
        %v913 = vrot.slane %v838, %v912
        %v914 = vlaneseq
        %v915 = vshrl.u32 %v914, 7
        %v916 = vsub.s32 5, %v915
        %v917 = vrot.slane %v839, %v916
        %v918 = vmul.f32 %v913, %v908
        %v919 = vmul.f32 %v917, %v909
        %v920 = vadd.f32 %v906, %v918
        %v921 = vadd.f32 %v907, %v919
        %v922 = vld [vmem:[%s440] sm:$0xff]
        %v923 = vld [vmem:[%s440 + $0x8] sm:$0xff]
        %v924 = vlaneseq
        %v925 = vshrl.u32 %v924, 7
        %v926 = vsub.s32 6, %v925
        %v927 = vrot.slane %v838, %v926
        %v928 = vlaneseq
        %v929 = vshrl.u32 %v928, 7
        %v930 = vsub.s32 6, %v929
        %v931 = vrot.slane %v839, %v930
        %v932 = vmul.f32 %v927, %v922
        %v933 = vmul.f32 %v931, %v923
        %v934 = vadd.f32 %v920, %v932
        %v935 = vadd.f32 %v921, %v933
        %v936 = vld [vmem:[%s455] sm:$0xff]
        %v937 = vld [vmem:[%s455 + $0x8] sm:$0xff]
        %v938 = vlaneseq
        %v939 = vshrl.u32 %v938, 7
        %v940 = vsub.s32 7, %v939
        %v941 = vrot.slane %v838, %v940
        %v942 = vlaneseq
        %v943 = vshrl.u32 %v942, 7
        %v944 = vsub.s32 7, %v943
        %v945 = vrot.slane %v839, %v944
        %v946 = vmul.f32 %v941, %v936
        %v947 = vmul.f32 %v945, %v937
        %v948 = vadd.f32 %v934, %v946
        %v949 = vadd.f32 %v935, %v947
        %950 = vst [vmem:[#allocation2 + $0x30] sm:$0xff] %v948
        %951 = vst [vmem:[#allocation2 + $0x38] sm:$0xff] %v949
        %v952 = vld [vmem:[%s260] sm:$0xff]
        %v953 = vld [vmem:[%s260 + $0x8] sm:$0xff]
        %s954 = sld [smem:[#allocation3 + $0xc]]
        %v955 = vstv %s954
        %v956 = vsub.f32 %v952, %v955
        %v957 = vsub.f32 %v953, %v955
        %v958 = vmul.f32 %v956, %v956
        %v959 = vmul.f32 %v957, %v957
        %v960 = vld [vmem:[%s311] sm:$0xff]
        %v961 = vld [vmem:[%s311 + $0x8] sm:$0xff]
        %s962 = sld [smem:[#allocation3 + $0xd]]
        %v963 = vstv %s962
        %v964 = vsub.f32 %v960, %v963
        %v965 = vsub.f32 %v961, %v963
        %v966 = vmul.f32 %v964, %v964
        %v967 = vmul.f32 %v965, %v965
        %v968 = vadd.f32 %v958, %v966
        %v969 = vadd.f32 %v959, %v967
        %v970 = vld [vmem:[%s322] sm:$0xff]
        %v971 = vld [vmem:[%s322 + $0x8] sm:$0xff]
        %s972 = sld [smem:[#allocation3 + $0xe]]
        %v973 = vstv %s972
        %v974 = vsub.f32 %v970, %v973
        %v975 = vsub.f32 %v971, %v973
        %v976 = vmul.f32 %v974, %v974
        %v977 = vmul.f32 %v975, %v975
        %v978 = vadd.f32 %v968, %v976
        %v979 = vadd.f32 %v969, %v977
        %v980 = vrsqrt.pop %v978
        %v981 = vmul.f32 %v978, %v980
        %vm982 = vcmp.eq.f32.partialorder %v978, inf
        %v983 = vsel %vm982, %v978, %v981
        %vm984 = vcmp.eq.f32.partialorder %v978, 0.0
        %v985 = vand.u32 %v978, 2147483648
        %v986 = vsel %vm984, %v985, %v983
        %v987 = vrsqrt.pop %v979
        %v988 = vmul.f32 %v979, %v987
        %vm989 = vcmp.eq.f32.partialorder %v979, inf
        %v990 = vsel %vm989, %v979, %v988
        %vm991 = vcmp.eq.f32.partialorder %v979, 0.0
        %v992 = vand.u32 %v979, 2147483648
        %v993 = vsel %vm991, %v992, %v990
        %v994 = vmul.f32 %v986, 1.6666666
        %v995 = vmul.f32 %v993, 1.6666666
        %v996 = vsub.f32 1.0, %v994
        %v997 = vsub.f32 1.0, %v995
        %v998 = vmax.f32 %v996, 0.0
        %v999 = vmax.f32 %v997, 0.0
        %v1000 = vld [vmem:[%s269] sm:$0xff]
        %v1001 = vld [vmem:[%s269 + $0x8] sm:$0xff]
        %v1002 = vlaneseq
        %v1003 = vshrl.u32 %v1002, 7
        %v1004 = vsub.s32 0, %v1003
        %v1005 = vrot.slane %v998, %v1004
        %v1006 = vlaneseq
        %v1007 = vshrl.u32 %v1006, 7
        %v1008 = vsub.s32 0, %v1007
        %v1009 = vrot.slane %v999, %v1008
        %v1010 = vmul.f32 %v1005, %v1000
        %v1011 = vmul.f32 %v1009, %v1001
        %v1012 = vld [vmem:[%s365] sm:$0xff]
        %v1013 = vld [vmem:[%s365 + $0x8] sm:$0xff]
        %v1014 = vlaneseq
        %v1015 = vshrl.u32 %v1014, 7
        %v1016 = vsub.s32 1, %v1015
        %v1017 = vrot.slane %v998, %v1016
        %v1018 = vlaneseq
        %v1019 = vshrl.u32 %v1018, 7
        %v1020 = vsub.s32 1, %v1019
        %v1021 = vrot.slane %v999, %v1020
        %v1022 = vmul.f32 %v1017, %v1012
        %v1023 = vmul.f32 %v1021, %v1013
        %v1024 = vadd.f32 %v1010, %v1022
        %v1025 = vadd.f32 %v1011, %v1023
        %v1026 = vld [vmem:[%s380] sm:$0xff]
        %v1027 = vld [vmem:[%s380 + $0x8] sm:$0xff]
        %v1028 = vlaneseq
        %v1029 = vshrl.u32 %v1028, 7
        %v1030 = vsub.s32 2, %v1029
        %v1031 = vrot.slane %v998, %v1030
        %v1032 = vlaneseq
        %v1033 = vshrl.u32 %v1032, 7
        %v1034 = vsub.s32 2, %v1033
        %v1035 = vrot.slane %v999, %v1034
        %v1036 = vmul.f32 %v1031, %v1026
        %v1037 = vmul.f32 %v1035, %v1027
        %v1038 = vadd.f32 %v1024, %v1036
        %v1039 = vadd.f32 %v1025, %v1037
        %v1040 = vld [vmem:[%s395] sm:$0xff]
        %v1041 = vld [vmem:[%s395 + $0x8] sm:$0xff]
        %v1042 = vlaneseq
        %v1043 = vshrl.u32 %v1042, 7
        %v1044 = vsub.s32 3, %v1043
        %v1045 = vrot.slane %v998, %v1044
        %v1046 = vlaneseq
        %v1047 = vshrl.u32 %v1046, 7
        %v1048 = vsub.s32 3, %v1047
        %v1049 = vrot.slane %v999, %v1048
        %v1050 = vmul.f32 %v1045, %v1040
        %v1051 = vmul.f32 %v1049, %v1041
        %v1052 = vadd.f32 %v1038, %v1050
        %v1053 = vadd.f32 %v1039, %v1051
        %v1054 = vld [vmem:[%s410] sm:$0xff]
        %v1055 = vld [vmem:[%s410 + $0x8] sm:$0xff]
        %v1056 = vlaneseq
        %v1057 = vshrl.u32 %v1056, 7
        %v1058 = vsub.s32 4, %v1057
        %v1059 = vrot.slane %v998, %v1058
        %v1060 = vlaneseq
        %v1061 = vshrl.u32 %v1060, 7
        %v1062 = vsub.s32 4, %v1061
        %v1063 = vrot.slane %v999, %v1062
        %v1064 = vmul.f32 %v1059, %v1054
        %v1065 = vmul.f32 %v1063, %v1055
        %v1066 = vadd.f32 %v1052, %v1064
        %v1067 = vadd.f32 %v1053, %v1065
        %v1068 = vld [vmem:[%s425] sm:$0xff]
        %v1069 = vld [vmem:[%s425 + $0x8] sm:$0xff]
        %v1070 = vlaneseq
        %v1071 = vshrl.u32 %v1070, 7
        %v1072 = vsub.s32 5, %v1071
        %v1073 = vrot.slane %v998, %v1072
        %v1074 = vlaneseq
        %v1075 = vshrl.u32 %v1074, 7
        %v1076 = vsub.s32 5, %v1075
        %v1077 = vrot.slane %v999, %v1076
        %v1078 = vmul.f32 %v1073, %v1068
        %v1079 = vmul.f32 %v1077, %v1069
        %v1080 = vadd.f32 %v1066, %v1078
        %v1081 = vadd.f32 %v1067, %v1079
        %v1082 = vld [vmem:[%s440] sm:$0xff]
        %v1083 = vld [vmem:[%s440 + $0x8] sm:$0xff]
        %v1084 = vlaneseq
        %v1085 = vshrl.u32 %v1084, 7
        %v1086 = vsub.s32 6, %v1085
        %v1087 = vrot.slane %v998, %v1086
        %v1088 = vlaneseq
        %v1089 = vshrl.u32 %v1088, 7
        %v1090 = vsub.s32 6, %v1089
        %v1091 = vrot.slane %v999, %v1090
        %v1092 = vmul.f32 %v1087, %v1082
        %v1093 = vmul.f32 %v1091, %v1083
        %v1094 = vadd.f32 %v1080, %v1092
        %v1095 = vadd.f32 %v1081, %v1093
        %v1096 = vld [vmem:[%s455] sm:$0xff]
        %v1097 = vld [vmem:[%s455 + $0x8] sm:$0xff]
        %v1098 = vlaneseq
        %v1099 = vshrl.u32 %v1098, 7
        %v1100 = vsub.s32 7, %v1099
        %v1101 = vrot.slane %v998, %v1100
        %v1102 = vlaneseq
        %v1103 = vshrl.u32 %v1102, 7
        %v1104 = vsub.s32 7, %v1103
        %v1105 = vrot.slane %v999, %v1104
        %v1106 = vmul.f32 %v1101, %v1096
        %v1107 = vmul.f32 %v1105, %v1097
        %v1108 = vadd.f32 %v1094, %v1106
        %v1109 = vadd.f32 %v1095, %v1107
        %1110 = vst [vmem:[#allocation2 + $0x40] sm:$0xff] %v1108
        %1111 = vst [vmem:[#allocation2 + $0x48] sm:$0xff] %v1109
        %v1112 = vld [vmem:[%s260] sm:$0xff]
        %v1113 = vld [vmem:[%s260 + $0x8] sm:$0xff]
        %s1114 = sld [smem:[#allocation3 + $0xf]]
        %v1115 = vstv %s1114
        %v1116 = vsub.f32 %v1112, %v1115
        %v1117 = vsub.f32 %v1113, %v1115
        %v1118 = vmul.f32 %v1116, %v1116
        %v1119 = vmul.f32 %v1117, %v1117
        %v1120 = vld [vmem:[%s311] sm:$0xff]
        %v1121 = vld [vmem:[%s311 + $0x8] sm:$0xff]
        %s1122 = sld [smem:[#allocation3 + $0x10]]
        %v1123 = vstv %s1122
        %v1124 = vsub.f32 %v1120, %v1123
        %v1125 = vsub.f32 %v1121, %v1123
        %v1126 = vmul.f32 %v1124, %v1124
        %v1127 = vmul.f32 %v1125, %v1125
        %v1128 = vadd.f32 %v1118, %v1126
        %v1129 = vadd.f32 %v1119, %v1127
        %v1130 = vld [vmem:[%s322] sm:$0xff]
        %v1131 = vld [vmem:[%s322 + $0x8] sm:$0xff]
        %s1132 = sld [smem:[#allocation3 + $0x11]]
        %v1133 = vstv %s1132
        %v1134 = vsub.f32 %v1130, %v1133
        %v1135 = vsub.f32 %v1131, %v1133
        %v1136 = vmul.f32 %v1134, %v1134
        %v1137 = vmul.f32 %v1135, %v1135
        %v1138 = vadd.f32 %v1128, %v1136
        %v1139 = vadd.f32 %v1129, %v1137
        %v1140 = vrsqrt.pop %v1138
        %v1141 = vmul.f32 %v1138, %v1140
        %vm1142 = vcmp.eq.f32.partialorder %v1138, inf
        %v1143 = vsel %vm1142, %v1138, %v1141
        %vm1144 = vcmp.eq.f32.partialorder %v1138, 0.0
        %v1145 = vand.u32 %v1138, 2147483648
        %v1146 = vsel %vm1144, %v1145, %v1143
        %v1147 = vrsqrt.pop %v1139
        %v1148 = vmul.f32 %v1139, %v1147
        %vm1149 = vcmp.eq.f32.partialorder %v1139, inf
        %v1150 = vsel %vm1149, %v1139, %v1148
        %vm1151 = vcmp.eq.f32.partialorder %v1139, 0.0
        %v1152 = vand.u32 %v1139, 2147483648
        %v1153 = vsel %vm1151, %v1152, %v1150
        %v1154 = vmul.f32 %v1146, 1.6666666
        %v1155 = vmul.f32 %v1153, 1.6666666
        %v1156 = vsub.f32 1.0, %v1154
        %v1157 = vsub.f32 1.0, %v1155
        %v1158 = vmax.f32 %v1156, 0.0
        %v1159 = vmax.f32 %v1157, 0.0
        %v1160 = vld [vmem:[%s269] sm:$0xff]
        %v1161 = vld [vmem:[%s269 + $0x8] sm:$0xff]
        %v1162 = vlaneseq
        %v1163 = vshrl.u32 %v1162, 7
        %v1164 = vsub.s32 0, %v1163
        %v1165 = vrot.slane %v1158, %v1164
        %v1166 = vlaneseq
        %v1167 = vshrl.u32 %v1166, 7
        %v1168 = vsub.s32 0, %v1167
        %v1169 = vrot.slane %v1159, %v1168
        %v1170 = vmul.f32 %v1165, %v1160
        %v1171 = vmul.f32 %v1169, %v1161
        %v1172 = vld [vmem:[%s365] sm:$0xff]
        %v1173 = vld [vmem:[%s365 + $0x8] sm:$0xff]
        %v1174 = vlaneseq
        %v1175 = vshrl.u32 %v1174, 7
        %v1176 = vsub.s32 1, %v1175
        %v1177 = vrot.slane %v1158, %v1176
        %v1178 = vlaneseq
        %v1179 = vshrl.u32 %v1178, 7
        %v1180 = vsub.s32 1, %v1179
        %v1181 = vrot.slane %v1159, %v1180
        %v1182 = vmul.f32 %v1177, %v1172
        %v1183 = vmul.f32 %v1181, %v1173
        %v1184 = vadd.f32 %v1170, %v1182
        %v1185 = vadd.f32 %v1171, %v1183
        %v1186 = vld [vmem:[%s380] sm:$0xff]
        %v1187 = vld [vmem:[%s380 + $0x8] sm:$0xff]
        %v1188 = vlaneseq
        %v1189 = vshrl.u32 %v1188, 7
        %v1190 = vsub.s32 2, %v1189
        %v1191 = vrot.slane %v1158, %v1190
        %v1192 = vlaneseq
        %v1193 = vshrl.u32 %v1192, 7
        %v1194 = vsub.s32 2, %v1193
        %v1195 = vrot.slane %v1159, %v1194
        %v1196 = vmul.f32 %v1191, %v1186
        %v1197 = vmul.f32 %v1195, %v1187
        %v1198 = vadd.f32 %v1184, %v1196
        %v1199 = vadd.f32 %v1185, %v1197
        %v1200 = vld [vmem:[%s395] sm:$0xff]
        %v1201 = vld [vmem:[%s395 + $0x8] sm:$0xff]
        %v1202 = vlaneseq
        %v1203 = vshrl.u32 %v1202, 7
        %v1204 = vsub.s32 3, %v1203
        %v1205 = vrot.slane %v1158, %v1204
        %v1206 = vlaneseq
        %v1207 = vshrl.u32 %v1206, 7
        %v1208 = vsub.s32 3, %v1207
        %v1209 = vrot.slane %v1159, %v1208
        %v1210 = vmul.f32 %v1205, %v1200
        %v1211 = vmul.f32 %v1209, %v1201
        %v1212 = vadd.f32 %v1198, %v1210
        %v1213 = vadd.f32 %v1199, %v1211
        %v1214 = vld [vmem:[%s410] sm:$0xff]
        %v1215 = vld [vmem:[%s410 + $0x8] sm:$0xff]
        %v1216 = vlaneseq
        %v1217 = vshrl.u32 %v1216, 7
        %v1218 = vsub.s32 4, %v1217
        %v1219 = vrot.slane %v1158, %v1218
        %v1220 = vlaneseq
        %v1221 = vshrl.u32 %v1220, 7
        %v1222 = vsub.s32 4, %v1221
        %v1223 = vrot.slane %v1159, %v1222
        %v1224 = vmul.f32 %v1219, %v1214
        %v1225 = vmul.f32 %v1223, %v1215
        %v1226 = vadd.f32 %v1212, %v1224
        %v1227 = vadd.f32 %v1213, %v1225
        %v1228 = vld [vmem:[%s425] sm:$0xff]
        %v1229 = vld [vmem:[%s425 + $0x8] sm:$0xff]
        %v1230 = vlaneseq
        %v1231 = vshrl.u32 %v1230, 7
        %v1232 = vsub.s32 5, %v1231
        %v1233 = vrot.slane %v1158, %v1232
        %v1234 = vlaneseq
        %v1235 = vshrl.u32 %v1234, 7
        %v1236 = vsub.s32 5, %v1235
        %v1237 = vrot.slane %v1159, %v1236
        %v1238 = vmul.f32 %v1233, %v1228
        %v1239 = vmul.f32 %v1237, %v1229
        %v1240 = vadd.f32 %v1226, %v1238
        %v1241 = vadd.f32 %v1227, %v1239
        %v1242 = vld [vmem:[%s440] sm:$0xff]
        %v1243 = vld [vmem:[%s440 + $0x8] sm:$0xff]
        %v1244 = vlaneseq
        %v1245 = vshrl.u32 %v1244, 7
        %v1246 = vsub.s32 6, %v1245
        %v1247 = vrot.slane %v1158, %v1246
        %v1248 = vlaneseq
        %v1249 = vshrl.u32 %v1248, 7
        %v1250 = vsub.s32 6, %v1249
        %v1251 = vrot.slane %v1159, %v1250
        %v1252 = vmul.f32 %v1247, %v1242
        %v1253 = vmul.f32 %v1251, %v1243
        %v1254 = vadd.f32 %v1240, %v1252
        %v1255 = vadd.f32 %v1241, %v1253
        %v1256 = vld [vmem:[%s455] sm:$0xff]
        %v1257 = vld [vmem:[%s455 + $0x8] sm:$0xff]
        %v1258 = vlaneseq
        %v1259 = vshrl.u32 %v1258, 7
        %v1260 = vsub.s32 7, %v1259
        %v1261 = vrot.slane %v1158, %v1260
        %v1262 = vlaneseq
        %v1263 = vshrl.u32 %v1262, 7
        %v1264 = vsub.s32 7, %v1263
        %v1265 = vrot.slane %v1159, %v1264
        %v1266 = vmul.f32 %v1261, %v1256
        %v1267 = vmul.f32 %v1265, %v1257
        %v1268 = vadd.f32 %v1254, %v1266
        %v1269 = vadd.f32 %v1255, %v1267
        %1270 = vst [vmem:[#allocation2 + $0x50] sm:$0xff] %v1268
        %1271 = vst [vmem:[#allocation2 + $0x58] sm:$0xff] %v1269
        %v1272 = vld [vmem:[%s260] sm:$0xff]
        %v1273 = vld [vmem:[%s260 + $0x8] sm:$0xff]
        %s1274 = sld [smem:[#allocation3 + $0x12]]
        %v1275 = vstv %s1274
        %v1276 = vsub.f32 %v1272, %v1275
        %v1277 = vsub.f32 %v1273, %v1275
        %v1278 = vmul.f32 %v1276, %v1276
        %v1279 = vmul.f32 %v1277, %v1277
        %v1280 = vld [vmem:[%s311] sm:$0xff]
        %v1281 = vld [vmem:[%s311 + $0x8] sm:$0xff]
        %s1282 = sld [smem:[#allocation3 + $0x13]]
        %v1283 = vstv %s1282
        %v1284 = vsub.f32 %v1280, %v1283
        %v1285 = vsub.f32 %v1281, %v1283
        %v1286 = vmul.f32 %v1284, %v1284
        %v1287 = vmul.f32 %v1285, %v1285
        %v1288 = vadd.f32 %v1278, %v1286
        %v1289 = vadd.f32 %v1279, %v1287
        %v1290 = vld [vmem:[%s322] sm:$0xff]
        %v1291 = vld [vmem:[%s322 + $0x8] sm:$0xff]
        %s1292 = sld [smem:[#allocation3 + $0x14]]
        %v1293 = vstv %s1292
        %v1294 = vsub.f32 %v1290, %v1293
        %v1295 = vsub.f32 %v1291, %v1293
        %v1296 = vmul.f32 %v1294, %v1294
        %v1297 = vmul.f32 %v1295, %v1295
        %v1298 = vadd.f32 %v1288, %v1296
        %v1299 = vadd.f32 %v1289, %v1297
        %v1300 = vrsqrt.pop %v1298
        %v1301 = vmul.f32 %v1298, %v1300
        %vm1302 = vcmp.eq.f32.partialorder %v1298, inf
        %v1303 = vsel %vm1302, %v1298, %v1301
        %vm1304 = vcmp.eq.f32.partialorder %v1298, 0.0
        %v1305 = vand.u32 %v1298, 2147483648
        %v1306 = vsel %vm1304, %v1305, %v1303
        %v1307 = vrsqrt.pop %v1299
        %v1308 = vmul.f32 %v1299, %v1307
        %vm1309 = vcmp.eq.f32.partialorder %v1299, inf
        %v1310 = vsel %vm1309, %v1299, %v1308
        %vm1311 = vcmp.eq.f32.partialorder %v1299, 0.0
        %v1312 = vand.u32 %v1299, 2147483648
        %v1313 = vsel %vm1311, %v1312, %v1310
        %v1314 = vmul.f32 %v1306, 1.6666666
        %v1315 = vmul.f32 %v1313, 1.6666666
        %v1316 = vsub.f32 1.0, %v1314
        %v1317 = vsub.f32 1.0, %v1315
        %v1318 = vmax.f32 %v1316, 0.0
        %v1319 = vmax.f32 %v1317, 0.0
        %v1320 = vld [vmem:[%s269] sm:$0xff]
        %v1321 = vld [vmem:[%s269 + $0x8] sm:$0xff]
        %v1322 = vlaneseq
        %v1323 = vshrl.u32 %v1322, 7
        %v1324 = vsub.s32 0, %v1323
        %v1325 = vrot.slane %v1318, %v1324
        %v1326 = vlaneseq
        %v1327 = vshrl.u32 %v1326, 7
        %v1328 = vsub.s32 0, %v1327
        %v1329 = vrot.slane %v1319, %v1328
        %v1330 = vmul.f32 %v1325, %v1320
        %v1331 = vmul.f32 %v1329, %v1321
        %v1332 = vld [vmem:[%s365] sm:$0xff]
        %v1333 = vld [vmem:[%s365 + $0x8] sm:$0xff]
        %v1334 = vlaneseq
        %v1335 = vshrl.u32 %v1334, 7
        %v1336 = vsub.s32 1, %v1335
        %v1337 = vrot.slane %v1318, %v1336
        %v1338 = vlaneseq
        %v1339 = vshrl.u32 %v1338, 7
        %v1340 = vsub.s32 1, %v1339
        %v1341 = vrot.slane %v1319, %v1340
        %v1342 = vmul.f32 %v1337, %v1332
        %v1343 = vmul.f32 %v1341, %v1333
        %v1344 = vadd.f32 %v1330, %v1342
        %v1345 = vadd.f32 %v1331, %v1343
        %v1346 = vld [vmem:[%s380] sm:$0xff]
        %v1347 = vld [vmem:[%s380 + $0x8] sm:$0xff]
        %v1348 = vlaneseq
        %v1349 = vshrl.u32 %v1348, 7
        %v1350 = vsub.s32 2, %v1349
        %v1351 = vrot.slane %v1318, %v1350
        %v1352 = vlaneseq
        %v1353 = vshrl.u32 %v1352, 7
        %v1354 = vsub.s32 2, %v1353
        %v1355 = vrot.slane %v1319, %v1354
        %v1356 = vmul.f32 %v1351, %v1346
        %v1357 = vmul.f32 %v1355, %v1347
        %v1358 = vadd.f32 %v1344, %v1356
        %v1359 = vadd.f32 %v1345, %v1357
        %v1360 = vld [vmem:[%s395] sm:$0xff]
        %v1361 = vld [vmem:[%s395 + $0x8] sm:$0xff]
        %v1362 = vlaneseq
        %v1363 = vshrl.u32 %v1362, 7
        %v1364 = vsub.s32 3, %v1363
        %v1365 = vrot.slane %v1318, %v1364
        %v1366 = vlaneseq
        %v1367 = vshrl.u32 %v1366, 7
        %v1368 = vsub.s32 3, %v1367
        %v1369 = vrot.slane %v1319, %v1368
        %v1370 = vmul.f32 %v1365, %v1360
        %v1371 = vmul.f32 %v1369, %v1361
        %v1372 = vadd.f32 %v1358, %v1370
        %v1373 = vadd.f32 %v1359, %v1371
        %v1374 = vld [vmem:[%s410] sm:$0xff]
        %v1375 = vld [vmem:[%s410 + $0x8] sm:$0xff]
        %v1376 = vlaneseq
        %v1377 = vshrl.u32 %v1376, 7
        %v1378 = vsub.s32 4, %v1377
        %v1379 = vrot.slane %v1318, %v1378
        %v1380 = vlaneseq
        %v1381 = vshrl.u32 %v1380, 7
        %v1382 = vsub.s32 4, %v1381
        %v1383 = vrot.slane %v1319, %v1382
        %v1384 = vmul.f32 %v1379, %v1374
        %v1385 = vmul.f32 %v1383, %v1375
        %v1386 = vadd.f32 %v1372, %v1384
        %v1387 = vadd.f32 %v1373, %v1385
        %v1388 = vld [vmem:[%s425] sm:$0xff]
        %v1389 = vld [vmem:[%s425 + $0x8] sm:$0xff]
        %v1390 = vlaneseq
        %v1391 = vshrl.u32 %v1390, 7
        %v1392 = vsub.s32 5, %v1391
        %v1393 = vrot.slane %v1318, %v1392
        %v1394 = vlaneseq
        %v1395 = vshrl.u32 %v1394, 7
        %v1396 = vsub.s32 5, %v1395
        %v1397 = vrot.slane %v1319, %v1396
        %v1398 = vmul.f32 %v1393, %v1388
        %v1399 = vmul.f32 %v1397, %v1389
        %v1400 = vadd.f32 %v1386, %v1398
        %v1401 = vadd.f32 %v1387, %v1399
        %v1402 = vld [vmem:[%s440] sm:$0xff]
        %v1403 = vld [vmem:[%s440 + $0x8] sm:$0xff]
        %v1404 = vlaneseq
        %v1405 = vshrl.u32 %v1404, 7
        %v1406 = vsub.s32 6, %v1405
        %v1407 = vrot.slane %v1318, %v1406
        %v1408 = vlaneseq
        %v1409 = vshrl.u32 %v1408, 7
        %v1410 = vsub.s32 6, %v1409
        %v1411 = vrot.slane %v1319, %v1410
        %v1412 = vmul.f32 %v1407, %v1402
        %v1413 = vmul.f32 %v1411, %v1403
        %v1414 = vadd.f32 %v1400, %v1412
        %v1415 = vadd.f32 %v1401, %v1413
        %v1416 = vld [vmem:[%s455] sm:$0xff]
        %v1417 = vld [vmem:[%s455 + $0x8] sm:$0xff]
        %v1418 = vlaneseq
        %v1419 = vshrl.u32 %v1418, 7
        %v1420 = vsub.s32 7, %v1419
        %v1421 = vrot.slane %v1318, %v1420
        %v1422 = vlaneseq
        %v1423 = vshrl.u32 %v1422, 7
        %v1424 = vsub.s32 7, %v1423
        %v1425 = vrot.slane %v1319, %v1424
        %v1426 = vmul.f32 %v1421, %v1416
        %v1427 = vmul.f32 %v1425, %v1417
        %v1428 = vadd.f32 %v1414, %v1426
        %v1429 = vadd.f32 %v1415, %v1427
        %1430 = vst [vmem:[#allocation2 + $0x60] sm:$0xff] %v1428
        %1431 = vst [vmem:[#allocation2 + $0x68] sm:$0xff] %v1429
        %v1432 = vld [vmem:[%s260] sm:$0xff]
        %v1433 = vld [vmem:[%s260 + $0x8] sm:$0xff]
        %s1434 = sld [smem:[#allocation3 + $0x15]]
        %v1435 = vstv %s1434
        %v1436 = vsub.f32 %v1432, %v1435
        %v1437 = vsub.f32 %v1433, %v1435
        %v1438 = vmul.f32 %v1436, %v1436
        %v1439 = vmul.f32 %v1437, %v1437
        %v1440 = vld [vmem:[%s311] sm:$0xff]
        %v1441 = vld [vmem:[%s311 + $0x8] sm:$0xff]
        %s1442 = sld [smem:[#allocation3 + $0x16]]
        %v1443 = vstv %s1442
        %v1444 = vsub.f32 %v1440, %v1443
        %v1445 = vsub.f32 %v1441, %v1443
        %v1446 = vmul.f32 %v1444, %v1444
        %v1447 = vmul.f32 %v1445, %v1445
        %v1448 = vadd.f32 %v1438, %v1446
        %v1449 = vadd.f32 %v1439, %v1447
        %v1450 = vld [vmem:[%s322] sm:$0xff]
        %v1451 = vld [vmem:[%s322 + $0x8] sm:$0xff]
        %s1452 = sld [smem:[#allocation3 + $0x17]]
        %v1453 = vstv %s1452
        %v1454 = vsub.f32 %v1450, %v1453
        %v1455 = vsub.f32 %v1451, %v1453
        %v1456 = vmul.f32 %v1454, %v1454
        %v1457 = vmul.f32 %v1455, %v1455
        %v1458 = vadd.f32 %v1448, %v1456
        %v1459 = vadd.f32 %v1449, %v1457
        %v1460 = vrsqrt.pop %v1458
        %v1461 = vmul.f32 %v1458, %v1460
        %vm1462 = vcmp.eq.f32.partialorder %v1458, inf
        %v1463 = vsel %vm1462, %v1458, %v1461
        %vm1464 = vcmp.eq.f32.partialorder %v1458, 0.0
        %v1465 = vand.u32 %v1458, 2147483648
        %v1466 = vsel %vm1464, %v1465, %v1463
        %v1467 = vrsqrt.pop %v1459
        %v1468 = vmul.f32 %v1459, %v1467
        %vm1469 = vcmp.eq.f32.partialorder %v1459, inf
        %v1470 = vsel %vm1469, %v1459, %v1468
        %vm1471 = vcmp.eq.f32.partialorder %v1459, 0.0
        %v1472 = vand.u32 %v1459, 2147483648
        %v1473 = vsel %vm1471, %v1472, %v1470
        %v1474 = vmul.f32 %v1466, 1.6666666
        %v1475 = vmul.f32 %v1473, 1.6666666
        %v1476 = vsub.f32 1.0, %v1474
        %v1477 = vsub.f32 1.0, %v1475
        %v1478 = vmax.f32 %v1476, 0.0
        %v1479 = vmax.f32 %v1477, 0.0
        %v1480 = vld [vmem:[%s269] sm:$0xff]
        %v1481 = vld [vmem:[%s269 + $0x8] sm:$0xff]
        %v1482 = vlaneseq
        %v1483 = vshrl.u32 %v1482, 7
        %v1484 = vsub.s32 0, %v1483
        %v1485 = vrot.slane %v1478, %v1484
        %v1486 = vlaneseq
        %v1487 = vshrl.u32 %v1486, 7
        %v1488 = vsub.s32 0, %v1487
        %v1489 = vrot.slane %v1479, %v1488
        %v1490 = vmul.f32 %v1485, %v1480
        %v1491 = vmul.f32 %v1489, %v1481
        %v1492 = vld [vmem:[%s365] sm:$0xff]
        %v1493 = vld [vmem:[%s365 + $0x8] sm:$0xff]
        %v1494 = vlaneseq
        %v1495 = vshrl.u32 %v1494, 7
        %v1496 = vsub.s32 1, %v1495
        %v1497 = vrot.slane %v1478, %v1496
        %v1498 = vlaneseq
        %v1499 = vshrl.u32 %v1498, 7
        %v1500 = vsub.s32 1, %v1499
        %v1501 = vrot.slane %v1479, %v1500
        %v1502 = vmul.f32 %v1497, %v1492
        %v1503 = vmul.f32 %v1501, %v1493
        %v1504 = vadd.f32 %v1490, %v1502
        %v1505 = vadd.f32 %v1491, %v1503
        %v1506 = vld [vmem:[%s380] sm:$0xff]
        %v1507 = vld [vmem:[%s380 + $0x8] sm:$0xff]
        %v1508 = vlaneseq
        %v1509 = vshrl.u32 %v1508, 7
        %v1510 = vsub.s32 2, %v1509
        %v1511 = vrot.slane %v1478, %v1510
        %v1512 = vlaneseq
        %v1513 = vshrl.u32 %v1512, 7
        %v1514 = vsub.s32 2, %v1513
        %v1515 = vrot.slane %v1479, %v1514
        %v1516 = vmul.f32 %v1511, %v1506
        %v1517 = vmul.f32 %v1515, %v1507
        %v1518 = vadd.f32 %v1504, %v1516
        %v1519 = vadd.f32 %v1505, %v1517
        %v1520 = vld [vmem:[%s395] sm:$0xff]
        %v1521 = vld [vmem:[%s395 + $0x8] sm:$0xff]
        %v1522 = vlaneseq
        %v1523 = vshrl.u32 %v1522, 7
        %v1524 = vsub.s32 3, %v1523
        %v1525 = vrot.slane %v1478, %v1524
        %v1526 = vlaneseq
        %v1527 = vshrl.u32 %v1526, 7
        %v1528 = vsub.s32 3, %v1527
        %v1529 = vrot.slane %v1479, %v1528
        %v1530 = vmul.f32 %v1525, %v1520
        %v1531 = vmul.f32 %v1529, %v1521
        %v1532 = vadd.f32 %v1518, %v1530
        %v1533 = vadd.f32 %v1519, %v1531
        %v1534 = vld [vmem:[%s410] sm:$0xff]
        %v1535 = vld [vmem:[%s410 + $0x8] sm:$0xff]
        %v1536 = vlaneseq
        %v1537 = vshrl.u32 %v1536, 7
        %v1538 = vsub.s32 4, %v1537
        %v1539 = vrot.slane %v1478, %v1538
        %v1540 = vlaneseq
        %v1541 = vshrl.u32 %v1540, 7
        %v1542 = vsub.s32 4, %v1541
        %v1543 = vrot.slane %v1479, %v1542
        %v1544 = vmul.f32 %v1539, %v1534
        %v1545 = vmul.f32 %v1543, %v1535
        %v1546 = vadd.f32 %v1532, %v1544
        %v1547 = vadd.f32 %v1533, %v1545
        %v1548 = vld [vmem:[%s425] sm:$0xff]
        %v1549 = vld [vmem:[%s425 + $0x8] sm:$0xff]
        %v1550 = vlaneseq
        %v1551 = vshrl.u32 %v1550, 7
        %v1552 = vsub.s32 5, %v1551
        %v1553 = vrot.slane %v1478, %v1552
        %v1554 = vlaneseq
        %v1555 = vshrl.u32 %v1554, 7
        %v1556 = vsub.s32 5, %v1555
        %v1557 = vrot.slane %v1479, %v1556
        %v1558 = vmul.f32 %v1553, %v1548
        %v1559 = vmul.f32 %v1557, %v1549
        %v1560 = vadd.f32 %v1546, %v1558
        %v1561 = vadd.f32 %v1547, %v1559
        %v1562 = vld [vmem:[%s440] sm:$0xff]
        %v1563 = vld [vmem:[%s440 + $0x8] sm:$0xff]
        %v1564 = vlaneseq
        %v1565 = vshrl.u32 %v1564, 7
        %v1566 = vsub.s32 6, %v1565
        %v1567 = vrot.slane %v1478, %v1566
        %v1568 = vlaneseq
        %v1569 = vshrl.u32 %v1568, 7
        %v1570 = vsub.s32 6, %v1569
        %v1571 = vrot.slane %v1479, %v1570
        %v1572 = vmul.f32 %v1567, %v1562
        %v1573 = vmul.f32 %v1571, %v1563
        %v1574 = vadd.f32 %v1560, %v1572
        %v1575 = vadd.f32 %v1561, %v1573
        %v1576 = vld [vmem:[%s455] sm:$0xff]
        %v1577 = vld [vmem:[%s455 + $0x8] sm:$0xff]
        %v1578 = vlaneseq
        %v1579 = vshrl.u32 %v1578, 7
        %v1580 = vsub.s32 7, %v1579
        %v1581 = vrot.slane %v1478, %v1580
        %v1582 = vlaneseq
        %v1583 = vshrl.u32 %v1582, 7
        %v1584 = vsub.s32 7, %v1583
        %v1585 = vrot.slane %v1479, %v1584
        %v1586 = vmul.f32 %v1581, %v1576
        %v1587 = vmul.f32 %v1585, %v1577
        %v1588 = vadd.f32 %v1574, %v1586
        %v1589 = vadd.f32 %v1575, %v1587
        %1590 = vst [vmem:[#allocation2 + $0x70] sm:$0xff] %v1588
        %1591 = vst [vmem:[#allocation2 + $0x78] sm:$0xff] %v1589
        %v1592 = vld [vmem:[%s260] sm:$0xff]
        %v1593 = vld [vmem:[%s260 + $0x8] sm:$0xff]
        %s1594 = sld [smem:[#allocation3 + $0x18]]
        %v1595 = vstv %s1594
        %v1596 = vsub.f32 %v1592, %v1595
        %v1597 = vsub.f32 %v1593, %v1595
        %v1598 = vmul.f32 %v1596, %v1596
        %v1599 = vmul.f32 %v1597, %v1597
        %v1600 = vld [vmem:[%s311] sm:$0xff]
        %v1601 = vld [vmem:[%s311 + $0x8] sm:$0xff]
        %s1602 = sld [smem:[#allocation3 + $0x19]]
        %v1603 = vstv %s1602
        %v1604 = vsub.f32 %v1600, %v1603
        %v1605 = vsub.f32 %v1601, %v1603
        %v1606 = vmul.f32 %v1604, %v1604
        %v1607 = vmul.f32 %v1605, %v1605
        %v1608 = vadd.f32 %v1598, %v1606
        %v1609 = vadd.f32 %v1599, %v1607
        %v1610 = vld [vmem:[%s322] sm:$0xff]
        %v1611 = vld [vmem:[%s322 + $0x8] sm:$0xff]
        %s1612 = sld [smem:[#allocation3 + $0x1a]]
        %v1613 = vstv %s1612
        %v1614 = vsub.f32 %v1610, %v1613
        %v1615 = vsub.f32 %v1611, %v1613
        %v1616 = vmul.f32 %v1614, %v1614
        %v1617 = vmul.f32 %v1615, %v1615
        %v1618 = vadd.f32 %v1608, %v1616
        %v1619 = vadd.f32 %v1609, %v1617
        %v1620 = vrsqrt.pop %v1618
        %v1621 = vmul.f32 %v1618, %v1620
        %vm1622 = vcmp.eq.f32.partialorder %v1618, inf
        %v1623 = vsel %vm1622, %v1618, %v1621
        %vm1624 = vcmp.eq.f32.partialorder %v1618, 0.0
        %v1625 = vand.u32 %v1618, 2147483648
        %v1626 = vsel %vm1624, %v1625, %v1623
        %v1627 = vrsqrt.pop %v1619
        %v1628 = vmul.f32 %v1619, %v1627
        %vm1629 = vcmp.eq.f32.partialorder %v1619, inf
        %v1630 = vsel %vm1629, %v1619, %v1628
        %vm1631 = vcmp.eq.f32.partialorder %v1619, 0.0
        %v1632 = vand.u32 %v1619, 2147483648
        %v1633 = vsel %vm1631, %v1632, %v1630
        %v1634 = vmul.f32 %v1626, 1.6666666
        %v1635 = vmul.f32 %v1633, 1.6666666
        %v1636 = vsub.f32 1.0, %v1634
        %v1637 = vsub.f32 1.0, %v1635
        %v1638 = vmax.f32 %v1636, 0.0
        %v1639 = vmax.f32 %v1637, 0.0
        %v1640 = vld [vmem:[%s269] sm:$0xff]
        %v1641 = vld [vmem:[%s269 + $0x8] sm:$0xff]
        %v1642 = vlaneseq
        %v1643 = vshrl.u32 %v1642, 7
        %v1644 = vsub.s32 0, %v1643
        %v1645 = vrot.slane %v1638, %v1644
        %v1646 = vlaneseq
        %v1647 = vshrl.u32 %v1646, 7
        %v1648 = vsub.s32 0, %v1647
        %v1649 = vrot.slane %v1639, %v1648
        %v1650 = vmul.f32 %v1645, %v1640
        %v1651 = vmul.f32 %v1649, %v1641
        %v1652 = vld [vmem:[%s365] sm:$0xff]
        %v1653 = vld [vmem:[%s365 + $0x8] sm:$0xff]
        %v1654 = vlaneseq
        %v1655 = vshrl.u32 %v1654, 7
        %v1656 = vsub.s32 1, %v1655
        %v1657 = vrot.slane %v1638, %v1656
        %v1658 = vlaneseq
        %v1659 = vshrl.u32 %v1658, 7
        %v1660 = vsub.s32 1, %v1659
        %v1661 = vrot.slane %v1639, %v1660
        %v1662 = vmul.f32 %v1657, %v1652
        %v1663 = vmul.f32 %v1661, %v1653
        %v1664 = vadd.f32 %v1650, %v1662
        %v1665 = vadd.f32 %v1651, %v1663
        %v1666 = vld [vmem:[%s380] sm:$0xff]
        %v1667 = vld [vmem:[%s380 + $0x8] sm:$0xff]
        %v1668 = vlaneseq
        %v1669 = vshrl.u32 %v1668, 7
        %v1670 = vsub.s32 2, %v1669
        %v1671 = vrot.slane %v1638, %v1670
        %v1672 = vlaneseq
        %v1673 = vshrl.u32 %v1672, 7
        %v1674 = vsub.s32 2, %v1673
        %v1675 = vrot.slane %v1639, %v1674
        %v1676 = vmul.f32 %v1671, %v1666
        %v1677 = vmul.f32 %v1675, %v1667
        %v1678 = vadd.f32 %v1664, %v1676
        %v1679 = vadd.f32 %v1665, %v1677
        %v1680 = vld [vmem:[%s395] sm:$0xff]
        %v1681 = vld [vmem:[%s395 + $0x8] sm:$0xff]
        %v1682 = vlaneseq
        %v1683 = vshrl.u32 %v1682, 7
        %v1684 = vsub.s32 3, %v1683
        %v1685 = vrot.slane %v1638, %v1684
        %v1686 = vlaneseq
        %v1687 = vshrl.u32 %v1686, 7
        %v1688 = vsub.s32 3, %v1687
        %v1689 = vrot.slane %v1639, %v1688
        %v1690 = vmul.f32 %v1685, %v1680
        %v1691 = vmul.f32 %v1689, %v1681
        %v1692 = vadd.f32 %v1678, %v1690
        %v1693 = vadd.f32 %v1679, %v1691
        %v1694 = vld [vmem:[%s410] sm:$0xff]
        %v1695 = vld [vmem:[%s410 + $0x8] sm:$0xff]
        %v1696 = vlaneseq
        %v1697 = vshrl.u32 %v1696, 7
        %v1698 = vsub.s32 4, %v1697
        %v1699 = vrot.slane %v1638, %v1698
        %v1700 = vlaneseq
        %v1701 = vshrl.u32 %v1700, 7
        %v1702 = vsub.s32 4, %v1701
        %v1703 = vrot.slane %v1639, %v1702
        %v1704 = vmul.f32 %v1699, %v1694
        %v1705 = vmul.f32 %v1703, %v1695
        %v1706 = vadd.f32 %v1692, %v1704
        %v1707 = vadd.f32 %v1693, %v1705
        %v1708 = vld [vmem:[%s425] sm:$0xff]
        %v1709 = vld [vmem:[%s425 + $0x8] sm:$0xff]
        %v1710 = vlaneseq
        %v1711 = vshrl.u32 %v1710, 7
        %v1712 = vsub.s32 5, %v1711
        %v1713 = vrot.slane %v1638, %v1712
        %v1714 = vlaneseq
        %v1715 = vshrl.u32 %v1714, 7
        %v1716 = vsub.s32 5, %v1715
        %v1717 = vrot.slane %v1639, %v1716
        %v1718 = vmul.f32 %v1713, %v1708
        %v1719 = vmul.f32 %v1717, %v1709
        %v1720 = vadd.f32 %v1706, %v1718
        %v1721 = vadd.f32 %v1707, %v1719
        %v1722 = vld [vmem:[%s440] sm:$0xff]
        %v1723 = vld [vmem:[%s440 + $0x8] sm:$0xff]
        %v1724 = vlaneseq
        %v1725 = vshrl.u32 %v1724, 7
        %v1726 = vsub.s32 6, %v1725
        %v1727 = vrot.slane %v1638, %v1726
        %v1728 = vlaneseq
        %v1729 = vshrl.u32 %v1728, 7
        %v1730 = vsub.s32 6, %v1729
        %v1731 = vrot.slane %v1639, %v1730
        %v1732 = vmul.f32 %v1727, %v1722
        %v1733 = vmul.f32 %v1731, %v1723
        %v1734 = vadd.f32 %v1720, %v1732
        %v1735 = vadd.f32 %v1721, %v1733
        %v1736 = vld [vmem:[%s455] sm:$0xff]
        %v1737 = vld [vmem:[%s455 + $0x8] sm:$0xff]
        %v1738 = vlaneseq
        %v1739 = vshrl.u32 %v1738, 7
        %v1740 = vsub.s32 7, %v1739
        %v1741 = vrot.slane %v1638, %v1740
        %v1742 = vlaneseq
        %v1743 = vshrl.u32 %v1742, 7
        %v1744 = vsub.s32 7, %v1743
        %v1745 = vrot.slane %v1639, %v1744
        %v1746 = vmul.f32 %v1741, %v1736
        %v1747 = vmul.f32 %v1745, %v1737
        %v1748 = vadd.f32 %v1734, %v1746
        %v1749 = vadd.f32 %v1735, %v1747
        %1750 = vst [vmem:[#allocation2 + $0x80] sm:$0xff] %v1748
        %1751 = vst [vmem:[#allocation2 + $0x88] sm:$0xff] %v1749
        %v1752 = vld [vmem:[%s260] sm:$0xff]
        %v1753 = vld [vmem:[%s260 + $0x8] sm:$0xff]
        %s1754 = sld [smem:[#allocation3 + $0x1b]]
        %v1755 = vstv %s1754
        %v1756 = vsub.f32 %v1752, %v1755
        %v1757 = vsub.f32 %v1753, %v1755
        %v1758 = vmul.f32 %v1756, %v1756
        %v1759 = vmul.f32 %v1757, %v1757
        %v1760 = vld [vmem:[%s311] sm:$0xff]
        %v1761 = vld [vmem:[%s311 + $0x8] sm:$0xff]
        %s1762 = sld [smem:[#allocation3 + $0x1c]]
        %v1763 = vstv %s1762
        %v1764 = vsub.f32 %v1760, %v1763
        %v1765 = vsub.f32 %v1761, %v1763
        %v1766 = vmul.f32 %v1764, %v1764
        %v1767 = vmul.f32 %v1765, %v1765
        %v1768 = vadd.f32 %v1758, %v1766
        %v1769 = vadd.f32 %v1759, %v1767
        %v1770 = vld [vmem:[%s322] sm:$0xff]
        %v1771 = vld [vmem:[%s322 + $0x8] sm:$0xff]
        %s1772 = sld [smem:[#allocation3 + $0x1d]]
        %v1773 = vstv %s1772
        %v1774 = vsub.f32 %v1770, %v1773
        %v1775 = vsub.f32 %v1771, %v1773
        %v1776 = vmul.f32 %v1774, %v1774
        %v1777 = vmul.f32 %v1775, %v1775
        %v1778 = vadd.f32 %v1768, %v1776
        %v1779 = vadd.f32 %v1769, %v1777
        %v1780 = vrsqrt.pop %v1778
        %v1781 = vmul.f32 %v1778, %v1780
        %vm1782 = vcmp.eq.f32.partialorder %v1778, inf
        %v1783 = vsel %vm1782, %v1778, %v1781
        %vm1784 = vcmp.eq.f32.partialorder %v1778, 0.0
        %v1785 = vand.u32 %v1778, 2147483648
        %v1786 = vsel %vm1784, %v1785, %v1783
        %v1787 = vrsqrt.pop %v1779
        %v1788 = vmul.f32 %v1779, %v1787
        %vm1789 = vcmp.eq.f32.partialorder %v1779, inf
        %v1790 = vsel %vm1789, %v1779, %v1788
        %vm1791 = vcmp.eq.f32.partialorder %v1779, 0.0
        %v1792 = vand.u32 %v1779, 2147483648
        %v1793 = vsel %vm1791, %v1792, %v1790
        %v1794 = vmul.f32 %v1786, 1.6666666
        %v1795 = vmul.f32 %v1793, 1.6666666
        %v1796 = vsub.f32 1.0, %v1794
        %v1797 = vsub.f32 1.0, %v1795
        %v1798 = vmax.f32 %v1796, 0.0
        %v1799 = vmax.f32 %v1797, 0.0
        %v1800 = vld [vmem:[%s269] sm:$0xff]
        %v1801 = vld [vmem:[%s269 + $0x8] sm:$0xff]
        %v1802 = vlaneseq
        %v1803 = vshrl.u32 %v1802, 7
        %v1804 = vsub.s32 0, %v1803
        %v1805 = vrot.slane %v1798, %v1804
        %v1806 = vlaneseq
        %v1807 = vshrl.u32 %v1806, 7
        %v1808 = vsub.s32 0, %v1807
        %v1809 = vrot.slane %v1799, %v1808
        %v1810 = vmul.f32 %v1805, %v1800
        %v1811 = vmul.f32 %v1809, %v1801
        %v1812 = vld [vmem:[%s365] sm:$0xff]
        %v1813 = vld [vmem:[%s365 + $0x8] sm:$0xff]
        %v1814 = vlaneseq
        %v1815 = vshrl.u32 %v1814, 7
        %v1816 = vsub.s32 1, %v1815
        %v1817 = vrot.slane %v1798, %v1816
        %v1818 = vlaneseq
        %v1819 = vshrl.u32 %v1818, 7
        %v1820 = vsub.s32 1, %v1819
        %v1821 = vrot.slane %v1799, %v1820
        %v1822 = vmul.f32 %v1817, %v1812
        %v1823 = vmul.f32 %v1821, %v1813
        %v1824 = vadd.f32 %v1810, %v1822
        %v1825 = vadd.f32 %v1811, %v1823
        %v1826 = vld [vmem:[%s380] sm:$0xff]
        %v1827 = vld [vmem:[%s380 + $0x8] sm:$0xff]
        %v1828 = vlaneseq
        %v1829 = vshrl.u32 %v1828, 7
        %v1830 = vsub.s32 2, %v1829
        %v1831 = vrot.slane %v1798, %v1830
        %v1832 = vlaneseq
        %v1833 = vshrl.u32 %v1832, 7
        %v1834 = vsub.s32 2, %v1833
        %v1835 = vrot.slane %v1799, %v1834
        %v1836 = vmul.f32 %v1831, %v1826
        %v1837 = vmul.f32 %v1835, %v1827
        %v1838 = vadd.f32 %v1824, %v1836
        %v1839 = vadd.f32 %v1825, %v1837
        %v1840 = vld [vmem:[%s395] sm:$0xff]
        %v1841 = vld [vmem:[%s395 + $0x8] sm:$0xff]
        %v1842 = vlaneseq
        %v1843 = vshrl.u32 %v1842, 7
        %v1844 = vsub.s32 3, %v1843
        %v1845 = vrot.slane %v1798, %v1844
        %v1846 = vlaneseq
        %v1847 = vshrl.u32 %v1846, 7
        %v1848 = vsub.s32 3, %v1847
        %v1849 = vrot.slane %v1799, %v1848
        %v1850 = vmul.f32 %v1845, %v1840
        %v1851 = vmul.f32 %v1849, %v1841
        %v1852 = vadd.f32 %v1838, %v1850
        %v1853 = vadd.f32 %v1839, %v1851
        %v1854 = vld [vmem:[%s410] sm:$0xff]
        %v1855 = vld [vmem:[%s410 + $0x8] sm:$0xff]
        %v1856 = vlaneseq
        %v1857 = vshrl.u32 %v1856, 7
        %v1858 = vsub.s32 4, %v1857
        %v1859 = vrot.slane %v1798, %v1858
        %v1860 = vlaneseq
        %v1861 = vshrl.u32 %v1860, 7
        %v1862 = vsub.s32 4, %v1861
        %v1863 = vrot.slane %v1799, %v1862
        %v1864 = vmul.f32 %v1859, %v1854
        %v1865 = vmul.f32 %v1863, %v1855
        %v1866 = vadd.f32 %v1852, %v1864
        %v1867 = vadd.f32 %v1853, %v1865
        %v1868 = vld [vmem:[%s425] sm:$0xff]
        %v1869 = vld [vmem:[%s425 + $0x8] sm:$0xff]
        %v1870 = vlaneseq
        %v1871 = vshrl.u32 %v1870, 7
        %v1872 = vsub.s32 5, %v1871
        %v1873 = vrot.slane %v1798, %v1872
        %v1874 = vlaneseq
        %v1875 = vshrl.u32 %v1874, 7
        %v1876 = vsub.s32 5, %v1875
        %v1877 = vrot.slane %v1799, %v1876
        %v1878 = vmul.f32 %v1873, %v1868
        %v1879 = vmul.f32 %v1877, %v1869
        %v1880 = vadd.f32 %v1866, %v1878
        %v1881 = vadd.f32 %v1867, %v1879
        %v1882 = vld [vmem:[%s440] sm:$0xff]
        %v1883 = vld [vmem:[%s440 + $0x8] sm:$0xff]
        %v1884 = vlaneseq
        %v1885 = vshrl.u32 %v1884, 7
        %v1886 = vsub.s32 6, %v1885
        %v1887 = vrot.slane %v1798, %v1886
        %v1888 = vlaneseq
        %v1889 = vshrl.u32 %v1888, 7
        %v1890 = vsub.s32 6, %v1889
        %v1891 = vrot.slane %v1799, %v1890
        %v1892 = vmul.f32 %v1887, %v1882
        %v1893 = vmul.f32 %v1891, %v1883
        %v1894 = vadd.f32 %v1880, %v1892
        %v1895 = vadd.f32 %v1881, %v1893
        %v1896 = vld [vmem:[%s455] sm:$0xff]
        %v1897 = vld [vmem:[%s455 + $0x8] sm:$0xff]
        %v1898 = vlaneseq
        %v1899 = vshrl.u32 %v1898, 7
        %v1900 = vsub.s32 7, %v1899
        %v1901 = vrot.slane %v1798, %v1900
        %v1902 = vlaneseq
        %v1903 = vshrl.u32 %v1902, 7
        %v1904 = vsub.s32 7, %v1903
        %v1905 = vrot.slane %v1799, %v1904
        %v1906 = vmul.f32 %v1901, %v1896
        %v1907 = vmul.f32 %v1905, %v1897
        %v1908 = vadd.f32 %v1894, %v1906
        %v1909 = vadd.f32 %v1895, %v1907
        %1910 = vst [vmem:[#allocation2 + $0x90] sm:$0xff] %v1908
        %1911 = vst [vmem:[#allocation2 + $0x98] sm:$0xff] %v1909
        %v1912 = vld [vmem:[%s260] sm:$0xff]
        %v1913 = vld [vmem:[%s260 + $0x8] sm:$0xff]
        %s1914 = sld [smem:[#allocation3 + $0x1e]]
        %v1915 = vstv %s1914
        %v1916 = vsub.f32 %v1912, %v1915
        %v1917 = vsub.f32 %v1913, %v1915
        %v1918 = vmul.f32 %v1916, %v1916
        %v1919 = vmul.f32 %v1917, %v1917
        %v1920 = vld [vmem:[%s311] sm:$0xff]
        %v1921 = vld [vmem:[%s311 + $0x8] sm:$0xff]
        %s1922 = sld [smem:[#allocation3 + $0x1f]]
        %v1923 = vstv %s1922
        %v1924 = vsub.f32 %v1920, %v1923
        %v1925 = vsub.f32 %v1921, %v1923
        %v1926 = vmul.f32 %v1924, %v1924
        %v1927 = vmul.f32 %v1925, %v1925
        %v1928 = vadd.f32 %v1918, %v1926
        %v1929 = vadd.f32 %v1919, %v1927
        %v1930 = vld [vmem:[%s322] sm:$0xff]
        %v1931 = vld [vmem:[%s322 + $0x8] sm:$0xff]
        %s1932 = sld [smem:[#allocation3 + $0x20]]
        %v1933 = vstv %s1932
        %v1934 = vsub.f32 %v1930, %v1933
        %v1935 = vsub.f32 %v1931, %v1933
        %v1936 = vmul.f32 %v1934, %v1934
        %v1937 = vmul.f32 %v1935, %v1935
        %v1938 = vadd.f32 %v1928, %v1936
        %v1939 = vadd.f32 %v1929, %v1937
        %v1940 = vrsqrt.pop %v1938
        %v1941 = vmul.f32 %v1938, %v1940
        %vm1942 = vcmp.eq.f32.partialorder %v1938, inf
        %v1943 = vsel %vm1942, %v1938, %v1941
        %vm1944 = vcmp.eq.f32.partialorder %v1938, 0.0
        %v1945 = vand.u32 %v1938, 2147483648
        %v1946 = vsel %vm1944, %v1945, %v1943
        %v1947 = vrsqrt.pop %v1939
        %v1948 = vmul.f32 %v1939, %v1947
        %vm1949 = vcmp.eq.f32.partialorder %v1939, inf
        %v1950 = vsel %vm1949, %v1939, %v1948
        %vm1951 = vcmp.eq.f32.partialorder %v1939, 0.0
        %v1952 = vand.u32 %v1939, 2147483648
        %v1953 = vsel %vm1951, %v1952, %v1950
        %v1954 = vmul.f32 %v1946, 1.6666666
        %v1955 = vmul.f32 %v1953, 1.6666666
        %v1956 = vsub.f32 1.0, %v1954
        %v1957 = vsub.f32 1.0, %v1955
        %v1958 = vmax.f32 %v1956, 0.0
        %v1959 = vmax.f32 %v1957, 0.0
        %v1960 = vld [vmem:[%s269] sm:$0xff]
        %v1961 = vld [vmem:[%s269 + $0x8] sm:$0xff]
        %v1962 = vlaneseq
        %v1963 = vshrl.u32 %v1962, 7
        %v1964 = vsub.s32 0, %v1963
        %v1965 = vrot.slane %v1958, %v1964
        %v1966 = vlaneseq
        %v1967 = vshrl.u32 %v1966, 7
        %v1968 = vsub.s32 0, %v1967
        %v1969 = vrot.slane %v1959, %v1968
        %v1970 = vmul.f32 %v1965, %v1960
        %v1971 = vmul.f32 %v1969, %v1961
        %v1972 = vld [vmem:[%s365] sm:$0xff]
        %v1973 = vld [vmem:[%s365 + $0x8] sm:$0xff]
        %v1974 = vlaneseq
        %v1975 = vshrl.u32 %v1974, 7
        %v1976 = vsub.s32 1, %v1975
        %v1977 = vrot.slane %v1958, %v1976
        %v1978 = vlaneseq
        %v1979 = vshrl.u32 %v1978, 7
        %v1980 = vsub.s32 1, %v1979
        %v1981 = vrot.slane %v1959, %v1980
        %v1982 = vmul.f32 %v1977, %v1972
        %v1983 = vmul.f32 %v1981, %v1973
        %v1984 = vadd.f32 %v1970, %v1982
        %v1985 = vadd.f32 %v1971, %v1983
        %v1986 = vld [vmem:[%s380] sm:$0xff]
        %v1987 = vld [vmem:[%s380 + $0x8] sm:$0xff]
        %v1988 = vlaneseq
        %v1989 = vshrl.u32 %v1988, 7
        %v1990 = vsub.s32 2, %v1989
        %v1991 = vrot.slane %v1958, %v1990
        %v1992 = vlaneseq
        %v1993 = vshrl.u32 %v1992, 7
        %v1994 = vsub.s32 2, %v1993
        %v1995 = vrot.slane %v1959, %v1994
        %v1996 = vmul.f32 %v1991, %v1986
        %v1997 = vmul.f32 %v1995, %v1987
        %v1998 = vadd.f32 %v1984, %v1996
        %v1999 = vadd.f32 %v1985, %v1997
        %v2000 = vld [vmem:[%s395] sm:$0xff]
        %v2001 = vld [vmem:[%s395 + $0x8] sm:$0xff]
        %v2002 = vlaneseq
        %v2003 = vshrl.u32 %v2002, 7
        %v2004 = vsub.s32 3, %v2003
        %v2005 = vrot.slane %v1958, %v2004
        %v2006 = vlaneseq
        %v2007 = vshrl.u32 %v2006, 7
        %v2008 = vsub.s32 3, %v2007
        %v2009 = vrot.slane %v1959, %v2008
        %v2010 = vmul.f32 %v2005, %v2000
        %v2011 = vmul.f32 %v2009, %v2001
        %v2012 = vadd.f32 %v1998, %v2010
        %v2013 = vadd.f32 %v1999, %v2011
        %v2014 = vld [vmem:[%s410] sm:$0xff]
        %v2015 = vld [vmem:[%s410 + $0x8] sm:$0xff]
        %v2016 = vlaneseq
        %v2017 = vshrl.u32 %v2016, 7
        %v2018 = vsub.s32 4, %v2017
        %v2019 = vrot.slane %v1958, %v2018
        %v2020 = vlaneseq
        %v2021 = vshrl.u32 %v2020, 7
        %v2022 = vsub.s32 4, %v2021
        %v2023 = vrot.slane %v1959, %v2022
        %v2024 = vmul.f32 %v2019, %v2014
        %v2025 = vmul.f32 %v2023, %v2015
        %v2026 = vadd.f32 %v2012, %v2024
        %v2027 = vadd.f32 %v2013, %v2025
        %v2028 = vld [vmem:[%s425] sm:$0xff]
        %v2029 = vld [vmem:[%s425 + $0x8] sm:$0xff]
        %v2030 = vlaneseq
        %v2031 = vshrl.u32 %v2030, 7
        %v2032 = vsub.s32 5, %v2031
        %v2033 = vrot.slane %v1958, %v2032
        %v2034 = vlaneseq
        %v2035 = vshrl.u32 %v2034, 7
        %v2036 = vsub.s32 5, %v2035
        %v2037 = vrot.slane %v1959, %v2036
        %v2038 = vmul.f32 %v2033, %v2028
        %v2039 = vmul.f32 %v2037, %v2029
        %v2040 = vadd.f32 %v2026, %v2038
        %v2041 = vadd.f32 %v2027, %v2039
        %v2042 = vld [vmem:[%s440] sm:$0xff]
        %v2043 = vld [vmem:[%s440 + $0x8] sm:$0xff]
        %v2044 = vlaneseq
        %v2045 = vshrl.u32 %v2044, 7
        %v2046 = vsub.s32 6, %v2045
        %v2047 = vrot.slane %v1958, %v2046
        %v2048 = vlaneseq
        %v2049 = vshrl.u32 %v2048, 7
        %v2050 = vsub.s32 6, %v2049
        %v2051 = vrot.slane %v1959, %v2050
        %v2052 = vmul.f32 %v2047, %v2042
        %v2053 = vmul.f32 %v2051, %v2043
        %v2054 = vadd.f32 %v2040, %v2052
        %v2055 = vadd.f32 %v2041, %v2053
        %v2056 = vld [vmem:[%s455] sm:$0xff]
        %v2057 = vld [vmem:[%s455 + $0x8] sm:$0xff]
        %v2058 = vlaneseq
        %v2059 = vshrl.u32 %v2058, 7
        %v2060 = vsub.s32 7, %v2059
        %v2061 = vrot.slane %v1958, %v2060
        %v2062 = vlaneseq
        %v2063 = vshrl.u32 %v2062, 7
        %v2064 = vsub.s32 7, %v2063
        %v2065 = vrot.slane %v1959, %v2064
        %v2066 = vmul.f32 %v2061, %v2056
        %v2067 = vmul.f32 %v2065, %v2057
        %v2068 = vadd.f32 %v2054, %v2066
        %v2069 = vadd.f32 %v2055, %v2067
        %2070 = vst [vmem:[#allocation2 + $0xa0] sm:$0xff] %v2068
        %2071 = vst [vmem:[#allocation2 + $0xa8] sm:$0xff] %v2069
        %v2072 = vld [vmem:[%s260] sm:$0xff]
        %v2073 = vld [vmem:[%s260 + $0x8] sm:$0xff]
        %s2074 = sld [smem:[#allocation3 + $0x21]]
        %v2075 = vstv %s2074
        %v2076 = vsub.f32 %v2072, %v2075
        %v2077 = vsub.f32 %v2073, %v2075
        %v2078 = vmul.f32 %v2076, %v2076
        %v2079 = vmul.f32 %v2077, %v2077
        %v2080 = vld [vmem:[%s311] sm:$0xff]
        %v2081 = vld [vmem:[%s311 + $0x8] sm:$0xff]
        %s2082 = sld [smem:[#allocation3 + $0x22]]
        %v2083 = vstv %s2082
        %v2084 = vsub.f32 %v2080, %v2083
        %v2085 = vsub.f32 %v2081, %v2083
        %v2086 = vmul.f32 %v2084, %v2084
        %v2087 = vmul.f32 %v2085, %v2085
        %v2088 = vadd.f32 %v2078, %v2086
        %v2089 = vadd.f32 %v2079, %v2087
        %v2090 = vld [vmem:[%s322] sm:$0xff]
        %v2091 = vld [vmem:[%s322 + $0x8] sm:$0xff]
        %s2092 = sld [smem:[#allocation3 + $0x23]]
        %v2093 = vstv %s2092
        %v2094 = vsub.f32 %v2090, %v2093
        %v2095 = vsub.f32 %v2091, %v2093
        %v2096 = vmul.f32 %v2094, %v2094
        %v2097 = vmul.f32 %v2095, %v2095
        %v2098 = vadd.f32 %v2088, %v2096
        %v2099 = vadd.f32 %v2089, %v2097
        %v2100 = vrsqrt.pop %v2098
        %v2101 = vmul.f32 %v2098, %v2100
        %vm2102 = vcmp.eq.f32.partialorder %v2098, inf
        %v2103 = vsel %vm2102, %v2098, %v2101
        %vm2104 = vcmp.eq.f32.partialorder %v2098, 0.0
        %v2105 = vand.u32 %v2098, 2147483648
        %v2106 = vsel %vm2104, %v2105, %v2103
        %v2107 = vrsqrt.pop %v2099
        %v2108 = vmul.f32 %v2099, %v2107
        %vm2109 = vcmp.eq.f32.partialorder %v2099, inf
        %v2110 = vsel %vm2109, %v2099, %v2108
        %vm2111 = vcmp.eq.f32.partialorder %v2099, 0.0
        %v2112 = vand.u32 %v2099, 2147483648
        %v2113 = vsel %vm2111, %v2112, %v2110
        %v2114 = vmul.f32 %v2106, 1.6666666
        %v2115 = vmul.f32 %v2113, 1.6666666
        %v2116 = vsub.f32 1.0, %v2114
        %v2117 = vsub.f32 1.0, %v2115
        %v2118 = vmax.f32 %v2116, 0.0
        %v2119 = vmax.f32 %v2117, 0.0
        %v2120 = vld [vmem:[%s269] sm:$0xff]
        %v2121 = vld [vmem:[%s269 + $0x8] sm:$0xff]
        %v2122 = vlaneseq
        %v2123 = vshrl.u32 %v2122, 7
        %v2124 = vsub.s32 0, %v2123
        %v2125 = vrot.slane %v2118, %v2124
        %v2126 = vlaneseq
        %v2127 = vshrl.u32 %v2126, 7
        %v2128 = vsub.s32 0, %v2127
        %v2129 = vrot.slane %v2119, %v2128
        %v2130 = vmul.f32 %v2125, %v2120
        %v2131 = vmul.f32 %v2129, %v2121
        %v2132 = vld [vmem:[%s365] sm:$0xff]
        %v2133 = vld [vmem:[%s365 + $0x8] sm:$0xff]
        %v2134 = vlaneseq
        %v2135 = vshrl.u32 %v2134, 7
        %v2136 = vsub.s32 1, %v2135
        %v2137 = vrot.slane %v2118, %v2136
        %v2138 = vlaneseq
        %v2139 = vshrl.u32 %v2138, 7
        %v2140 = vsub.s32 1, %v2139
        %v2141 = vrot.slane %v2119, %v2140
        %v2142 = vmul.f32 %v2137, %v2132
        %v2143 = vmul.f32 %v2141, %v2133
        %v2144 = vadd.f32 %v2130, %v2142
        %v2145 = vadd.f32 %v2131, %v2143
        %v2146 = vld [vmem:[%s380] sm:$0xff]
        %v2147 = vld [vmem:[%s380 + $0x8] sm:$0xff]
        %v2148 = vlaneseq
        %v2149 = vshrl.u32 %v2148, 7
        %v2150 = vsub.s32 2, %v2149
        %v2151 = vrot.slane %v2118, %v2150
        %v2152 = vlaneseq
        %v2153 = vshrl.u32 %v2152, 7
        %v2154 = vsub.s32 2, %v2153
        %v2155 = vrot.slane %v2119, %v2154
        %v2156 = vmul.f32 %v2151, %v2146
        %v2157 = vmul.f32 %v2155, %v2147
        %v2158 = vadd.f32 %v2144, %v2156
        %v2159 = vadd.f32 %v2145, %v2157
        %v2160 = vld [vmem:[%s395] sm:$0xff]
        %v2161 = vld [vmem:[%s395 + $0x8] sm:$0xff]
        %v2162 = vlaneseq
        %v2163 = vshrl.u32 %v2162, 7
        %v2164 = vsub.s32 3, %v2163
        %v2165 = vrot.slane %v2118, %v2164
        %v2166 = vlaneseq
        %v2167 = vshrl.u32 %v2166, 7
        %v2168 = vsub.s32 3, %v2167
        %v2169 = vrot.slane %v2119, %v2168
        %v2170 = vmul.f32 %v2165, %v2160
        %v2171 = vmul.f32 %v2169, %v2161
        %v2172 = vadd.f32 %v2158, %v2170
        %v2173 = vadd.f32 %v2159, %v2171
        %v2174 = vld [vmem:[%s410] sm:$0xff]
        %v2175 = vld [vmem:[%s410 + $0x8] sm:$0xff]
        %v2176 = vlaneseq
        %v2177 = vshrl.u32 %v2176, 7
        %v2178 = vsub.s32 4, %v2177
        %v2179 = vrot.slane %v2118, %v2178
        %v2180 = vlaneseq
        %v2181 = vshrl.u32 %v2180, 7
        %v2182 = vsub.s32 4, %v2181
        %v2183 = vrot.slane %v2119, %v2182
        %v2184 = vmul.f32 %v2179, %v2174
        %v2185 = vmul.f32 %v2183, %v2175
        %v2186 = vadd.f32 %v2172, %v2184
        %v2187 = vadd.f32 %v2173, %v2185
        %v2188 = vld [vmem:[%s425] sm:$0xff]
        %v2189 = vld [vmem:[%s425 + $0x8] sm:$0xff]
        %v2190 = vlaneseq
        %v2191 = vshrl.u32 %v2190, 7
        %v2192 = vsub.s32 5, %v2191
        %v2193 = vrot.slane %v2118, %v2192
        %v2194 = vlaneseq
        %v2195 = vshrl.u32 %v2194, 7
        %v2196 = vsub.s32 5, %v2195
        %v2197 = vrot.slane %v2119, %v2196
        %v2198 = vmul.f32 %v2193, %v2188
        %v2199 = vmul.f32 %v2197, %v2189
        %v2200 = vadd.f32 %v2186, %v2198
        %v2201 = vadd.f32 %v2187, %v2199
        %v2202 = vld [vmem:[%s440] sm:$0xff]
        %v2203 = vld [vmem:[%s440 + $0x8] sm:$0xff]
        %v2204 = vlaneseq
        %v2205 = vshrl.u32 %v2204, 7
        %v2206 = vsub.s32 6, %v2205
        %v2207 = vrot.slane %v2118, %v2206
        %v2208 = vlaneseq
        %v2209 = vshrl.u32 %v2208, 7
        %v2210 = vsub.s32 6, %v2209
        %v2211 = vrot.slane %v2119, %v2210
        %v2212 = vmul.f32 %v2207, %v2202
        %v2213 = vmul.f32 %v2211, %v2203
        %v2214 = vadd.f32 %v2200, %v2212
        %v2215 = vadd.f32 %v2201, %v2213
        %v2216 = vld [vmem:[%s455] sm:$0xff]
        %v2217 = vld [vmem:[%s455 + $0x8] sm:$0xff]
        %v2218 = vlaneseq
        %v2219 = vshrl.u32 %v2218, 7
        %v2220 = vsub.s32 7, %v2219
        %v2221 = vrot.slane %v2118, %v2220
        %v2222 = vlaneseq
        %v2223 = vshrl.u32 %v2222, 7
        %v2224 = vsub.s32 7, %v2223
        %v2225 = vrot.slane %v2119, %v2224
        %v2226 = vmul.f32 %v2221, %v2216
        %v2227 = vmul.f32 %v2225, %v2217
        %v2228 = vadd.f32 %v2214, %v2226
        %v2229 = vadd.f32 %v2215, %v2227
        %2230 = vst [vmem:[#allocation2 + $0xb0] sm:$0xff] %v2228
        %2231 = vst [vmem:[#allocation2 + $0xb8] sm:$0xff] %v2229
        %v2232 = vld [vmem:[%s260] sm:$0xff]
        %v2233 = vld [vmem:[%s260 + $0x8] sm:$0xff]
        %s2234 = sld [smem:[#allocation3 + $0x24]]
        %v2235 = vstv %s2234
        %v2236 = vsub.f32 %v2232, %v2235
        %v2237 = vsub.f32 %v2233, %v2235
        %v2238 = vmul.f32 %v2236, %v2236
        %v2239 = vmul.f32 %v2237, %v2237
        %v2240 = vld [vmem:[%s311] sm:$0xff]
        %v2241 = vld [vmem:[%s311 + $0x8] sm:$0xff]
        %s2242 = sld [smem:[#allocation3 + $0x25]]
        %v2243 = vstv %s2242
        %v2244 = vsub.f32 %v2240, %v2243
        %v2245 = vsub.f32 %v2241, %v2243
        %v2246 = vmul.f32 %v2244, %v2244
        %v2247 = vmul.f32 %v2245, %v2245
        %v2248 = vadd.f32 %v2238, %v2246
        %v2249 = vadd.f32 %v2239, %v2247
        %v2250 = vld [vmem:[%s322] sm:$0xff]
        %v2251 = vld [vmem:[%s322 + $0x8] sm:$0xff]
        %s2252 = sld [smem:[#allocation3 + $0x26]]
        %v2253 = vstv %s2252
        %v2254 = vsub.f32 %v2250, %v2253
        %v2255 = vsub.f32 %v2251, %v2253
        %v2256 = vmul.f32 %v2254, %v2254
        %v2257 = vmul.f32 %v2255, %v2255
        %v2258 = vadd.f32 %v2248, %v2256
        %v2259 = vadd.f32 %v2249, %v2257
        %v2260 = vrsqrt.pop %v2258
        %v2261 = vmul.f32 %v2258, %v2260
        %vm2262 = vcmp.eq.f32.partialorder %v2258, inf
        %v2263 = vsel %vm2262, %v2258, %v2261
        %vm2264 = vcmp.eq.f32.partialorder %v2258, 0.0
        %v2265 = vand.u32 %v2258, 2147483648
        %v2266 = vsel %vm2264, %v2265, %v2263
        %v2267 = vrsqrt.pop %v2259
        %v2268 = vmul.f32 %v2259, %v2267
        %vm2269 = vcmp.eq.f32.partialorder %v2259, inf
        %v2270 = vsel %vm2269, %v2259, %v2268
        %vm2271 = vcmp.eq.f32.partialorder %v2259, 0.0
        %v2272 = vand.u32 %v2259, 2147483648
        %v2273 = vsel %vm2271, %v2272, %v2270
        %v2274 = vmul.f32 %v2266, 1.6666666
        %v2275 = vmul.f32 %v2273, 1.6666666
        %v2276 = vsub.f32 1.0, %v2274
        %v2277 = vsub.f32 1.0, %v2275
        %v2278 = vmax.f32 %v2276, 0.0
        %v2279 = vmax.f32 %v2277, 0.0
        %v2280 = vld [vmem:[%s269] sm:$0xff]
        %v2281 = vld [vmem:[%s269 + $0x8] sm:$0xff]
        %v2282 = vlaneseq
        %v2283 = vshrl.u32 %v2282, 7
        %v2284 = vsub.s32 0, %v2283
        %v2285 = vrot.slane %v2278, %v2284
        %v2286 = vlaneseq
        %v2287 = vshrl.u32 %v2286, 7
        %v2288 = vsub.s32 0, %v2287
        %v2289 = vrot.slane %v2279, %v2288
        %v2290 = vmul.f32 %v2285, %v2280
        %v2291 = vmul.f32 %v2289, %v2281
        %v2292 = vld [vmem:[%s365] sm:$0xff]
        %v2293 = vld [vmem:[%s365 + $0x8] sm:$0xff]
        %v2294 = vlaneseq
        %v2295 = vshrl.u32 %v2294, 7
        %v2296 = vsub.s32 1, %v2295
        %v2297 = vrot.slane %v2278, %v2296
        %v2298 = vlaneseq
        %v2299 = vshrl.u32 %v2298, 7
        %v2300 = vsub.s32 1, %v2299
        %v2301 = vrot.slane %v2279, %v2300
        %v2302 = vmul.f32 %v2297, %v2292
        %v2303 = vmul.f32 %v2301, %v2293
        %v2304 = vadd.f32 %v2290, %v2302
        %v2305 = vadd.f32 %v2291, %v2303
        %v2306 = vld [vmem:[%s380] sm:$0xff]
        %v2307 = vld [vmem:[%s380 + $0x8] sm:$0xff]
        %v2308 = vlaneseq
        %v2309 = vshrl.u32 %v2308, 7
        %v2310 = vsub.s32 2, %v2309
        %v2311 = vrot.slane %v2278, %v2310
        %v2312 = vlaneseq
        %v2313 = vshrl.u32 %v2312, 7
        %v2314 = vsub.s32 2, %v2313
        %v2315 = vrot.slane %v2279, %v2314
        %v2316 = vmul.f32 %v2311, %v2306
        %v2317 = vmul.f32 %v2315, %v2307
        %v2318 = vadd.f32 %v2304, %v2316
        %v2319 = vadd.f32 %v2305, %v2317
        %v2320 = vld [vmem:[%s395] sm:$0xff]
        %v2321 = vld [vmem:[%s395 + $0x8] sm:$0xff]
        %v2322 = vlaneseq
        %v2323 = vshrl.u32 %v2322, 7
        %v2324 = vsub.s32 3, %v2323
        %v2325 = vrot.slane %v2278, %v2324
        %v2326 = vlaneseq
        %v2327 = vshrl.u32 %v2326, 7
        %v2328 = vsub.s32 3, %v2327
        %v2329 = vrot.slane %v2279, %v2328
        %v2330 = vmul.f32 %v2325, %v2320
        %v2331 = vmul.f32 %v2329, %v2321
        %v2332 = vadd.f32 %v2318, %v2330
        %v2333 = vadd.f32 %v2319, %v2331
        %v2334 = vld [vmem:[%s410] sm:$0xff]
        %v2335 = vld [vmem:[%s410 + $0x8] sm:$0xff]
        %v2336 = vlaneseq
        %v2337 = vshrl.u32 %v2336, 7
        %v2338 = vsub.s32 4, %v2337
        %v2339 = vrot.slane %v2278, %v2338
        %v2340 = vlaneseq
        %v2341 = vshrl.u32 %v2340, 7
        %v2342 = vsub.s32 4, %v2341
        %v2343 = vrot.slane %v2279, %v2342
        %v2344 = vmul.f32 %v2339, %v2334
        %v2345 = vmul.f32 %v2343, %v2335
        %v2346 = vadd.f32 %v2332, %v2344
        %v2347 = vadd.f32 %v2333, %v2345
        %v2348 = vld [vmem:[%s425] sm:$0xff]
        %v2349 = vld [vmem:[%s425 + $0x8] sm:$0xff]
        %v2350 = vlaneseq
        %v2351 = vshrl.u32 %v2350, 7
        %v2352 = vsub.s32 5, %v2351
        %v2353 = vrot.slane %v2278, %v2352
        %v2354 = vlaneseq
        %v2355 = vshrl.u32 %v2354, 7
        %v2356 = vsub.s32 5, %v2355
        %v2357 = vrot.slane %v2279, %v2356
        %v2358 = vmul.f32 %v2353, %v2348
        %v2359 = vmul.f32 %v2357, %v2349
        %v2360 = vadd.f32 %v2346, %v2358
        %v2361 = vadd.f32 %v2347, %v2359
        %v2362 = vld [vmem:[%s440] sm:$0xff]
        %v2363 = vld [vmem:[%s440 + $0x8] sm:$0xff]
        %v2364 = vlaneseq
        %v2365 = vshrl.u32 %v2364, 7
        %v2366 = vsub.s32 6, %v2365
        %v2367 = vrot.slane %v2278, %v2366
        %v2368 = vlaneseq
        %v2369 = vshrl.u32 %v2368, 7
        %v2370 = vsub.s32 6, %v2369
        %v2371 = vrot.slane %v2279, %v2370
        %v2372 = vmul.f32 %v2367, %v2362
        %v2373 = vmul.f32 %v2371, %v2363
        %v2374 = vadd.f32 %v2360, %v2372
        %v2375 = vadd.f32 %v2361, %v2373
        %v2376 = vld [vmem:[%s455] sm:$0xff]
        %v2377 = vld [vmem:[%s455 + $0x8] sm:$0xff]
        %v2378 = vlaneseq
        %v2379 = vshrl.u32 %v2378, 7
        %v2380 = vsub.s32 7, %v2379
        %v2381 = vrot.slane %v2278, %v2380
        %v2382 = vlaneseq
        %v2383 = vshrl.u32 %v2382, 7
        %v2384 = vsub.s32 7, %v2383
        %v2385 = vrot.slane %v2279, %v2384
        %v2386 = vmul.f32 %v2381, %v2376
        %v2387 = vmul.f32 %v2385, %v2377
        %v2388 = vadd.f32 %v2374, %v2386
        %v2389 = vadd.f32 %v2375, %v2387
        %2390 = vst [vmem:[#allocation2 + $0xc0] sm:$0xff] %v2388
        %2391 = vst [vmem:[#allocation2 + $0xc8] sm:$0xff] %v2389
        %v2392 = vld [vmem:[%s260] sm:$0xff]
        %v2393 = vld [vmem:[%s260 + $0x8] sm:$0xff]
        %s2394 = sld [smem:[#allocation3 + $0x27]]
        %v2395 = vstv %s2394
        %v2396 = vsub.f32 %v2392, %v2395
        %v2397 = vsub.f32 %v2393, %v2395
        %v2398 = vmul.f32 %v2396, %v2396
        %v2399 = vmul.f32 %v2397, %v2397
        %v2400 = vld [vmem:[%s311] sm:$0xff]
        %v2401 = vld [vmem:[%s311 + $0x8] sm:$0xff]
        %s2402 = sld [smem:[#allocation3 + $0x28]]
        %v2403 = vstv %s2402
        %v2404 = vsub.f32 %v2400, %v2403
        %v2405 = vsub.f32 %v2401, %v2403
        %v2406 = vmul.f32 %v2404, %v2404
        %v2407 = vmul.f32 %v2405, %v2405
        %v2408 = vadd.f32 %v2398, %v2406
        %v2409 = vadd.f32 %v2399, %v2407
        %v2410 = vld [vmem:[%s322] sm:$0xff]
        %v2411 = vld [vmem:[%s322 + $0x8] sm:$0xff]
        %s2412 = sld [smem:[#allocation3 + $0x29]]
        %v2413 = vstv %s2412
        %v2414 = vsub.f32 %v2410, %v2413
        %v2415 = vsub.f32 %v2411, %v2413
        %v2416 = vmul.f32 %v2414, %v2414
        %v2417 = vmul.f32 %v2415, %v2415
        %v2418 = vadd.f32 %v2408, %v2416
        %v2419 = vadd.f32 %v2409, %v2417
        %v2420 = vrsqrt.pop %v2418
        %v2421 = vmul.f32 %v2418, %v2420
        %vm2422 = vcmp.eq.f32.partialorder %v2418, inf
        %v2423 = vsel %vm2422, %v2418, %v2421
        %vm2424 = vcmp.eq.f32.partialorder %v2418, 0.0
        %v2425 = vand.u32 %v2418, 2147483648
        %v2426 = vsel %vm2424, %v2425, %v2423
        %v2427 = vrsqrt.pop %v2419
        %v2428 = vmul.f32 %v2419, %v2427
        %vm2429 = vcmp.eq.f32.partialorder %v2419, inf
        %v2430 = vsel %vm2429, %v2419, %v2428
        %vm2431 = vcmp.eq.f32.partialorder %v2419, 0.0
        %v2432 = vand.u32 %v2419, 2147483648
        %v2433 = vsel %vm2431, %v2432, %v2430
        %v2434 = vmul.f32 %v2426, 1.6666666
        %v2435 = vmul.f32 %v2433, 1.6666666
        %v2436 = vsub.f32 1.0, %v2434
        %v2437 = vsub.f32 1.0, %v2435
        %v2438 = vmax.f32 %v2436, 0.0
        %v2439 = vmax.f32 %v2437, 0.0
        %v2440 = vld [vmem:[%s269] sm:$0xff]
        %v2441 = vld [vmem:[%s269 + $0x8] sm:$0xff]
        %v2442 = vlaneseq
        %v2443 = vshrl.u32 %v2442, 7
        %v2444 = vsub.s32 0, %v2443
        %v2445 = vrot.slane %v2438, %v2444
        %v2446 = vlaneseq
        %v2447 = vshrl.u32 %v2446, 7
        %v2448 = vsub.s32 0, %v2447
        %v2449 = vrot.slane %v2439, %v2448
        %v2450 = vmul.f32 %v2445, %v2440
        %v2451 = vmul.f32 %v2449, %v2441
        %v2452 = vld [vmem:[%s365] sm:$0xff]
        %v2453 = vld [vmem:[%s365 + $0x8] sm:$0xff]
        %v2454 = vlaneseq
        %v2455 = vshrl.u32 %v2454, 7
        %v2456 = vsub.s32 1, %v2455
        %v2457 = vrot.slane %v2438, %v2456
        %v2458 = vlaneseq
        %v2459 = vshrl.u32 %v2458, 7
        %v2460 = vsub.s32 1, %v2459
        %v2461 = vrot.slane %v2439, %v2460
        %v2462 = vmul.f32 %v2457, %v2452
        %v2463 = vmul.f32 %v2461, %v2453
        %v2464 = vadd.f32 %v2450, %v2462
        %v2465 = vadd.f32 %v2451, %v2463
        %v2466 = vld [vmem:[%s380] sm:$0xff]
        %v2467 = vld [vmem:[%s380 + $0x8] sm:$0xff]
        %v2468 = vlaneseq
        %v2469 = vshrl.u32 %v2468, 7
        %v2470 = vsub.s32 2, %v2469
        %v2471 = vrot.slane %v2438, %v2470
        %v2472 = vlaneseq
        %v2473 = vshrl.u32 %v2472, 7
        %v2474 = vsub.s32 2, %v2473
        %v2475 = vrot.slane %v2439, %v2474
        %v2476 = vmul.f32 %v2471, %v2466
        %v2477 = vmul.f32 %v2475, %v2467
        %v2478 = vadd.f32 %v2464, %v2476
        %v2479 = vadd.f32 %v2465, %v2477
        %v2480 = vld [vmem:[%s395] sm:$0xff]
        %v2481 = vld [vmem:[%s395 + $0x8] sm:$0xff]
        %v2482 = vlaneseq
        %v2483 = vshrl.u32 %v2482, 7
        %v2484 = vsub.s32 3, %v2483
        %v2485 = vrot.slane %v2438, %v2484
        %v2486 = vlaneseq
        %v2487 = vshrl.u32 %v2486, 7
        %v2488 = vsub.s32 3, %v2487
        %v2489 = vrot.slane %v2439, %v2488
        %v2490 = vmul.f32 %v2485, %v2480
        %v2491 = vmul.f32 %v2489, %v2481
        %v2492 = vadd.f32 %v2478, %v2490
        %v2493 = vadd.f32 %v2479, %v2491
        %v2494 = vld [vmem:[%s410] sm:$0xff]
        %v2495 = vld [vmem:[%s410 + $0x8] sm:$0xff]
        %v2496 = vlaneseq
        %v2497 = vshrl.u32 %v2496, 7
        %v2498 = vsub.s32 4, %v2497
        %v2499 = vrot.slane %v2438, %v2498
        %v2500 = vlaneseq
        %v2501 = vshrl.u32 %v2500, 7
        %v2502 = vsub.s32 4, %v2501
        %v2503 = vrot.slane %v2439, %v2502
        %v2504 = vmul.f32 %v2499, %v2494
        %v2505 = vmul.f32 %v2503, %v2495
        %v2506 = vadd.f32 %v2492, %v2504
        %v2507 = vadd.f32 %v2493, %v2505
        %v2508 = vld [vmem:[%s425] sm:$0xff]
        %v2509 = vld [vmem:[%s425 + $0x8] sm:$0xff]
        %v2510 = vlaneseq
        %v2511 = vshrl.u32 %v2510, 7
        %v2512 = vsub.s32 5, %v2511
        %v2513 = vrot.slane %v2438, %v2512
        %v2514 = vlaneseq
        %v2515 = vshrl.u32 %v2514, 7
        %v2516 = vsub.s32 5, %v2515
        %v2517 = vrot.slane %v2439, %v2516
        %v2518 = vmul.f32 %v2513, %v2508
        %v2519 = vmul.f32 %v2517, %v2509
        %v2520 = vadd.f32 %v2506, %v2518
        %v2521 = vadd.f32 %v2507, %v2519
        %v2522 = vld [vmem:[%s440] sm:$0xff]
        %v2523 = vld [vmem:[%s440 + $0x8] sm:$0xff]
        %v2524 = vlaneseq
        %v2525 = vshrl.u32 %v2524, 7
        %v2526 = vsub.s32 6, %v2525
        %v2527 = vrot.slane %v2438, %v2526
        %v2528 = vlaneseq
        %v2529 = vshrl.u32 %v2528, 7
        %v2530 = vsub.s32 6, %v2529
        %v2531 = vrot.slane %v2439, %v2530
        %v2532 = vmul.f32 %v2527, %v2522
        %v2533 = vmul.f32 %v2531, %v2523
        %v2534 = vadd.f32 %v2520, %v2532
        %v2535 = vadd.f32 %v2521, %v2533
        %v2536 = vld [vmem:[%s455] sm:$0xff]
        %v2537 = vld [vmem:[%s455 + $0x8] sm:$0xff]
        %v2538 = vlaneseq
        %v2539 = vshrl.u32 %v2538, 7
        %v2540 = vsub.s32 7, %v2539
        %v2541 = vrot.slane %v2438, %v2540
        %v2542 = vlaneseq
        %v2543 = vshrl.u32 %v2542, 7
        %v2544 = vsub.s32 7, %v2543
        %v2545 = vrot.slane %v2439, %v2544
        %v2546 = vmul.f32 %v2541, %v2536
        %v2547 = vmul.f32 %v2545, %v2537
        %v2548 = vadd.f32 %v2534, %v2546
        %v2549 = vadd.f32 %v2535, %v2547
        %2550 = vst [vmem:[#allocation2 + $0xd0] sm:$0xff] %v2548
        %2551 = vst [vmem:[#allocation2 + $0xd8] sm:$0xff] %v2549
        %v2552 = vld [vmem:[%s260] sm:$0xff]
        %v2553 = vld [vmem:[%s260 + $0x8] sm:$0xff]
        %s2554 = sld [smem:[#allocation3 + $0x2a]]
        %v2555 = vstv %s2554
        %v2556 = vsub.f32 %v2552, %v2555
        %v2557 = vsub.f32 %v2553, %v2555
        %v2558 = vmul.f32 %v2556, %v2556
        %v2559 = vmul.f32 %v2557, %v2557
        %v2560 = vld [vmem:[%s311] sm:$0xff]
        %v2561 = vld [vmem:[%s311 + $0x8] sm:$0xff]
        %s2562 = sld [smem:[#allocation3 + $0x2b]]
        %v2563 = vstv %s2562
        %v2564 = vsub.f32 %v2560, %v2563
        %v2565 = vsub.f32 %v2561, %v2563
        %v2566 = vmul.f32 %v2564, %v2564
        %v2567 = vmul.f32 %v2565, %v2565
        %v2568 = vadd.f32 %v2558, %v2566
        %v2569 = vadd.f32 %v2559, %v2567
        %v2570 = vld [vmem:[%s322] sm:$0xff]
        %v2571 = vld [vmem:[%s322 + $0x8] sm:$0xff]
        %s2572 = sld [smem:[#allocation3 + $0x2c]]
        %v2573 = vstv %s2572
        %v2574 = vsub.f32 %v2570, %v2573
        %v2575 = vsub.f32 %v2571, %v2573
        %v2576 = vmul.f32 %v2574, %v2574
        %v2577 = vmul.f32 %v2575, %v2575
        %v2578 = vadd.f32 %v2568, %v2576
        %v2579 = vadd.f32 %v2569, %v2577
        %v2580 = vrsqrt.pop %v2578
        %v2581 = vmul.f32 %v2578, %v2580
        %vm2582 = vcmp.eq.f32.partialorder %v2578, inf
        %v2583 = vsel %vm2582, %v2578, %v2581
        %vm2584 = vcmp.eq.f32.partialorder %v2578, 0.0
        %v2585 = vand.u32 %v2578, 2147483648
        %v2586 = vsel %vm2584, %v2585, %v2583
        %v2587 = vrsqrt.pop %v2579
        %v2588 = vmul.f32 %v2579, %v2587
        %vm2589 = vcmp.eq.f32.partialorder %v2579, inf
        %v2590 = vsel %vm2589, %v2579, %v2588
        %vm2591 = vcmp.eq.f32.partialorder %v2579, 0.0
        %v2592 = vand.u32 %v2579, 2147483648
        %v2593 = vsel %vm2591, %v2592, %v2590
        %v2594 = vmul.f32 %v2586, 1.6666666
        %v2595 = vmul.f32 %v2593, 1.6666666
        %v2596 = vsub.f32 1.0, %v2594
        %v2597 = vsub.f32 1.0, %v2595
        %v2598 = vmax.f32 %v2596, 0.0
        %v2599 = vmax.f32 %v2597, 0.0
        %v2600 = vld [vmem:[%s269] sm:$0xff]
        %v2601 = vld [vmem:[%s269 + $0x8] sm:$0xff]
        %v2602 = vlaneseq
        %v2603 = vshrl.u32 %v2602, 7
        %v2604 = vsub.s32 0, %v2603
        %v2605 = vrot.slane %v2598, %v2604
        %v2606 = vlaneseq
        %v2607 = vshrl.u32 %v2606, 7
        %v2608 = vsub.s32 0, %v2607
        %v2609 = vrot.slane %v2599, %v2608
        %v2610 = vmul.f32 %v2605, %v2600
        %v2611 = vmul.f32 %v2609, %v2601
        %v2612 = vld [vmem:[%s365] sm:$0xff]
        %v2613 = vld [vmem:[%s365 + $0x8] sm:$0xff]
        %v2614 = vlaneseq
        %v2615 = vshrl.u32 %v2614, 7
        %v2616 = vsub.s32 1, %v2615
        %v2617 = vrot.slane %v2598, %v2616
        %v2618 = vlaneseq
        %v2619 = vshrl.u32 %v2618, 7
        %v2620 = vsub.s32 1, %v2619
        %v2621 = vrot.slane %v2599, %v2620
        %v2622 = vmul.f32 %v2617, %v2612
        %v2623 = vmul.f32 %v2621, %v2613
        %v2624 = vadd.f32 %v2610, %v2622
        %v2625 = vadd.f32 %v2611, %v2623
        %v2626 = vld [vmem:[%s380] sm:$0xff]
        %v2627 = vld [vmem:[%s380 + $0x8] sm:$0xff]
        %v2628 = vlaneseq
        %v2629 = vshrl.u32 %v2628, 7
        %v2630 = vsub.s32 2, %v2629
        %v2631 = vrot.slane %v2598, %v2630
        %v2632 = vlaneseq
        %v2633 = vshrl.u32 %v2632, 7
        %v2634 = vsub.s32 2, %v2633
        %v2635 = vrot.slane %v2599, %v2634
        %v2636 = vmul.f32 %v2631, %v2626
        %v2637 = vmul.f32 %v2635, %v2627
        %v2638 = vadd.f32 %v2624, %v2636
        %v2639 = vadd.f32 %v2625, %v2637
        %v2640 = vld [vmem:[%s395] sm:$0xff]
        %v2641 = vld [vmem:[%s395 + $0x8] sm:$0xff]
        %v2642 = vlaneseq
        %v2643 = vshrl.u32 %v2642, 7
        %v2644 = vsub.s32 3, %v2643
        %v2645 = vrot.slane %v2598, %v2644
        %v2646 = vlaneseq
        %v2647 = vshrl.u32 %v2646, 7
        %v2648 = vsub.s32 3, %v2647
        %v2649 = vrot.slane %v2599, %v2648
        %v2650 = vmul.f32 %v2645, %v2640
        %v2651 = vmul.f32 %v2649, %v2641
        %v2652 = vadd.f32 %v2638, %v2650
        %v2653 = vadd.f32 %v2639, %v2651
        %v2654 = vld [vmem:[%s410] sm:$0xff]
        %v2655 = vld [vmem:[%s410 + $0x8] sm:$0xff]
        %v2656 = vlaneseq
        %v2657 = vshrl.u32 %v2656, 7
        %v2658 = vsub.s32 4, %v2657
        %v2659 = vrot.slane %v2598, %v2658
        %v2660 = vlaneseq
        %v2661 = vshrl.u32 %v2660, 7
        %v2662 = vsub.s32 4, %v2661
        %v2663 = vrot.slane %v2599, %v2662
        %v2664 = vmul.f32 %v2659, %v2654
        %v2665 = vmul.f32 %v2663, %v2655
        %v2666 = vadd.f32 %v2652, %v2664
        %v2667 = vadd.f32 %v2653, %v2665
        %v2668 = vld [vmem:[%s425] sm:$0xff]
        %v2669 = vld [vmem:[%s425 + $0x8] sm:$0xff]
        %v2670 = vlaneseq
        %v2671 = vshrl.u32 %v2670, 7
        %v2672 = vsub.s32 5, %v2671
        %v2673 = vrot.slane %v2598, %v2672
        %v2674 = vlaneseq
        %v2675 = vshrl.u32 %v2674, 7
        %v2676 = vsub.s32 5, %v2675
        %v2677 = vrot.slane %v2599, %v2676
        %v2678 = vmul.f32 %v2673, %v2668
        %v2679 = vmul.f32 %v2677, %v2669
        %v2680 = vadd.f32 %v2666, %v2678
        %v2681 = vadd.f32 %v2667, %v2679
        %v2682 = vld [vmem:[%s440] sm:$0xff]
        %v2683 = vld [vmem:[%s440 + $0x8] sm:$0xff]
        %v2684 = vlaneseq
        %v2685 = vshrl.u32 %v2684, 7
        %v2686 = vsub.s32 6, %v2685
        %v2687 = vrot.slane %v2598, %v2686
        %v2688 = vlaneseq
        %v2689 = vshrl.u32 %v2688, 7
        %v2690 = vsub.s32 6, %v2689
        %v2691 = vrot.slane %v2599, %v2690
        %v2692 = vmul.f32 %v2687, %v2682
        %v2693 = vmul.f32 %v2691, %v2683
        %v2694 = vadd.f32 %v2680, %v2692
        %v2695 = vadd.f32 %v2681, %v2693
        %v2696 = vld [vmem:[%s455] sm:$0xff]
        %v2697 = vld [vmem:[%s455 + $0x8] sm:$0xff]
        %v2698 = vlaneseq
        %v2699 = vshrl.u32 %v2698, 7
        %v2700 = vsub.s32 7, %v2699
        %v2701 = vrot.slane %v2598, %v2700
        %v2702 = vlaneseq
        %v2703 = vshrl.u32 %v2702, 7
        %v2704 = vsub.s32 7, %v2703
        %v2705 = vrot.slane %v2599, %v2704
        %v2706 = vmul.f32 %v2701, %v2696
        %v2707 = vmul.f32 %v2705, %v2697
        %v2708 = vadd.f32 %v2694, %v2706
        %v2709 = vadd.f32 %v2695, %v2707
        %2710 = vst [vmem:[#allocation2 + $0xe0] sm:$0xff] %v2708
        %2711 = vst [vmem:[#allocation2 + $0xe8] sm:$0xff] %v2709
        %v2712 = vld [vmem:[#allocation7] sm:$0xff]
        %v2713 = vld [vmem:[#allocation2] sm:$0xff]
        %v2714 = vld [vmem:[#allocation2 + $0x8] sm:$0xff]
        %v2715 = vld [vmem:[#allocation2 + $0x10] sm:$0xff]
        %v2716 = vld [vmem:[#allocation2 + $0x18] sm:$0xff]
        %v2717 = vld [vmem:[#allocation2 + $0x20] sm:$0xff]
        %v2718 = vld [vmem:[#allocation2 + $0x28] sm:$0xff]
        %v2719 = vld [vmem:[#allocation2 + $0x30] sm:$0xff]
        %v2720 = vld [vmem:[#allocation2 + $0x38] sm:$0xff]
        %v2721 = vld [vmem:[#allocation2 + $0x40] sm:$0xff]
        %v2722 = vld [vmem:[#allocation2 + $0x48] sm:$0xff]
        %v2723 = vld [vmem:[#allocation2 + $0x50] sm:$0xff]
        %v2724 = vld [vmem:[#allocation2 + $0x58] sm:$0xff]
        %v2725 = vld [vmem:[#allocation2 + $0x60] sm:$0xff]
        %v2726 = vld [vmem:[#allocation2 + $0x68] sm:$0xff]
        %v2727 = vld [vmem:[#allocation2 + $0x70] sm:$0xff]
        %v2728 = vld [vmem:[#allocation2 + $0x78] sm:$0xff]
        %v2729 = vld [vmem:[#allocation2 + $0x80] sm:$0xff]
        %v2730 = vld [vmem:[#allocation2 + $0x88] sm:$0xff]
        %v2731 = vld [vmem:[#allocation2 + $0x90] sm:$0xff]
        %v2732 = vld [vmem:[#allocation2 + $0x98] sm:$0xff]
        %v2733 = vld [vmem:[#allocation2 + $0xa0] sm:$0xff]
        %v2734 = vld [vmem:[#allocation2 + $0xa8] sm:$0xff]
        %v2735 = vld [vmem:[#allocation2 + $0xb0] sm:$0xff]
        %v2736 = vld [vmem:[#allocation2 + $0xb8] sm:$0xff]
        %v2737 = vld [vmem:[#allocation2 + $0xc0] sm:$0xff]
        %v2738 = vld [vmem:[#allocation2 + $0xc8] sm:$0xff]
        %v2739 = vld [vmem:[#allocation2 + $0xd0] sm:$0xff]
        %v2740 = vld [vmem:[#allocation2 + $0xd8] sm:$0xff]
        %v2741 = vld [vmem:[#allocation2 + $0xe0] sm:$0xff]
        %v2742 = vld [vmem:[#allocation2 + $0xe8] sm:$0xff]
        %vm2743 = vcmask 982016
        %v2745 = vsel %vm2743, %v2712, 0
        %2747 = vmatprep.subr.mxu0 %v2714
        %2748 = vmatpush1.msra.mxu0 %v2713
        %2749 = vmatprep.subr.mxu0 %v2716
        %2750 = vmatpush1.msra.mxu0 %v2715
        %2751 = vmatprep.subr.mxu0 %v2718
        %2752 = vmatpush1.msra.mxu0 %v2717
        %2753 = vmatprep.subr.mxu0 %v2720
        %2754 = vmatpush1.msra.mxu0 %v2719
        %2755 = vmatprep.subr.mxu0 %v2722
        %2756 = vmatpush1.msra.mxu0 %v2721
        %2757 = vmatprep.subr.mxu0 %v2724
        %2758 = vmatpush1.msra.mxu0 %v2723
        %2759 = vmatprep.subr.mxu0 %v2726
        %2760 = vmatpush1.msra.mxu0 %v2725
        %2761 = vmatprep.subr.mxu0 %v2728
        %2762 = vmatpush1.msra.mxu0 %v2727
        %2763 = vmatprep.subr.mxu0 %v2730
        %2764 = vmatpush1.msra.mxu0 %v2729
        %2765 = vmatprep.subr.mxu0 %v2732
        %2766 = vmatpush1.msra.mxu0 %v2731
        %2767 = vmatprep.subr.mxu0 %v2734
        %2768 = vmatpush1.msra.mxu0 %v2733
        %2769 = vmatprep.subr.mxu0 %v2736
        %2770 = vmatpush1.msra.mxu0 %v2735
        %2771 = vmatprep.subr.mxu0 %v2738
        %2772 = vmatpush1.msra.mxu0 %v2737
        %2773 = vmatprep.subr.mxu0 %v2740
        %2774 = vmatpush1.msra.mxu0 %v2739
        %2775 = vmatprep.subr.mxu0 %v2742
        %2776 = vmatpush1.msra.mxu0 %v2741
        %2777 = vmatprep.subr.mxu0 0.0
        %2778 = vmatpush1.msra.mxu0 0.0
        %2779 = vmatprep.subr.mxu0 0.0
        %2780 = vmatpush1.msra.mxu0 0.0
        %2781 = vmatprep.subr.mxu0 0.0
        %2782 = vmatpush1.msra.mxu0 0.0
        %2783 = vmatprep.subr.mxu0 0.0
        %2784 = vmatpush1.msra.mxu0 0.0
        %2785 = vmatprep.subr.mxu0 0.0
        %2786 = vmatpush1.msra.mxu0 0.0
        %2787 = vmatprep.subr.mxu0 0.0
        %2788 = vmatpush1.msra.mxu0 0.0
        %2789 = vmatprep.subr.mxu0 0.0
        %2790 = vmatpush1.msra.mxu0 0.0
        %2791 = vmatprep.subr.mxu0 0.0
        %2792 = vmatpush1.msra.mxu0 0.0
        %2793 = vmatprep.subr.mxu0 0.0
        %2794 = vmatpush1.msra.mxu0 0.0
        %2795 = vmatprep.subr.mxu0 0.0
        %2796 = vmatpush1.msra.mxu0 0.0
        %2797 = vmatprep.subr.mxu0 0.0
        %2798 = vmatpush1.msra.mxu0 0.0
        %2799 = vmatprep.subr.mxu0 0.0
        %2800 = vmatpush1.msra.mxu0 0.0
        %2801 = vmatprep.subr.mxu0 0.0
        %2802 = vmatpush1.msra.mxu0 0.0
        %2803 = vmatprep.subr.mxu0 0.0
        %2804 = vmatpush1.msra.mxu0 0.0
        %2805 = vmatprep.subr.mxu0 0.0
        %2806 = vmatpush1.msra.mxu0 0.0
        %2807 = vmatprep.subr.mxu0 0.0
        %2808 = vmatpush1.msra.mxu0 0.0
        %2809 = vmatprep.subr.mxu0 0.0
        %2810 = vmatpush1.msra.mxu0 0.0
        %2811 = vmatprep.mubr.f32.mxu0 0.0
        %2812 = vmatmul.mubr.f32.gmra.mrb[0].mxu0 %v2745
        %v2813 = vpop.f32.mrb[0].mxu0
        %v2814 = vadd.f32 0.0, %v2813
        %v2815 = vpop.f32.mrb[0].mxu0
        %v2816 = vadd.f32 0.0, %v2815
        %2817 = vdwg.mxu0
        %2818 = vst [vmem:[%s299] sm:$0xff] %v2814
        %2819 = vst [vmem:[%s299 + $0x8] sm:$0xff] %v2816
        %s2820 = sand.u32 %s143, 1
        %s2821 = scalar_lea.sflag [#allocation5], %s2820
        %s2822 = sand.u32 %s143, 1
        %s2823 = smul.addr %s2822, 16
        %s2824 = scalar_lea.vmem [#allocation11], %s2823
        // Predicated region
        $region53: #{tpu_custom_call.1} parent=35 // pred_check
          %p2825 = pneg %p153
        $region54: #{tpu_custom_call.1} parent=35 // pred_check_branch
          %2827 = sbr.rel (%p2825) target = $region56
        $region55: #{tpu_custom_call.1} parent=35 // pred_region
          %s2828 = smul.u32 2, %s28
          %s2830 = ssub.s32 256, 256
          %2831 = vsyncadd %s2821, %s2830
          %s2832 = smul.addr %s27, 2
          %s2833 = sadd.s32 %s2828, %s2832
          %s2834 = smul.addr %s2833, 128
          %s2835 = scalar_lea.hbm %s4, %s2834
          %s2837 = sshll.u32 %s2824, 4
          %s2838 = int_to_ptr.vmem [resolvable:$true] %s2837
          %2840 = dma.vmem_to_hbm [thread:$0]  %s2838, 256, %s2835, %s2821
        $region56: #{tpu_custom_call.1} parent=35 // pred_fallthru
          _
      $region36: #{tpu_custom_call.1} parent=5 // pred_fallthru
        _
      %p2841 = scmp.le.s32.totalorder 2, %s18
      // Predicated region
      $region57: #{tpu_custom_call.1} parent=5 // pred_check
        %p2842 = pneg %p2841
      $region58: #{tpu_custom_call.1} parent=5 // pred_check_branch
        %2844 = sbr.rel (%p2842) target = $region60
      $region59: #{tpu_custom_call.1} parent=5 // pred_region
        %s2845 = ssub.s32 %s18, 2
        // Predicated region
        $region61: #{tpu_custom_call.1} parent=59 // pred_check
          %p2846 = pneg %p159
        $region62: #{tpu_custom_call.1} parent=59 // pred_check_branch
          %2848 = sbr.rel (%p2846) target = $region64
        $region63: #{tpu_custom_call.1} parent=59 // pred_region
          %s2849 = sand.u32 %s144, 1
          %s2850 = scalar_lea.sflag [#allocation5], %s2849
          %s2851 = sand.u32 %s144, 1
          %s2852 = smul.addr %s2851, 16
          %s2853 = scalar_lea.vmem [#allocation11], %s2852
          %2854 = dma.done %s2850, 256
        $region64: #{tpu_custom_call.1} parent=59 // pred_fallthru
          _
      $region60: #{tpu_custom_call.1} parent=5 // pred_fallthru
        _
    $region6: #{tpu_custom_call.1} parent=1 // loop_footer
      %s22 = sadd.s32 1, %s18
    $region7: #{tpu_custom_call.1} parent=1 // loop_footer_branch
      %17 = sbr.rel target = $region3
    $region8: #{tpu_custom_call.1} parent=1 // loop_exit
      _
    %2855 = vsyncpa [#allocation4], 1
    %s2856 = scalar_lea.sflag [#allocation4], 1
    %2857 = vsyncpa %s2856, 1
    %2858 = vsyncpa [#allocation9], 1
    %s2859 = scalar_lea.sflag [#allocation9], 1
    %2860 = vsyncpa %s2859, 1
    %2861 = vsyncpa [#allocation5], 1
    %s2862 = scalar_lea.sflag [#allocation5], 1
    %2863 = vsyncpa %s2862, 1
    %2864 = vsyncpa [#allocation6], 1
    %s2865 = scalar_lea.sflag [#allocation6], 1
    %2866 = vsyncpa %s2865, 1

</llo_original>
